<compile_context>
chip_gen: v6e
topology: v6e:2x2x1
jax: 0.10.0
libtpu: 0.0.40
codegen_flags: <defaults>
</compile_context>

<pallas_src>
import functools

import numpy as np
import jax
import jax.numpy as jnp
from jax.experimental import pallas as pl
from jax.experimental.pallas import tpu as pltpu


def _round_up(x, m):
    return (x + m - 1) // m * m


# ---------------------------------------------------------------------------
# Constant spatial operators (numpy, built at trace time).  In the channel-major
# flattened layout (C, H*W) every purely-spatial linear op is a constant matrix
# applied on the lane dimension:  y = x @ op^T.
# ---------------------------------------------------------------------------

def _pool2x2_np(H, W):
    """Exact 2x2 average pool (adaptive_avg_pool2d for evenly divisible sizes)."""
    oh, ow = H // 2, W // 2
    m = np.zeros((oh * ow, H * W), np.float32)
    for i in range(oh):
        for j in range(ow):
            for dh in range(2):
                for dw in range(2):
                    m[i * ow + j, (2 * i + dh) * W + (2 * j + dw)] = 0.25
    return m


def _upsample2_np(H, W):
    """Nearest-neighbor 2x upsample from (H//2, W//2) to (H, W)."""
    ow = W // 2
    m = np.zeros((H * W, (H // 2) * ow), np.float32)
    for h in range(H):
        for w in range(W):
            m[h * W + w, (h // 2) * ow + (w // 2)] = 1.0
    return m


def _pool3s2_up2_np(H, W):
    """AvgPool2d(3, stride=2, pad=1, count_include_pad=True) followed by 2x nearest
    upsample, as one (H*W, H*W) linear operator on the flattened image."""
    m = np.zeros((H * W, H * W), np.float32)
    for h in range(H):
        for w in range(W):
            ah, aw = 2 * (h // 2), 2 * (w // 2)
            for dh in (-1, 0, 1):
                for dw in (-1, 0, 1):
                    hi, wi = ah + dh, aw + dw
                    if 0 <= hi < H and 0 <= wi < W:
                        m[h * W + w, hi * W + wi] = 1.0 / 9.0
    return m


def _edge_masks_np(H, W):
    """Rows: 0: w>=1, 1: w<=W-2, 2: h>=1, 3: h<=H-2, 4: valid (1 inside the real image)."""
    m = np.zeros((5, H * W), np.float32)
    for h in range(H):
        for w in range(W):
            i = h * W + w
            m[0, i] = 1.0 if w >= 1 else 0.0
            m[1, i] = 1.0 if w <= W - 2 else 0.0
            m[2, i] = 1.0 if h >= 1 else 0.0
            m[3, i] = 1.0 if h <= H - 2 else 0.0
            m[4, i] = 1.0
    return m


def _pad2d(a, rows, cols):
    out = np.zeros((rows, cols), np.float32)
    out[: a.shape[0], : a.shape[1]] = a
    return out


def fold_bn(gamma, beta, mean, var, eps=1e-5):
    scale = gamma / jnp.sqrt(var + eps)
    return scale, beta - mean * scale


# ---------------------------------------------------------------------------
# Fused per-block kernel (channel-major layout, one image per grid step)
# ---------------------------------------------------------------------------

def _dw3x3(x, taps_ref, bias_ref, masks, W, relu):
    """Depthwise 3x3, stride 1, pad 1 (BN scale folded into the taps) + bias (+ ReLU).

    x: (C, Mp) channel-major.  Shifts are pltpu.roll lane rotations; the four edge masks
    kill both the wrap-around lanes and any padded-lane leakage.
    taps_ref: (9*C, 1), tap-major (kh*3+kw blocks of C channels each).
    """
    m_left, m_right, m_top, m_bot = masks
    C, Mp = x.shape
    tap = lambda k: taps_ref[k * C:(k + 1) * C, :]            # (C, 1) per-channel tap

    x_l = pltpu.roll(x, 1, axis=1) * m_left                   # value at (h, w-1)
    x_r = pltpu.roll(x, Mp - 1, axis=1) * m_right             # value at (h, w+1)
    row = lambda r: x_l * tap(3 * r) + x * tap(3 * r + 1) + x_r * tap(3 * r + 2)

    acc = row(1)                                              # kh = 1 (same row)
    acc = acc + pltpu.roll(row(0), W, axis=1) * m_top         # kh = 0 (row h-1)
    acc = acc + pltpu.roll(row(2), Mp - W, axis=1) * m_bot    # kh = 2 (row h+1)
    acc = acc + bias_ref[...]
    return jnp.maximum(acc, 0.0) if relu else acc


def _branch_body(s, x, dwf_ref, dwfb_ref, g1w_ref, dwl_ref, dwlb_ref, g2w_ref,
                 gmatT_ref, mask_ref, W):
    """MASBlock single-branch pipeline:
       dw3x3(BN,ReLU) -> [pool3x3/s2 + 1x1 + up2] -> +res -> dw3x3(BN) -> [...] -> +res -> +x.
    pool3x3/s2 + up2 is the constant gmat operator (1x1 conv commutes with it)."""
    f32 = jnp.float32
    masks = (mask_ref[0:1, :], mask_ref[1:2, :], mask_ref[2:3, :], mask_ref[3:4, :])

    t = _dw3x3(s, dwf_ref, dwfb_ref, masks, W, relu=True)
    g = jnp.dot(g1w_ref[...],
                jnp.dot(t, gmatT_ref[...], preferred_element_type=f32),
                preferred_element_type=f32)
    t2 = g + t
    t3 = _dw3x3(t2, dwl_ref, dwlb_ref, masks, W, relu=False)
    g2 = jnp.dot(g2w_ref[...],
                 jnp.dot(t3, gmatT_ref[...], preferred_element_type=f32),
                 preferred_element_type=f32)
    return g2 + t3 + x


def _block_kernel(y0_ref, y1_ref, poolT_ref, upT_ref,
                  w1T_ref, b1_ref, w2T_ref, b2_ref,
                  dwf0_ref, dwf0b_ref, g1w0_ref, dwl0_ref, dwl0b_ref, g2w0_ref,
                  gmat0T_ref, mask0_ref,
                  dwf1_ref, dwf1b_ref, g1w1_ref, dwl1_ref, dwl1b_ref, g2w1_ref,
                  gmat1T_ref, mask1_ref,
                  *rest, C0, W0, W1, fuse):
    f32 = jnp.float32
    if fuse:
        wfT_ref, bf_ref, out0_ref, out1_ref = rest
    else:
        out0_ref, out1_ref = rest

    y0 = y0_ref[0]                                            # (C0, Mp0) high-res
    y1 = y1_ref[0]                                            # (C1, Mp1) low-res

    # ---- CrossResolutionWeighting (1x1 convs + BN folded, concat on sublanes) ----
    pooled0 = jnp.dot(y0, poolT_ref[...], preferred_element_type=f32)       # (C0, Mp1)
    cat = jnp.concatenate([pooled0, y1], axis=0)                            # (C0+C1, Mp1)
    h = jnp.dot(w1T_ref[...], cat, preferred_element_type=f32) + b1_ref[...]
    h = jnp.maximum(h, 0.0)                                                 # conv1 BN ReLU
    g = jax.nn.sigmoid(
        jnp.dot(w2T_ref[...], h, preferred_element_type=f32) + b2_ref[...]) # conv2 BN Sigmoid
    s0 = y0 * jnp.dot(g[:C0, :], upT_ref[...], preferred_element_type=f32)  # gate (up2)
    s1 = y1 * g[C0:, :]                                                     # gate (same res)

    # ---- branch pipelines (branch 1 first: the fuse layer consumes its output) ----
    out1 = _branch_body(s1, y1, dwf1_ref, dwf1b_ref, g1w1_ref, dwl1_ref, dwl1b_ref,
                        g2w1_ref, gmat1T_ref, mask1_ref, W1)
    out1 = out1 * mask1_ref[4:5, :]                           # zero padded lanes
    out1_ref[0] = out1.astype(out1_ref.dtype)

    out0 = _branch_body(s0, y0, dwf0_ref, dwf0b_ref, g1w0_ref, dwl0_ref, dwl0b_ref,
                        g2w0_ref, gmat0T_ref, mask0_ref, W0)
    if fuse:
        # y = ReLU(2*out0 + up2(conv1x1+BN(out1)))   (bias commutes with nearest upsample)
        z = jnp.dot(wfT_ref[...], out1, preferred_element_type=f32)          # (C0, Mp1)
        up = jnp.dot(z, upT_ref[...], preferred_element_type=f32)            # (C0, Mp0)
        out0 = jnp.maximum(2.0 * out0 + up + bf_ref[...], 0.0)
    out0 = out0 * mask0_ref[4:5, :]
    out0_ref[0] = out0.astype(out0_ref.dtype)


def _block_call(y0, y1, blk, consts, fuse_w):
    N, C0, Mp0 = y0.shape
    _, C1, Mp1 = y1.shape
    Ct = C0 + C1
    crw = blk["crw"]
    Rp = crw["w1T"].shape[0]
    br0, br1 = blk["branches"]

    rep = lambda n: (0, 0)
    img = lambda n: (n, 0, 0)
    in_specs = [
        pl.BlockSpec((1, C0, Mp0), img),        # y0
        pl.BlockSpec((1, C1, Mp1), img),        # y1
        pl.BlockSpec((Mp0, Mp1), rep),          # poolT (2x2 adaptive pool)
        pl.BlockSpec((Mp1, Mp0), rep),          # upT   (nearest 2x upsample)
        pl.BlockSpec((Rp, Ct), rep),            # CRW conv1 weight^T (BN folded, R padded)
        pl.BlockSpec((Rp, 1), rep),             # CRW conv1 bias
        pl.BlockSpec((Ct, Rp), rep),            # CRW conv2 weight^T
        pl.BlockSpec((Ct, 1), rep),             # CRW conv2 bias
        pl.BlockSpec((9 * C0, 1), rep),         # branch0 dw-first taps
        pl.BlockSpec((C0, 1), rep),             # branch0 dw-first bias
        pl.BlockSpec((C0, C0), rep),            # branch0 global1 1x1^T
        pl.BlockSpec((9 * C0, 1), rep),         # branch0 dw-last taps
        pl.BlockSpec((C0, 1), rep),             # branch0 dw-last bias
        pl.BlockSpec((C0, C0), rep),            # branch0 global2 1x1^T
        pl.BlockSpec((Mp0, Mp0), rep),          # branch0 pool3x3/s2+up2 operator^T
        pl.BlockSpec((5, Mp0), rep),            # branch0 edge/valid masks
        pl.BlockSpec((9 * C1, 1), rep),         # branch1 ...
        pl.BlockSpec((C1, 1), rep),
        pl.BlockSpec((C1, C1), rep),
        pl.BlockSpec((9 * C1, 1), rep),
        pl.BlockSpec((C1, 1), rep),
        pl.BlockSpec((C1, C1), rep),
        pl.BlockSpec((Mp1, Mp1), rep),
        pl.BlockSpec((5, Mp1), rep),
    ]
    args = [y0, y1, consts["poolT"], consts["upT"],
            crw["w1T"], crw["b1"], crw["w2T"], crw["b2"],
            br0["dwf"], br0["dwf_b"], br0["g1w"], br0["dwl"], br0["dwl_b"], br0["g2w"],
            consts["gmat0T"], consts["mask0"],
            br1["dwf"], br1["dwf_b"], br1["g1w"], br1["dwl"], br1["dwl_b"], br1["g2w"],
            consts["gmat1T"], consts["mask1"]]
    fuse = fuse_w is not None
    if fuse:
        in_specs += [pl.BlockSpec((C0, C1), rep),             # fuse 1x1 weight^T (BN folded)
                     pl.BlockSpec((C0, 1), rep)]              # fuse bias
        args += [fuse_w["wfT"], fuse_w["bf"]]

    kernel = functools.partial(_block_kernel, C0=C0, W0=consts["W0"], W1=consts["W1"],
                               fuse=fuse)
    return pl.pallas_call(
        kernel,
        out_shape=(jax.ShapeDtypeStruct((N, C0, Mp0), jnp.float32),
                   jax.ShapeDtypeStruct((N, C1, Mp1), jnp.float32)),
        grid_spec=pltpu.PrefetchScalarGridSpec(
            num_scalar_prefetch=0,
            grid=(N,),
            in_specs=in_specs,
            out_specs=(pl.BlockSpec((1, C0, Mp0), img),
                       pl.BlockSpec((1, C1, Mp1), img)),
        ),
        compiler_params=pltpu.CompilerParams(dimension_semantics=("parallel",)),
    )(*args)


# ---------------------------------------------------------------------------
# Parameter preparation (BN folding + layout), run ONCE outside jit
# ---------------------------------------------------------------------------

def prepare_params(params):
    def branch_w(bp):
        sdf, bdf = fold_bn(*bp["dwf_bn"])
        sdl, bdl = fold_bn(*bp["dwl_bn"])
        return dict(
            dwf=(bp["dwf_w"] * sdf[None, :]).reshape(-1, 1),   # (9*C, 1), BN scale folded
            dwf_b=bdf.reshape(-1, 1),                          # (C, 1)
            g1w=bp["g1_w"].T,                                  # (C, C)
            dwl=(bp["dwl_w"] * sdl[None, :]).reshape(-1, 1),
            dwl_b=bdl.reshape(-1, 1),
            g2w=bp["g2_w"].T,
        )

    blocks = []
    for blk in params["blocks"]:
        p = blk["crw"]
        s1c, b1c = fold_bn(*p["conv1_bn"])
        s2c, b2c = fold_bn(*p["conv2_bn"])
        w1T = (p["conv1_w"] * s1c[None, :]).T                  # (R, Ct)
        b1 = b1c.reshape(-1, 1)
        w2T = (p["conv2_w"] * s2c[None, :]).T                  # (Ct, R)
        b2 = b2c.reshape(-1, 1)
        R = w1T.shape[0]
        Rp = _round_up(R, 8)                                   # pad reduced dim -> MXU friendly
        crw = dict(
            w1T=jnp.pad(w1T, ((0, Rp - R), (0, 0))),
            b1=jnp.pad(b1, ((0, Rp - R), (0, 0))),
            w2T=jnp.pad(w2T, ((0, 0), (0, Rp - R))),
            b2=b2,
        )
        blocks.append(dict(crw=crw, branches=[branch_w(bp) for bp in blk["branches"]]))

    sf, bf = fold_bn(*params["fuse"][0]["bn"])
    fuse = dict(wfT=(params["fuse"][0]["w"] * sf[None, :]).T,  # (C0, C1)
                bf=bf.reshape(-1, 1))                          # (C0, 1)
    return dict(blocks=blocks, fuse=fuse)


# ---------------------------------------------------------------------------
# Module forward (functional, 2 branches, with_fuse=True, multiscale_output=False)
# ---------------------------------------------------------------------------

def hf_hr_module(x0, x1, prepared):
    """HF_HRModule forward.  x0: (N,C0,H,W) high-res, x1: (N,C1,H/2,W/2) low-res (NCHW).
    Returns the fused output (N,C0,H,W) (== PyTorch out[0] for multiscale_output=False)."""
    N, C0, H0, W0 = x0.shape
    _, C1, H1, W1 = x1.shape
    assert H1 * 2 == H0 and W1 * 2 == W0
    M0, M1 = H0 * W0, H1 * W1
    Mp0, Mp1 = _round_up(M0, 128), _round_up(M1, 128)
    # Dense spatial operator must stay VMEM-friendly (v7x has 64 MiB total VMEM).
    assert Mp0 * Mp0 * 4 <= (8 << 20), "use a separable pool/up operator at this resolution"

    consts = dict(
        W0=W0, W1=W1,
        poolT=jnp.asarray(_pad2d(_pool2x2_np(H0, W0).T, Mp0, Mp1)),
        upT=jnp.asarray(_pad2d(_upsample2_np(H0, W0).T, Mp1, Mp0)),
        gmat0T=jnp.asarray(_pad2d(_pool3s2_up2_np(H0, W0).T, Mp0, Mp0)),
        gmat1T=jnp.asarray(_pad2d(_pool3s2_up2_np(H1, W1).T, Mp1, Mp1)),
        mask0=jnp.asarray(_pad2d(_edge_masks_np(H0, W0), 5, Mp0)),
        mask1=jnp.asarray(_pad2d(_edge_masks_np(H1, W1), 5, Mp1)),
    )

    # channel-major flatten + lane padding (done once at the module boundary)
    y0 = jnp.pad(x0.reshape(N, C0, M0), ((0, 0), (0, 0), (0, Mp0 - M0)))
    y1 = jnp.pad(x1.reshape(N, C1, M1), ((0, 0), (0, 0), (0, Mp1 - M1)))

    nb = len(prepared["blocks"])
    for bi, blk in enumerate(prepared["blocks"]):
        fuse_w = prepared["fuse"] if bi == nb - 1 else None
        y0, y1 = _block_call(y0, y1, blk, consts, fuse_w)
    return y0[:, :, :M0].reshape(N, C0, H0, W0)


# ---------------------------------------------------------------------------
# Pure-JAX reference (NCHW) for the in-script correctness check
# ---------------------------------------------------------------------------

def _bnv(v):
    return v[None, :, None, None]


def _ref_dw3x3(x, taps):                                        # x (N,C,H,W), taps (9,C)
    C = x.shape[1]
    w = taps.reshape(3, 3, 1, C)                                # HWIO, I = 1 (grouped)
    return jax.lax.conv_general_dilated(
        x, w, (1, 1), ((1, 1), (1, 1)),
        dimension_numbers=("NCHW", "HWIO", "NCHW"), feature_group_count=C,
        precision=jax.lax.Precision.HIGHEST)


def _ref_pw(x, w):                                              # w (Cin, Cout)
    return jnp.einsum("nchw,cd->ndhw", x, w, precision=jax.lax.Precision.HIGHEST)


def _ref_avgpool3s2(x):
    s = jax.lax.reduce_window(x, 0.0, jax.lax.add, (1, 1, 3, 3), (1, 1, 2, 2),
                              ((0, 0), (0, 0), (1, 1), (1, 1)))
    return s / 9.0


def _ref_up2(x):
    return jnp.repeat(jnp.repeat(x, 2, axis=2), 2, axis=3)


def _ref_adaptive_pool2(x):
    N, C, H, W = x.shape
    return x.reshape(N, C, H // 2, 2, W // 2, 2).mean(axis=(3, 5))


def reference_forward(x0, x1, params):
    C0 = x0.shape[1]

    def crw(a0, a1, p):
        cat = jnp.concatenate([_ref_adaptive_pool2(a0), a1], axis=1)
        s1c, b1c = fold_bn(*p["conv1_bn"])
        h = jnp.maximum(_ref_pw(cat, p["conv1_w"]) * _bnv(s1c) + _bnv(b1c), 0.0)
        s2c, b2c = fold_bn(*p["conv2_bn"])
        z = jax.nn.sigmoid(_ref_pw(h, p["conv2_w"]) * _bnv(s2c) + _bnv(b2c))
        return a0 * _ref_up2(z[:, :C0]), a1 * z[:, C0:]

    def branch(s, x, bp):
        sdf, bdf = fold_bn(*bp["dwf_bn"])
        t = jnp.maximum(_ref_dw3x3(s, bp["dwf_w"]) * _bnv(sdf) + _bnv(bdf), 0.0)
        t2 = _ref_up2(_ref_pw(_ref_avgpool3s2(t), bp["g1_w"])) + t
        sdl, bdl = fold_bn(*bp["dwl_bn"])
        t3 = _ref_dw3x3(t2, bp["dwl_w"]) * _bnv(sdl) + _bnv(bdl)
        return _ref_up2(_ref_pw(_ref_avgpool3s2(t3), bp["g2_w"])) + t3 + x

    a0, a1 = x0, x1
    for blk in params["blocks"]:
        s0, s1 = crw(a0, a1, blk["crw"])
        a0 = branch(s0, a0, blk["branches"][0])
        a1 = branch(s1, a1, blk["branches"][1])
    sf, bf = fold_bn(*params["fuse"][0]["bn"])
    y = 2.0 * a0 + _ref_up2(_ref_pw(a1, params["fuse"][0]["w"]) * _bnv(sf) + _bnv(bf))
    return jnp.maximum(y, 0.0)


# ---------------------------------------------------------------------------
# Deterministic parameters (matching the PyTorch module's shapes)
# ---------------------------------------------------------------------------

def init_params(key, in_channels, reduce_ratio, num_blocks):
    total = sum(in_channels)
    red = int(total / reduce_ratio)
    keys = iter(jax.random.split(key, 4096))

    def conv_w(cin, cout):
        return 0.1 * jax.random.normal(next(keys), (cin, cout), jnp.float32)

    def dw_w(c):  # depthwise 3x3 kernel: (9, C), taps row-major (kh, kw), channel last
        return 0.1 * jax.random.normal(next(keys), (9, c), jnp.float32)

    def bn(c):
        gamma = 1.0 + 0.1 * jax.random.normal(next(keys), (c,), jnp.float32)
        beta = 0.1 * jax.random.normal(next(keys), (c,), jnp.float32)
        mean = 0.1 * jax.random.normal(next(keys), (c,), jnp.float32)
        var = 1.0 + 0.1 * jnp.abs(jax.random.normal(next(keys), (c,), jnp.float32))
        return (gamma, beta, mean, var)

    blocks = []
    for _ in range(num_blocks):
        crw = dict(conv1_w=conv_w(total, red), conv1_bn=bn(red),
                   conv2_w=conv_w(red, total), conv2_bn=bn(total))
        branches = []
        for c in in_channels:
            branches.append(dict(dwf_w=dw_w(c), dwf_bn=bn(c), g1_w=conv_w(c, c),
                                 dwl_w=dw_w(c), dwl_bn=bn(c), g2_w=conv_w(c, c)))
        blocks.append(dict(crw=crw, branches=branches))
    fuse = [dict(w=conv_w(in_channels[1], in_channels[0]), bn=bn(in_channels[0]))]
    return dict(blocks=blocks, fuse=fuse)


# ---------------------------------------------------------------------------
# Main
# ---------------------------------------------------------------------------

if __name__ == "__main__":
    # HF_HRModule(num_branches=2, num_blocks=1, in_channels=[16, 32], reduce_ratio=8,
    #             multiscale_output=False, with_fuse=True)
    in_channels = [16, 32]
    num_blocks = 1
    reduce_ratio = 8
    N, H0, W0 = 2, 16, 16

    key = jax.random.PRNGKey(0)
    kx0, kx1, kp = jax.random.split(key, 3)
    # Branch 0: high-res (16x16, 16ch); branch 1: half-res (8x8, 32ch)  [NCHW]
    x0 = jax.random.normal(kx0, (N, in_channels[0], H0, W0), jnp.float32)
    x1 = jax.random.normal(kx1, (N, in_channels[1], H0 // 2, W0 // 2), jnp.float32)
    params = init_params(kp, in_channels, reduce_ratio, num_blocks)

    prepared = prepare_params(params)          # BN folding / transposes done once, outside jit
    forward = jax.jit(hf_hr_module)
    out = jax.block_until_ready(forward(x0, x1, prepared))

    assert out.shape == (N, in_channels[0], H0, W0)
    assert bool(jnp.all(jnp.isfinite(out)))

    ref = reference_forward(x0, x1, params)
    assert bool(jnp.allclose(out, ref, atol=5e-2, rtol=5e-2))

    print("KERNEL_OK")
</pallas_src>

<mosaic_0001>
module attributes {stable_mosaic.version = 11 : i64} {
  func.func @_block_kernel(%arg0: i32, %arg1: memref<1x16x256xf32, #tpu.memory_space<vmem>>, %arg2: memref<1x32x128xf32, #tpu.memory_space<vmem>>, %arg3: memref<256x128xf32, #tpu.memory_space<vmem>>, %arg4: memref<128x256xf32, #tpu.memory_space<vmem>>, %arg5: memref<8x48xf32, #tpu.memory_space<vmem>>, %arg6: memref<8x1xf32, #tpu.memory_space<vmem>>, %arg7: memref<48x8xf32, #tpu.memory_space<vmem>>, %arg8: memref<48x1xf32, #tpu.memory_space<vmem>>, %arg9: memref<144x1xf32, #tpu.memory_space<vmem>>, %arg10: memref<16x1xf32, #tpu.memory_space<vmem>>, %arg11: memref<16x16xf32, #tpu.memory_space<vmem>>, %arg12: memref<144x1xf32, #tpu.memory_space<vmem>>, %arg13: memref<16x1xf32, #tpu.memory_space<vmem>>, %arg14: memref<16x16xf32, #tpu.memory_space<vmem>>, %arg15: memref<256x256xf32, #tpu.memory_space<vmem>>, %arg16: memref<5x256xf32, #tpu.memory_space<vmem>>, %arg17: memref<288x1xf32, #tpu.memory_space<vmem>>, %arg18: memref<32x1xf32, #tpu.memory_space<vmem>>, %arg19: memref<32x32xf32, #tpu.memory_space<vmem>>, %arg20: memref<288x1xf32, #tpu.memory_space<vmem>>, %arg21: memref<32x1xf32, #tpu.memory_space<vmem>>, %arg22: memref<32x32xf32, #tpu.memory_space<vmem>>, %arg23: memref<128x128xf32, #tpu.memory_space<vmem>>, %arg24: memref<5x128xf32, #tpu.memory_space<vmem>>, %arg25: memref<16x32xf32, #tpu.memory_space<vmem>>, %arg26: memref<16x1xf32, #tpu.memory_space<vmem>>, %arg27: memref<1x16x256xf32, #tpu.memory_space<vmem>>, %arg28: memref<1x32x128xf32, #tpu.memory_space<vmem>>) attributes {dimension_semantics = [#tpu.dimension_semantics<parallel>], iteration_bounds = array<i64: 2>, scalar_prefetch = 0 : i64, scratch_operands = 0 : i64, tpu.core_type = #tpu.core_type<tc>, window_params = [{transform_indices = @transform_0, window_bounds = array<i64: 1, 16, 256>}, {transform_indices = @transform_1, window_bounds = array<i64: 1, 32, 128>}, {pipeline_mode = #tpu.pipeline_mode<synchronous>, transform_indices = @transform_2, window_bounds = array<i64: 256, 128>}, {pipeline_mode = #tpu.pipeline_mode<synchronous>, transform_indices = @transform_3, window_bounds = array<i64: 128, 256>}, {pipeline_mode = #tpu.pipeline_mode<synchronous>, transform_indices = @transform_4, window_bounds = array<i64: 8, 48>}, {pipeline_mode = #tpu.pipeline_mode<synchronous>, transform_indices = @transform_5, window_bounds = array<i64: 8, 1>}, {pipeline_mode = #tpu.pipeline_mode<synchronous>, transform_indices = @transform_6, window_bounds = array<i64: 48, 8>}, {pipeline_mode = #tpu.pipeline_mode<synchronous>, transform_indices = @transform_7, window_bounds = array<i64: 48, 1>}, {pipeline_mode = #tpu.pipeline_mode<synchronous>, transform_indices = @transform_8, window_bounds = array<i64: 144, 1>}, {pipeline_mode = #tpu.pipeline_mode<synchronous>, transform_indices = @transform_9, window_bounds = array<i64: 16, 1>}, {pipeline_mode = #tpu.pipeline_mode<synchronous>, transform_indices = @transform_10, window_bounds = array<i64: 16, 16>}, {pipeline_mode = #tpu.pipeline_mode<synchronous>, transform_indices = @transform_11, window_bounds = array<i64: 144, 1>}, {pipeline_mode = #tpu.pipeline_mode<synchronous>, transform_indices = @transform_12, window_bounds = array<i64: 16, 1>}, {pipeline_mode = #tpu.pipeline_mode<synchronous>, transform_indices = @transform_13, window_bounds = array<i64: 16, 16>}, {pipeline_mode = #tpu.pipeline_mode<synchronous>, transform_indices = @transform_14, window_bounds = array<i64: 256, 256>}, {pipeline_mode = #tpu.pipeline_mode<synchronous>, transform_indices = @transform_15, window_bounds = array<i64: 5, 256>}, {pipeline_mode = #tpu.pipeline_mode<synchronous>, transform_indices = @transform_16, window_bounds = array<i64: 288, 1>}, {pipeline_mode = #tpu.pipeline_mode<synchronous>, transform_indices = @transform_17, window_bounds = array<i64: 32, 1>}, {pipeline_mode = #tpu.pipeline_mode<synchronous>, transform_indices = @transform_18, window_bounds = array<i64: 32, 32>}, {pipeline_mode = #tpu.pipeline_mode<synchronous>, transform_indices = @transform_19, window_bounds = array<i64: 288, 1>}, {pipeline_mode = #tpu.pipeline_mode<synchronous>, transform_indices = @transform_20, window_bounds = array<i64: 32, 1>}, {pipeline_mode = #tpu.pipeline_mode<synchronous>, transform_indices = @transform_21, window_bounds = array<i64: 32, 32>}, {pipeline_mode = #tpu.pipeline_mode<synchronous>, transform_indices = @transform_22, window_bounds = array<i64: 128, 128>}, {pipeline_mode = #tpu.pipeline_mode<synchronous>, transform_indices = @transform_23, window_bounds = array<i64: 5, 128>}, {pipeline_mode = #tpu.pipeline_mode<synchronous>, transform_indices = @transform_24, window_bounds = array<i64: 16, 32>}, {pipeline_mode = #tpu.pipeline_mode<synchronous>, transform_indices = @transform_25, window_bounds = array<i64: 16, 1>}, {transform_indices = @transform_26, window_bounds = array<i64: 1, 16, 256>}, {transform_indices = @transform_27, window_bounds = array<i64: 1, 32, 128>}]} {
    %c0 = arith.constant 0 : index
    %c0_0 = arith.constant 0 : index
    %c0_1 = arith.constant 0 : index
    %0 = vector.load %arg1[%c0, %c0_0, %c0_1] : memref<1x16x256xf32, #tpu.memory_space<vmem>>, vector<1x16x256xf32>
    %1 = vector.shape_cast %0 : vector<1x16x256xf32> to vector<16x256xf32>
    %c0_2 = arith.constant 0 : index
    %c0_3 = arith.constant 0 : index
    %c0_4 = arith.constant 0 : index
    %2 = vector.load %arg2[%c0_2, %c0_3, %c0_4] : memref<1x32x128xf32, #tpu.memory_space<vmem>>, vector<1x32x128xf32>
    %3 = vector.shape_cast %2 : vector<1x32x128xf32> to vector<32x128xf32>
    %c0_5 = arith.constant 0 : index
    %c0_6 = arith.constant 0 : index
    %4 = vector.load %arg3[%c0_5, %c0_6] : memref<256x128xf32, #tpu.memory_space<vmem>>, vector<256x128xf32>
    %cst = arith.constant dense<0.000000e+00> : vector<16x128xf32>
    %5 = tpu.matmul %1, %4, %cst {dimension_numbers = #tpu.dot_dimension_numbers<[1], [0], [0], [1], [0, 0, 1, 1], [], []>} : vector<16x256xf32>, vector<256x128xf32>, vector<16x128xf32> -> vector<16x128xf32>
    %6 = tpu.concatenate %5, %3 in 0 : vector<16x128xf32>, vector<32x128xf32> -> vector<48x128xf32>
    %c0_7 = arith.constant 0 : index
    %c0_8 = arith.constant 0 : index
    %7 = vector.load %arg5[%c0_7, %c0_8] : memref<8x48xf32, #tpu.memory_space<vmem>>, vector<8x48xf32>
    %cst_9 = arith.constant dense<0.000000e+00> : vector<8x128xf32>
    %8 = tpu.matmul %7, %6, %cst_9 {dimension_numbers = #tpu.dot_dimension_numbers<[1], [0], [0], [1], [0, 0, 1, 1], [], []>} : vector<8x48xf32>, vector<48x128xf32>, vector<8x128xf32> -> vector<8x128xf32>
    %c0_10 = arith.constant 0 : index
    %c0_11 = arith.constant 0 : index
    %9 = vector.load %arg6[%c0_10, %c0_11] : memref<8x1xf32, #tpu.memory_space<vmem>>, vector<8x1xf32>
    %10 = vector.broadcast %9 : vector<8x1xf32> to vector<8x128xf32>
    %11 = arith.addf %8, %10 : vector<8x128xf32>
    %cst_12 = arith.constant 0.000000e+00 : f32
    %12 = vector.broadcast %cst_12 : f32 to vector<8x128xf32>
    %13 = arith.maximumf %11, %12 : vector<8x128xf32>
    %c0_13 = arith.constant 0 : index
    %c0_14 = arith.constant 0 : index
    %14 = vector.load %arg7[%c0_13, %c0_14] : memref<48x8xf32, #tpu.memory_space<vmem>>, vector<48x8xf32>
    %cst_15 = arith.constant dense<0.000000e+00> : vector<48x128xf32>
    %15 = tpu.matmul %14, %13, %cst_15 {dimension_numbers = #tpu.dot_dimension_numbers<[1], [0], [0], [1], [0, 0, 1, 1], [], []>} : vector<48x8xf32>, vector<8x128xf32>, vector<48x128xf32> -> vector<48x128xf32>
    %c0_16 = arith.constant 0 : index
    %c0_17 = arith.constant 0 : index
    %16 = vector.load %arg8[%c0_16, %c0_17] : memref<48x1xf32, #tpu.memory_space<vmem>>, vector<48x1xf32>
    %17 = vector.broadcast %16 : vector<48x1xf32> to vector<48x128xf32>
    %18 = arith.addf %15, %17 : vector<48x128xf32>
    %19 = arith.negf %18 : vector<48x128xf32>
    %20 = math.exp %19 : vector<48x128xf32>
    %cst_18 = arith.constant 1.000000e+00 : f32
    %21 = vector.broadcast %cst_18 : f32 to vector<48x128xf32>
    %22 = arith.addf %21, %20 : vector<48x128xf32>
    %23 = arith.divf %21, %22 : vector<48x128xf32>
    %24 = vector.extract_strided_slice %23 {offsets = [0, 0], sizes = [16, 128], strides = [1, 1]} : vector<48x128xf32> to vector<16x128xf32>
    %c0_19 = arith.constant 0 : index
    %c0_20 = arith.constant 0 : index
    %25 = vector.load %arg4[%c0_19, %c0_20] : memref<128x256xf32, #tpu.memory_space<vmem>>, vector<128x256xf32>
    %cst_21 = arith.constant dense<0.000000e+00> : vector<16x256xf32>
    %26 = tpu.matmul %24, %25, %cst_21 {dimension_numbers = #tpu.dot_dimension_numbers<[1], [0], [0], [1], [0, 0, 1, 1], [], []>} : vector<16x128xf32>, vector<128x256xf32>, vector<16x256xf32> -> vector<16x256xf32>
    %27 = arith.mulf %1, %26 : vector<16x256xf32>
    %28 = vector.extract_strided_slice %23 {offsets = [16, 0], sizes = [32, 128], strides = [1, 1]} : vector<48x128xf32> to vector<32x128xf32>
    %29 = arith.mulf %3, %28 : vector<32x128xf32>
    %c0_22 = arith.constant 0 : index
    %c0_23 = arith.constant 0 : index
    %30 = vector.load %arg24[%c0_22, %c0_23] : memref<5x128xf32, #tpu.memory_space<vmem>>, vector<1x128xf32>
    %c1 = arith.constant 1 : index
    %c0_24 = arith.constant 0 : index
    %31 = vector.load %arg24[%c1, %c0_24] : memref<5x128xf32, #tpu.memory_space<vmem>>, vector<1x128xf32>
    %c2 = arith.constant 2 : index
    %c0_25 = arith.constant 0 : index
    %32 = vector.load %arg24[%c2, %c0_25] : memref<5x128xf32, #tpu.memory_space<vmem>>, vector<1x128xf32>
    %c3 = arith.constant 3 : index
    %c0_26 = arith.constant 0 : index
    %33 = vector.load %arg24[%c3, %c0_26] : memref<5x128xf32, #tpu.memory_space<vmem>>, vector<1x128xf32>
    %c1_i32 = arith.constant 1 : i32
    %34 = tpu.dynamic_rotate %29 by %c1_i32 dim 1 : vector<32x128xf32>, i32 -> vector<32x128xf32>
    %35 = vector.broadcast %30 : vector<1x128xf32> to vector<32x128xf32>
    %36 = arith.mulf %34, %35 : vector<32x128xf32>
    %c127_i32 = arith.constant 127 : i32
    %37 = tpu.dynamic_rotate %29 by %c127_i32 dim 1 : vector<32x128xf32>, i32 -> vector<32x128xf32>
    %38 = vector.broadcast %31 : vector<1x128xf32> to vector<32x128xf32>
    %39 = arith.mulf %37, %38 : vector<32x128xf32>
    %c96 = arith.constant 96 : index
    %c0_27 = arith.constant 0 : index
    %40 = vector.load %arg17[%c96, %c0_27] : memref<288x1xf32, #tpu.memory_space<vmem>>, vector<32x1xf32>
    %41 = vector.broadcast %40 : vector<32x1xf32> to vector<32x128xf32>
    %42 = arith.mulf %36, %41 : vector<32x128xf32>
    %c128 = arith.constant 128 : index
    %c0_28 = arith.constant 0 : index
    %43 = vector.load %arg17[%c128, %c0_28] : memref<288x1xf32, #tpu.memory_space<vmem>>, vector<32x1xf32>
    %44 = vector.broadcast %43 : vector<32x1xf32> to vector<32x128xf32>
    %45 = arith.mulf %29, %44 : vector<32x128xf32>
    %46 = arith.addf %42, %45 : vector<32x128xf32>
    %c160 = arith.constant 160 : index
    %c0_29 = arith.constant 0 : index
    %47 = vector.load %arg17[%c160, %c0_29] : memref<288x1xf32, #tpu.memory_space<vmem>>, vector<32x1xf32>
    %48 = vector.broadcast %47 : vector<32x1xf32> to vector<32x128xf32>
    %49 = arith.mulf %39, %48 : vector<32x128xf32>
    %50 = arith.addf %46, %49 : vector<32x128xf32>
    %c0_30 = arith.constant 0 : index
    %c0_31 = arith.constant 0 : index
    %51 = vector.load %arg17[%c0_30, %c0_31] : memref<288x1xf32, #tpu.memory_space<vmem>>, vector<32x1xf32>
    %52 = vector.broadcast %51 : vector<32x1xf32> to vector<32x128xf32>
    %53 = arith.mulf %36, %52 : vector<32x128xf32>
    %c32 = arith.constant 32 : index
    %c0_32 = arith.constant 0 : index
    %54 = vector.load %arg17[%c32, %c0_32] : memref<288x1xf32, #tpu.memory_space<vmem>>, vector<32x1xf32>
    %55 = vector.broadcast %54 : vector<32x1xf32> to vector<32x128xf32>
    %56 = arith.mulf %29, %55 : vector<32x128xf32>
    %57 = arith.addf %53, %56 : vector<32x128xf32>
    %c64 = arith.constant 64 : index
    %c0_33 = arith.constant 0 : index
    %58 = vector.load %arg17[%c64, %c0_33] : memref<288x1xf32, #tpu.memory_space<vmem>>, vector<32x1xf32>
    %59 = vector.broadcast %58 : vector<32x1xf32> to vector<32x128xf32>
    %60 = arith.mulf %39, %59 : vector<32x128xf32>
    %61 = arith.addf %57, %60 : vector<32x128xf32>
    %c8_i32 = arith.constant 8 : i32
    %62 = tpu.dynamic_rotate %61 by %c8_i32 dim 1 : vector<32x128xf32>, i32 -> vector<32x128xf32>
    %63 = vector.broadcast %32 : vector<1x128xf32> to vector<32x128xf32>
    %64 = arith.mulf %62, %63 : vector<32x128xf32>
    %65 = arith.addf %50, %64 : vector<32x128xf32>
    %c192 = arith.constant 192 : index
    %c0_34 = arith.constant 0 : index
    %66 = vector.load %arg17[%c192, %c0_34] : memref<288x1xf32, #tpu.memory_space<vmem>>, vector<32x1xf32>
    %67 = vector.broadcast %66 : vector<32x1xf32> to vector<32x128xf32>
    %68 = arith.mulf %36, %67 : vector<32x128xf32>
    %c224 = arith.constant 224 : index
    %c0_35 = arith.constant 0 : index
    %69 = vector.load %arg17[%c224, %c0_35] : memref<288x1xf32, #tpu.memory_space<vmem>>, vector<32x1xf32>
    %70 = vector.broadcast %69 : vector<32x1xf32> to vector<32x128xf32>
    %71 = arith.mulf %29, %70 : vector<32x128xf32>
    %72 = arith.addf %68, %71 : vector<32x128xf32>
    %c256 = arith.constant 256 : index
    %c0_36 = arith.constant 0 : index
    %73 = vector.load %arg17[%c256, %c0_36] : memref<288x1xf32, #tpu.memory_space<vmem>>, vector<32x1xf32>
    %74 = vector.broadcast %73 : vector<32x1xf32> to vector<32x128xf32>
    %75 = arith.mulf %39, %74 : vector<32x128xf32>
    %76 = arith.addf %72, %75 : vector<32x128xf32>
    %c120_i32 = arith.constant 120 : i32
    %77 = tpu.dynamic_rotate %76 by %c120_i32 dim 1 : vector<32x128xf32>, i32 -> vector<32x128xf32>
    %78 = vector.broadcast %33 : vector<1x128xf32> to vector<32x128xf32>
    %79 = arith.mulf %77, %78 : vector<32x128xf32>
    %80 = arith.addf %65, %79 : vector<32x128xf32>
    %c0_37 = arith.constant 0 : index
    %c0_38 = arith.constant 0 : index
    %81 = vector.load %arg18[%c0_37, %c0_38] : memref<32x1xf32, #tpu.memory_space<vmem>>, vector<32x1xf32>
    %82 = vector.broadcast %81 : vector<32x1xf32> to vector<32x128xf32>
    %83 = arith.addf %80, %82 : vector<32x128xf32>
    %cst_39 = arith.constant 0.000000e+00 : f32
    %84 = vector.broadcast %cst_39 : f32 to vector<32x128xf32>
    %85 = arith.maximumf %83, %84 : vector<32x128xf32>
    %c0_40 = arith.constant 0 : index
    %c0_41 = arith.constant 0 : index
    %86 = vector.load %arg19[%c0_40, %c0_41] : memref<32x32xf32, #tpu.memory_space<vmem>>, vector<32x32xf32>
    %c0_42 = arith.constant 0 : index
    %c0_43 = arith.constant 0 : index
    %87 = vector.load %arg23[%c0_42, %c0_43] : memref<128x128xf32, #tpu.memory_space<vmem>>, vector<128x128xf32>
    %cst_44 = arith.constant dense<0.000000e+00> : vector<32x128xf32>
    %88 = tpu.matmul %85, %87, %cst_44 {dimension_numbers = #tpu.dot_dimension_numbers<[1], [0], [0], [1], [0, 0, 1, 1], [], []>} : vector<32x128xf32>, vector<128x128xf32>, vector<32x128xf32> -> vector<32x128xf32>
    %cst_45 = arith.constant dense<0.000000e+00> : vector<32x128xf32>
    %89 = tpu.matmul %86, %88, %cst_45 {dimension_numbers = #tpu.dot_dimension_numbers<[1], [0], [0], [1], [0, 0, 1, 1], [], []>} : vector<32x32xf32>, vector<32x128xf32>, vector<32x128xf32> -> vector<32x128xf32>
    %90 = arith.addf %89, %85 : vector<32x128xf32>
    %c1_i32_46 = arith.constant 1 : i32
    %91 = tpu.dynamic_rotate %90 by %c1_i32_46 dim 1 : vector<32x128xf32>, i32 -> vector<32x128xf32>
    %92 = vector.broadcast %30 : vector<1x128xf32> to vector<32x128xf32>
    %93 = arith.mulf %91, %92 : vector<32x128xf32>
    %c127_i32_47 = arith.constant 127 : i32
    %94 = tpu.dynamic_rotate %90 by %c127_i32_47 dim 1 : vector<32x128xf32>, i32 -> vector<32x128xf32>
    %95 = vector.broadcast %31 : vector<1x128xf32> to vector<32x128xf32>
    %96 = arith.mulf %94, %95 : vector<32x128xf32>
    %c96_48 = arith.constant 96 : index
    %c0_49 = arith.constant 0 : index
    %97 = vector.load %arg20[%c96_48, %c0_49] : memref<288x1xf32, #tpu.memory_space<vmem>>, vector<32x1xf32>
    %98 = vector.broadcast %97 : vector<32x1xf32> to vector<32x128xf32>
    %99 = arith.mulf %93, %98 : vector<32x128xf32>
    %c128_50 = arith.constant 128 : index
    %c0_51 = arith.constant 0 : index
    %100 = vector.load %arg20[%c128_50, %c0_51] : memref<288x1xf32, #tpu.memory_space<vmem>>, vector<32x1xf32>
    %101 = vector.broadcast %100 : vector<32x1xf32> to vector<32x128xf32>
    %102 = arith.mulf %90, %101 : vector<32x128xf32>
    %103 = arith.addf %99, %102 : vector<32x128xf32>
    %c160_52 = arith.constant 160 : index
    %c0_53 = arith.constant 0 : index
    %104 = vector.load %arg20[%c160_52, %c0_53] : memref<288x1xf32, #tpu.memory_space<vmem>>, vector<32x1xf32>
    %105 = vector.broadcast %104 : vector<32x1xf32> to vector<32x128xf32>
    %106 = arith.mulf %96, %105 : vector<32x128xf32>
    %107 = arith.addf %103, %106 : vector<32x128xf32>
    %c0_54 = arith.constant 0 : index
    %c0_55 = arith.constant 0 : index
    %108 = vector.load %arg20[%c0_54, %c0_55] : memref<288x1xf32, #tpu.memory_space<vmem>>, vector<32x1xf32>
    %109 = vector.broadcast %108 : vector<32x1xf32> to vector<32x128xf32>
    %110 = arith.mulf %93, %109 : vector<32x128xf32>
    %c32_56 = arith.constant 32 : index
    %c0_57 = arith.constant 0 : index
    %111 = vector.load %arg20[%c32_56, %c0_57] : memref<288x1xf32, #tpu.memory_space<vmem>>, vector<32x1xf32>
    %112 = vector.broadcast %111 : vector<32x1xf32> to vector<32x128xf32>
    %113 = arith.mulf %90, %112 : vector<32x128xf32>
    %114 = arith.addf %110, %113 : vector<32x128xf32>
    %c64_58 = arith.constant 64 : index
    %c0_59 = arith.constant 0 : index
    %115 = vector.load %arg20[%c64_58, %c0_59] : memref<288x1xf32, #tpu.memory_space<vmem>>, vector<32x1xf32>
    %116 = vector.broadcast %115 : vector<32x1xf32> to vector<32x128xf32>
    %117 = arith.mulf %96, %116 : vector<32x128xf32>
    %118 = arith.addf %114, %117 : vector<32x128xf32>
    %c8_i32_60 = arith.constant 8 : i32
    %119 = tpu.dynamic_rotate %118 by %c8_i32_60 dim 1 : vector<32x128xf32>, i32 -> vector<32x128xf32>
    %120 = vector.broadcast %32 : vector<1x128xf32> to vector<32x128xf32>
    %121 = arith.mulf %119, %120 : vector<32x128xf32>
    %122 = arith.addf %107, %121 : vector<32x128xf32>
    %c192_61 = arith.constant 192 : index
    %c0_62 = arith.constant 0 : index
    %123 = vector.load %arg20[%c192_61, %c0_62] : memref<288x1xf32, #tpu.memory_space<vmem>>, vector<32x1xf32>
    %124 = vector.broadcast %123 : vector<32x1xf32> to vector<32x128xf32>
    %125 = arith.mulf %93, %124 : vector<32x128xf32>
    %c224_63 = arith.constant 224 : index
    %c0_64 = arith.constant 0 : index
    %126 = vector.load %arg20[%c224_63, %c0_64] : memref<288x1xf32, #tpu.memory_space<vmem>>, vector<32x1xf32>
    %127 = vector.broadcast %126 : vector<32x1xf32> to vector<32x128xf32>
    %128 = arith.mulf %90, %127 : vector<32x128xf32>
    %129 = arith.addf %125, %128 : vector<32x128xf32>
    %c256_65 = arith.constant 256 : index
    %c0_66 = arith.constant 0 : index
    %130 = vector.load %arg20[%c256_65, %c0_66] : memref<288x1xf32, #tpu.memory_space<vmem>>, vector<32x1xf32>
    %131 = vector.broadcast %130 : vector<32x1xf32> to vector<32x128xf32>
    %132 = arith.mulf %96, %131 : vector<32x128xf32>
    %133 = arith.addf %129, %132 : vector<32x128xf32>
    %c120_i32_67 = arith.constant 120 : i32
    %134 = tpu.dynamic_rotate %133 by %c120_i32_67 dim 1 : vector<32x128xf32>, i32 -> vector<32x128xf32>
    %135 = vector.broadcast %33 : vector<1x128xf32> to vector<32x128xf32>
    %136 = arith.mulf %134, %135 : vector<32x128xf32>
    %137 = arith.addf %122, %136 : vector<32x128xf32>
    %c0_68 = arith.constant 0 : index
    %c0_69 = arith.constant 0 : index
    %138 = vector.load %arg21[%c0_68, %c0_69] : memref<32x1xf32, #tpu.memory_space<vmem>>, vector<32x1xf32>
    %139 = vector.broadcast %138 : vector<32x1xf32> to vector<32x128xf32>
    %140 = arith.addf %137, %139 : vector<32x128xf32>
    %c0_70 = arith.constant 0 : index
    %c0_71 = arith.constant 0 : index
    %141 = vector.load %arg22[%c0_70, %c0_71] : memref<32x32xf32, #tpu.memory_space<vmem>>, vector<32x32xf32>
    %c0_72 = arith.constant 0 : index
    %c0_73 = arith.constant 0 : index
    %142 = vector.load %arg23[%c0_72, %c0_73] : memref<128x128xf32, #tpu.memory_space<vmem>>, vector<128x128xf32>
    %cst_74 = arith.constant dense<0.000000e+00> : vector<32x128xf32>
    %143 = tpu.matmul %140, %142, %cst_74 {dimension_numbers = #tpu.dot_dimension_numbers<[1], [0], [0], [1], [0, 0, 1, 1], [], []>} : vector<32x128xf32>, vector<128x128xf32>, vector<32x128xf32> -> vector<32x128xf32>
    %cst_75 = arith.constant dense<0.000000e+00> : vector<32x128xf32>
    %144 = tpu.matmul %141, %143, %cst_75 {dimension_numbers = #tpu.dot_dimension_numbers<[1], [0], [0], [1], [0, 0, 1, 1], [], []>} : vector<32x32xf32>, vector<32x128xf32>, vector<32x128xf32> -> vector<32x128xf32>
    %145 = arith.addf %144, %140 : vector<32x128xf32>
    %146 = arith.addf %145, %3 : vector<32x128xf32>
    %c4 = arith.constant 4 : index
    %c0_76 = arith.constant 0 : index
    %147 = vector.load %arg24[%c4, %c0_76] : memref<5x128xf32, #tpu.memory_space<vmem>>, vector<1x128xf32>
    %148 = vector.broadcast %147 : vector<1x128xf32> to vector<32x128xf32>
    %149 = arith.mulf %146, %148 : vector<32x128xf32>
    %c0_77 = arith.constant 0 : index
    %c0_78 = arith.constant 0 : index
    %c0_79 = arith.constant 0 : index
    %150 = vector.load %arg28[%c0_77, %c0_78, %c0_79] : memref<1x32x128xf32, #tpu.memory_space<vmem>>, vector<1x32x128xf32>
    %151 = vector.shape_cast %150 : vector<1x32x128xf32> to vector<32x128xf32>
    %152 = vector.shape_cast %149 : vector<32x128xf32> to vector<1x32x128xf32>
    tpu.vector_store %arg28[%c0_77, %c0_78, %c0_79], %152 {strides = array<i32>} : memref<1x32x128xf32, #tpu.memory_space<vmem>>, vector<1x32x128xf32>,
    %c0_80 = arith.constant 0 : index
    %c0_81 = arith.constant 0 : index
    %153 = vector.load %arg16[%c0_80, %c0_81] : memref<5x256xf32, #tpu.memory_space<vmem>>, vector<1x256xf32>
    %c1_82 = arith.constant 1 : index
    %c0_83 = arith.constant 0 : index
    %154 = vector.load %arg16[%c1_82, %c0_83] : memref<5x256xf32, #tpu.memory_space<vmem>>, vector<1x256xf32>
    %c2_84 = arith.constant 2 : index
    %c0_85 = arith.constant 0 : index
    %155 = vector.load %arg16[%c2_84, %c0_85] : memref<5x256xf32, #tpu.memory_space<vmem>>, vector<1x256xf32>
    %c3_86 = arith.constant 3 : index
    %c0_87 = arith.constant 0 : index
    %156 = vector.load %arg16[%c3_86, %c0_87] : memref<5x256xf32, #tpu.memory_space<vmem>>, vector<1x256xf32>
    %c1_i32_88 = arith.constant 1 : i32
    %157 = tpu.dynamic_rotate %27 by %c1_i32_88 dim 1 : vector<16x256xf32>, i32 -> vector<16x256xf32>
    %158 = vector.broadcast %153 : vector<1x256xf32> to vector<16x256xf32>
    %159 = arith.mulf %157, %158 : vector<16x256xf32>
    %c255_i32 = arith.constant 255 : i32
    %160 = tpu.dynamic_rotate %27 by %c255_i32 dim 1 : vector<16x256xf32>, i32 -> vector<16x256xf32>
    %161 = vector.broadcast %154 : vector<1x256xf32> to vector<16x256xf32>
    %162 = arith.mulf %160, %161 : vector<16x256xf32>
    %c48 = arith.constant 48 : index
    %c0_89 = arith.constant 0 : index
    %163 = vector.load %arg9[%c48, %c0_89] : memref<144x1xf32, #tpu.memory_space<vmem>>, vector<16x1xf32>
    %164 = vector.broadcast %163 : vector<16x1xf32> to vector<16x256xf32>
    %165 = arith.mulf %159, %164 : vector<16x256xf32>
    %c64_90 = arith.constant 64 : index
    %c0_91 = arith.constant 0 : index
    %166 = vector.load %arg9[%c64_90, %c0_91] : memref<144x1xf32, #tpu.memory_space<vmem>>, vector<16x1xf32>
    %167 = vector.broadcast %166 : vector<16x1xf32> to vector<16x256xf32>
    %168 = arith.mulf %27, %167 : vector<16x256xf32>
    %169 = arith.addf %165, %168 : vector<16x256xf32>
    %c80 = arith.constant 80 : index
    %c0_92 = arith.constant 0 : index
    %170 = vector.load %arg9[%c80, %c0_92] : memref<144x1xf32, #tpu.memory_space<vmem>>, vector<16x1xf32>
    %171 = vector.broadcast %170 : vector<16x1xf32> to vector<16x256xf32>
    %172 = arith.mulf %162, %171 : vector<16x256xf32>
    %173 = arith.addf %169, %172 : vector<16x256xf32>
    %c0_93 = arith.constant 0 : index
    %c0_94 = arith.constant 0 : index
    %174 = vector.load %arg9[%c0_93, %c0_94] : memref<144x1xf32, #tpu.memory_space<vmem>>, vector<16x1xf32>
    %175 = vector.broadcast %174 : vector<16x1xf32> to vector<16x256xf32>
    %176 = arith.mulf %159, %175 : vector<16x256xf32>
    %c16 = arith.constant 16 : index
    %c0_95 = arith.constant 0 : index
    %177 = vector.load %arg9[%c16, %c0_95] : memref<144x1xf32, #tpu.memory_space<vmem>>, vector<16x1xf32>
    %178 = vector.broadcast %177 : vector<16x1xf32> to vector<16x256xf32>
    %179 = arith.mulf %27, %178 : vector<16x256xf32>
    %180 = arith.addf %176, %179 : vector<16x256xf32>
    %c32_96 = arith.constant 32 : index
    %c0_97 = arith.constant 0 : index
    %181 = vector.load %arg9[%c32_96, %c0_97] : memref<144x1xf32, #tpu.memory_space<vmem>>, vector<16x1xf32>
    %182 = vector.broadcast %181 : vector<16x1xf32> to vector<16x256xf32>
    %183 = arith.mulf %162, %182 : vector<16x256xf32>
    %184 = arith.addf %180, %183 : vector<16x256xf32>
    %c16_i32 = arith.constant 16 : i32
    %185 = tpu.dynamic_rotate %184 by %c16_i32 dim 1 : vector<16x256xf32>, i32 -> vector<16x256xf32>
    %186 = vector.broadcast %155 : vector<1x256xf32> to vector<16x256xf32>
    %187 = arith.mulf %185, %186 : vector<16x256xf32>
    %188 = arith.addf %173, %187 : vector<16x256xf32>
    %c96_98 = arith.constant 96 : index
    %c0_99 = arith.constant 0 : index
    %189 = vector.load %arg9[%c96_98, %c0_99] : memref<144x1xf32, #tpu.memory_space<vmem>>, vector<16x1xf32>
    %190 = vector.broadcast %189 : vector<16x1xf32> to vector<16x256xf32>
    %191 = arith.mulf %159, %190 : vector<16x256xf32>
    %c112 = arith.constant 112 : index
    %c0_100 = arith.constant 0 : index
    %192 = vector.load %arg9[%c112, %c0_100] : memref<144x1xf32, #tpu.memory_space<vmem>>, vector<16x1xf32>
    %193 = vector.broadcast %192 : vector<16x1xf32> to vector<16x256xf32>
    %194 = arith.mulf %27, %193 : vector<16x256xf32>
    %195 = arith.addf %191, %194 : vector<16x256xf32>
    %c128_101 = arith.constant 128 : index
    %c0_102 = arith.constant 0 : index
    %196 = vector.load %arg9[%c128_101, %c0_102] : memref<144x1xf32, #tpu.memory_space<vmem>>, vector<16x1xf32>
    %197 = vector.broadcast %196 : vector<16x1xf32> to vector<16x256xf32>
    %198 = arith.mulf %162, %197 : vector<16x256xf32>
    %199 = arith.addf %195, %198 : vector<16x256xf32>
    %c240_i32 = arith.constant 240 : i32
    %200 = tpu.dynamic_rotate %199 by %c240_i32 dim 1 : vector<16x256xf32>, i32 -> vector<16x256xf32>
    %201 = vector.broadcast %156 : vector<1x256xf32> to vector<16x256xf32>
    %202 = arith.mulf %200, %201 : vector<16x256xf32>
    %203 = arith.addf %188, %202 : vector<16x256xf32>
    %c0_103 = arith.constant 0 : index
    %c0_104 = arith.constant 0 : index
    %204 = vector.load %arg10[%c0_103, %c0_104] : memref<16x1xf32, #tpu.memory_space<vmem>>, vector<16x1xf32>
    %205 = vector.broadcast %204 : vector<16x1xf32> to vector<16x256xf32>
    %206 = arith.addf %203, %205 : vector<16x256xf32>
    %cst_105 = arith.constant 0.000000e+00 : f32
    %207 = vector.broadcast %cst_105 : f32 to vector<16x256xf32>
    %208 = arith.maximumf %206, %207 : vector<16x256xf32>
    %c0_106 = arith.constant 0 : index
    %c0_107 = arith.constant 0 : index
    %209 = vector.load %arg11[%c0_106, %c0_107] : memref<16x16xf32, #tpu.memory_space<vmem>>, vector<16x16xf32>
    %c0_108 = arith.constant 0 : index
    %c0_109 = arith.constant 0 : index
    %210 = vector.load %arg15[%c0_108, %c0_109] : memref<256x256xf32, #tpu.memory_space<vmem>>, vector<256x256xf32>
    %cst_110 = arith.constant dense<0.000000e+00> : vector<16x256xf32>
    %211 = tpu.matmul %208, %210, %cst_110 {dimension_numbers = #tpu.dot_dimension_numbers<[1], [0], [0], [1], [0, 0, 1, 1], [], []>} : vector<16x256xf32>, vector<256x256xf32>, vector<16x256xf32> -> vector<16x256xf32>
    %cst_111 = arith.constant dense<0.000000e+00> : vector<16x256xf32>
    %212 = tpu.matmul %209, %211, %cst_111 {dimension_numbers = #tpu.dot_dimension_numbers<[1], [0], [0], [1], [0, 0, 1, 1], [], []>} : vector<16x16xf32>, vector<16x256xf32>, vector<16x256xf32> -> vector<16x256xf32>
    %213 = arith.addf %212, %208 : vector<16x256xf32>
    %c1_i32_112 = arith.constant 1 : i32
    %214 = tpu.dynamic_rotate %213 by %c1_i32_112 dim 1 : vector<16x256xf32>, i32 -> vector<16x256xf32>
    %215 = vector.broadcast %153 : vector<1x256xf32> to vector<16x256xf32>
    %216 = arith.mulf %214, %215 : vector<16x256xf32>
    %c255_i32_113 = arith.constant 255 : i32
    %217 = tpu.dynamic_rotate %213 by %c255_i32_113 dim 1 : vector<16x256xf32>, i32 -> vector<16x256xf32>
    %218 = vector.broadcast %154 : vector<1x256xf32> to vector<16x256xf32>
    %219 = arith.mulf %217, %218 : vector<16x256xf32>
    %c48_114 = arith.constant 48 : index
    %c0_115 = arith.constant 0 : index
    %220 = vector.load %arg12[%c48_114, %c0_115] : memref<144x1xf32, #tpu.memory_space<vmem>>, vector<16x1xf32>
    %221 = vector.broadcast %220 : vector<16x1xf32> to vector<16x256xf32>
    %222 = arith.mulf %216, %221 : vector<16x256xf32>
    %c64_116 = arith.constant 64 : index
    %c0_117 = arith.constant 0 : index
    %223 = vector.load %arg12[%c64_116, %c0_117] : memref<144x1xf32, #tpu.memory_space<vmem>>, vector<16x1xf32>
    %224 = vector.broadcast %223 : vector<16x1xf32> to vector<16x256xf32>
    %225 = arith.mulf %213, %224 : vector<16x256xf32>
    %226 = arith.addf %222, %225 : vector<16x256xf32>
    %c80_118 = arith.constant 80 : index
    %c0_119 = arith.constant 0 : index
    %227 = vector.load %arg12[%c80_118, %c0_119] : memref<144x1xf32, #tpu.memory_space<vmem>>, vector<16x1xf32>
    %228 = vector.broadcast %227 : vector<16x1xf32> to vector<16x256xf32>
    %229 = arith.mulf %219, %228 : vector<16x256xf32>
    %230 = arith.addf %226, %229 : vector<16x256xf32>
    %c0_120 = arith.constant 0 : index
    %c0_121 = arith.constant 0 : index
    %231 = vector.load %arg12[%c0_120, %c0_121] : memref<144x1xf32, #tpu.memory_space<vmem>>, vector<16x1xf32>
    %232 = vector.broadcast %231 : vector<16x1xf32> to vector<16x256xf32>
    %233 = arith.mulf %216, %232 : vector<16x256xf32>
    %c16_122 = arith.constant 16 : index
    %c0_123 = arith.constant 0 : index
    %234 = vector.load %arg12[%c16_122, %c0_123] : memref<144x1xf32, #tpu.memory_space<vmem>>, vector<16x1xf32>
    %235 = vector.broadcast %234 : vector<16x1xf32> to vector<16x256xf32>
    %236 = arith.mulf %213, %235 : vector<16x256xf32>
    %237 = arith.addf %233, %236 : vector<16x256xf32>
    %c32_124 = arith.constant 32 : index
    %c0_125 = arith.constant 0 : index
    %238 = vector.load %arg12[%c32_124, %c0_125] : memref<144x1xf32, #tpu.memory_space<vmem>>, vector<16x1xf32>
    %239 = vector.broadcast %238 : vector<16x1xf32> to vector<16x256xf32>
    %240 = arith.mulf %219, %239 : vector<16x256xf32>
    %241 = arith.addf %237, %240 : vector<16x256xf32>
    %c16_i32_126 = arith.constant 16 : i32
    %242 = tpu.dynamic_rotate %241 by %c16_i32_126 dim 1 : vector<16x256xf32>, i32 -> vector<16x256xf32>
    %243 = vector.broadcast %155 : vector<1x256xf32> to vector<16x256xf32>
    %244 = arith.mulf %242, %243 : vector<16x256xf32>
    %245 = arith.addf %230, %244 : vector<16x256xf32>
    %c96_127 = arith.constant 96 : index
    %c0_128 = arith.constant 0 : index
    %246 = vector.load %arg12[%c96_127, %c0_128] : memref<144x1xf32, #tpu.memory_space<vmem>>, vector<16x1xf32>
    %247 = vector.broadcast %246 : vector<16x1xf32> to vector<16x256xf32>
    %248 = arith.mulf %216, %247 : vector<16x256xf32>
    %c112_129 = arith.constant 112 : index
    %c0_130 = arith.constant 0 : index
    %249 = vector.load %arg12[%c112_129, %c0_130] : memref<144x1xf32, #tpu.memory_space<vmem>>, vector<16x1xf32>
    %250 = vector.broadcast %249 : vector<16x1xf32> to vector<16x256xf32>
    %251 = arith.mulf %213, %250 : vector<16x256xf32>
    %252 = arith.addf %248, %251 : vector<16x256xf32>
    %c128_131 = arith.constant 128 : index
    %c0_132 = arith.constant 0 : index
    %253 = vector.load %arg12[%c128_131, %c0_132] : memref<144x1xf32, #tpu.memory_space<vmem>>, vector<16x1xf32>
    %254 = vector.broadcast %253 : vector<16x1xf32> to vector<16x256xf32>
    %255 = arith.mulf %219, %254 : vector<16x256xf32>
    %256 = arith.addf %252, %255 : vector<16x256xf32>
    %c240_i32_133 = arith.constant 240 : i32
    %257 = tpu.dynamic_rotate %256 by %c240_i32_133 dim 1 : vector<16x256xf32>, i32 -> vector<16x256xf32>
    %258 = vector.broadcast %156 : vector<1x256xf32> to vector<16x256xf32>
    %259 = arith.mulf %257, %258 : vector<16x256xf32>
    %260 = arith.addf %245, %259 : vector<16x256xf32>
    %c0_134 = arith.constant 0 : index
    %c0_135 = arith.constant 0 : index
    %261 = vector.load %arg13[%c0_134, %c0_135] : memref<16x1xf32, #tpu.memory_space<vmem>>, vector<16x1xf32>
    %262 = vector.broadcast %261 : vector<16x1xf32> to vector<16x256xf32>
    %263 = arith.addf %260, %262 : vector<16x256xf32>
    %c0_136 = arith.constant 0 : index
    %c0_137 = arith.constant 0 : index
    %264 = vector.load %arg14[%c0_136, %c0_137] : memref<16x16xf32, #tpu.memory_space<vmem>>, vector<16x16xf32>
    %c0_138 = arith.constant 0 : index
    %c0_139 = arith.constant 0 : index
    %265 = vector.load %arg15[%c0_138, %c0_139] : memref<256x256xf32, #tpu.memory_space<vmem>>, vector<256x256xf32>
    %cst_140 = arith.constant dense<0.000000e+00> : vector<16x256xf32>
    %266 = tpu.matmul %263, %265, %cst_140 {dimension_numbers = #tpu.dot_dimension_numbers<[1], [0], [0], [1], [0, 0, 1, 1], [], []>} : vector<16x256xf32>, vector<256x256xf32>, vector<16x256xf32> -> vector<16x256xf32>
    %cst_141 = arith.constant dense<0.000000e+00> : vector<16x256xf32>
    %267 = tpu.matmul %264, %266, %cst_141 {dimension_numbers = #tpu.dot_dimension_numbers<[1], [0], [0], [1], [0, 0, 1, 1], [], []>} : vector<16x16xf32>, vector<16x256xf32>, vector<16x256xf32> -> vector<16x256xf32>
    %268 = arith.addf %267, %263 : vector<16x256xf32>
    %269 = arith.addf %268, %1 : vector<16x256xf32>
    %c0_142 = arith.constant 0 : index
    %c0_143 = arith.constant 0 : index
    %270 = vector.load %arg25[%c0_142, %c0_143] : memref<16x32xf32, #tpu.memory_space<vmem>>, vector<16x32xf32>
    %cst_144 = arith.constant dense<0.000000e+00> : vector<16x128xf32>
    %271 = tpu.matmul %270, %149, %cst_144 {dimension_numbers = #tpu.dot_dimension_numbers<[1], [0], [0], [1], [0, 0, 1, 1], [], []>} : vector<16x32xf32>, vector<32x128xf32>, vector<16x128xf32> -> vector<16x128xf32>
    %c0_145 = arith.constant 0 : index
    %c0_146 = arith.constant 0 : index
    %272 = vector.load %arg4[%c0_145, %c0_146] : memref<128x256xf32, #tpu.memory_space<vmem>>, vector<128x256xf32>
    %cst_147 = arith.constant dense<0.000000e+00> : vector<16x256xf32>
    %273 = tpu.matmul %271, %272, %cst_147 {dimension_numbers = #tpu.dot_dimension_numbers<[1], [0], [0], [1], [0, 0, 1, 1], [], []>} : vector<16x128xf32>, vector<128x256xf32>, vector<16x256xf32> -> vector<16x256xf32>
    %cst_148 = arith.constant 2.000000e+00 : f32
    %274 = vector.broadcast %cst_148 : f32 to vector<16x256xf32>
    %275 = arith.mulf %274, %269 : vector<16x256xf32>
    %276 = arith.addf %275, %273 : vector<16x256xf32>
    %c0_149 = arith.constant 0 : index
    %c0_150 = arith.constant 0 : index
    %277 = vector.load %arg26[%c0_149, %c0_150] : memref<16x1xf32, #tpu.memory_space<vmem>>, vector<16x1xf32>
    %278 = vector.broadcast %277 : vector<16x1xf32> to vector<16x256xf32>
    %279 = arith.addf %276, %278 : vector<16x256xf32>
    %cst_151 = arith.constant 0.000000e+00 : f32
    %280 = vector.broadcast %cst_151 : f32 to vector<16x256xf32>
    %281 = arith.maximumf %279, %280 : vector<16x256xf32>
    %c4_152 = arith.constant 4 : index
    %c0_153 = arith.constant 0 : index
    %282 = vector.load %arg16[%c4_152, %c0_153] : memref<5x256xf32, #tpu.memory_space<vmem>>, vector<1x256xf32>
    %283 = vector.broadcast %282 : vector<1x256xf32> to vector<16x256xf32>
    %284 = arith.mulf %281, %283 : vector<16x256xf32>
    %c0_154 = arith.constant 0 : index
    %c0_155 = arith.constant 0 : index
    %c0_156 = arith.constant 0 : index
    %285 = vector.load %arg27[%c0_154, %c0_155, %c0_156] : memref<1x16x256xf32, #tpu.memory_space<vmem>>, vector<1x16x256xf32>
    %286 = vector.shape_cast %285 : vector<1x16x256xf32> to vector<16x256xf32>
    %287 = vector.shape_cast %284 : vector<16x256xf32> to vector<1x16x256xf32>
    tpu.vector_store %arg27[%c0_154, %c0_155, %c0_156], %287 {strides = array<i32>} : memref<1x16x256xf32, #tpu.memory_space<vmem>>, vector<1x16x256xf32>,
    return
  }
  func.func @transform_0(%arg0: i32) -> (i32, i32, i32) {
    %c0_i32 = arith.constant 0 : i32
    %c0_i32_0 = arith.constant 0 : i32
    %c0_i32_1 = arith.constant 0 : i32
    return %arg0, %c0_i32, %c0_i32_0 : i32, i32, i32
  }
  func.func @transform_1(%arg0: i32) -> (i32, i32, i32) {
    %c0_i32 = arith.constant 0 : i32
    %c0_i32_0 = arith.constant 0 : i32
    %c0_i32_1 = arith.constant 0 : i32
    return %arg0, %c0_i32, %c0_i32_0 : i32, i32, i32
  }
  func.func @transform_2(%arg0: i32) -> (i32, i32) {
    %c0_i32 = arith.constant 0 : i32
    %c0_i32_0 = arith.constant 0 : i32
    %c0_i32_1 = arith.constant 0 : i32
    return %c0_i32, %c0_i32_0 : i32, i32
  }
  func.func @transform_3(%arg0: i32) -> (i32, i32) {
    %c0_i32 = arith.constant 0 : i32
    %c0_i32_0 = arith.constant 0 : i32
    %c0_i32_1 = arith.constant 0 : i32
    return %c0_i32, %c0_i32_0 : i32, i32
  }
  func.func @transform_4(%arg0: i32) -> (i32, i32) {
    %c0_i32 = arith.constant 0 : i32
    %c0_i32_0 = arith.constant 0 : i32
    %c0_i32_1 = arith.constant 0 : i32
    return %c0_i32, %c0_i32_0 : i32, i32
  }
  func.func @transform_5(%arg0: i32) -> (i32, i32) {
    %c0_i32 = arith.constant 0 : i32
    %c0_i32_0 = arith.constant 0 : i32
    %c0_i32_1 = arith.constant 0 : i32
    return %c0_i32, %c0_i32_0 : i32, i32
  }
  func.func @transform_6(%arg0: i32) -> (i32, i32) {
    %c0_i32 = arith.constant 0 : i32
    %c0_i32_0 = arith.constant 0 : i32
    %c0_i32_1 = arith.constant 0 : i32
    return %c0_i32, %c0_i32_0 : i32, i32
  }
  func.func @transform_7(%arg0: i32) -> (i32, i32) {
    %c0_i32 = arith.constant 0 : i32
    %c0_i32_0 = arith.constant 0 : i32
    %c0_i32_1 = arith.constant 0 : i32
    return %c0_i32, %c0_i32_0 : i32, i32
  }
  func.func @transform_8(%arg0: i32) -> (i32, i32) {
    %c0_i32 = arith.constant 0 : i32
    %c0_i32_0 = arith.constant 0 : i32
    %c0_i32_1 = arith.constant 0 : i32
    return %c0_i32, %c0_i32_0 : i32, i32
  }
  func.func @transform_9(%arg0: i32) -> (i32, i32) {
    %c0_i32 = arith.constant 0 : i32
    %c0_i32_0 = arith.constant 0 : i32
    %c0_i32_1 = arith.constant 0 : i32
    return %c0_i32, %c0_i32_0 : i32, i32
  }
  func.func @transform_10(%arg0: i32) -> (i32, i32) {
    %c0_i32 = arith.constant 0 : i32
    %c0_i32_0 = arith.constant 0 : i32
    %c0_i32_1 = arith.constant 0 : i32
    return %c0_i32, %c0_i32_0 : i32, i32
  }
  func.func @transform_11(%arg0: i32) -> (i32, i32) {
    %c0_i32 = arith.constant 0 : i32
    %c0_i32_0 = arith.constant 0 : i32
    %c0_i32_1 = arith.constant 0 : i32
    return %c0_i32, %c0_i32_0 : i32, i32
  }
  func.func @transform_12(%arg0: i32) -> (i32, i32) {
    %c0_i32 = arith.constant 0 : i32
    %c0_i32_0 = arith.constant 0 : i32
    %c0_i32_1 = arith.constant 0 : i32
    return %c0_i32, %c0_i32_0 : i32, i32
  }
  func.func @transform_13(%arg0: i32) -> (i32, i32) {
    %c0_i32 = arith.constant 0 : i32
    %c0_i32_0 = arith.constant 0 : i32
    %c0_i32_1 = arith.constant 0 : i32
    return %c0_i32, %c0_i32_0 : i32, i32
  }
  func.func @transform_14(%arg0: i32) -> (i32, i32) {
    %c0_i32 = arith.constant 0 : i32
    %c0_i32_0 = arith.constant 0 : i32
    %c0_i32_1 = arith.constant 0 : i32
    return %c0_i32, %c0_i32_0 : i32, i32
  }
  func.func @transform_15(%arg0: i32) -> (i32, i32) {
    %c0_i32 = arith.constant 0 : i32
    %c0_i32_0 = arith.constant 0 : i32
    %c0_i32_1 = arith.constant 0 : i32
    return %c0_i32, %c0_i32_0 : i32, i32
  }
  func.func @transform_16(%arg0: i32) -> (i32, i32) {
    %c0_i32 = arith.constant 0 : i32
    %c0_i32_0 = arith.constant 0 : i32
    %c0_i32_1 = arith.constant 0 : i32
    return %c0_i32, %c0_i32_0 : i32, i32
  }
  func.func @transform_17(%arg0: i32) -> (i32, i32) {
    %c0_i32 = arith.constant 0 : i32
    %c0_i32_0 = arith.constant 0 : i32
    %c0_i32_1 = arith.constant 0 : i32
    return %c0_i32, %c0_i32_0 : i32, i32
  }
  func.func @transform_18(%arg0: i32) -> (i32, i32) {
    %c0_i32 = arith.constant 0 : i32
    %c0_i32_0 = arith.constant 0 : i32
    %c0_i32_1 = arith.constant 0 : i32
    return %c0_i32, %c0_i32_0 : i32, i32
  }
  func.func @transform_19(%arg0: i32) -> (i32, i32) {
    %c0_i32 = arith.constant 0 : i32
    %c0_i32_0 = arith.constant 0 : i32
    %c0_i32_1 = arith.constant 0 : i32
    return %c0_i32, %c0_i32_0 : i32, i32
  }
  func.func @transform_20(%arg0: i32) -> (i32, i32) {
    %c0_i32 = arith.constant 0 : i32
    %c0_i32_0 = arith.constant 0 : i32
    %c0_i32_1 = arith.constant 0 : i32
    return %c0_i32, %c0_i32_0 : i32, i32
  }
  func.func @transform_21(%arg0: i32) -> (i32, i32) {
    %c0_i32 = arith.constant 0 : i32
    %c0_i32_0 = arith.constant 0 : i32
    %c0_i32_1 = arith.constant 0 : i32
    return %c0_i32, %c0_i32_0 : i32, i32
  }
  func.func @transform_22(%arg0: i32) -> (i32, i32) {
    %c0_i32 = arith.constant 0 : i32
    %c0_i32_0 = arith.constant 0 : i32
    %c0_i32_1 = arith.constant 0 : i32
    return %c0_i32, %c0_i32_0 : i32, i32
  }
  func.func @transform_23(%arg0: i32) -> (i32, i32) {
    %c0_i32 = arith.constant 0 : i32
    %c0_i32_0 = arith.constant 0 : i32
    %c0_i32_1 = arith.constant 0 : i32
    return %c0_i32, %c0_i32_0 : i32, i32
  }
  func.func @transform_24(%arg0: i32) -> (i32, i32) {
    %c0_i32 = arith.constant 0 : i32
    %c0_i32_0 = arith.constant 0 : i32
    %c0_i32_1 = arith.constant 0 : i32
    return %c0_i32, %c0_i32_0 : i32, i32
  }
  func.func @transform_25(%arg0: i32) -> (i32, i32) {
    %c0_i32 = arith.constant 0 : i32
    %c0_i32_0 = arith.constant 0 : i32
    %c0_i32_1 = arith.constant 0 : i32
    return %c0_i32, %c0_i32_0 : i32, i32
  }
  func.func @transform_26(%arg0: i32) -> (i32, i32, i32) {
    %c0_i32 = arith.constant 0 : i32
    %c0_i32_0 = arith.constant 0 : i32
    %c0_i32_1 = arith.constant 0 : i32
    return %arg0, %c0_i32, %c0_i32_0 : i32, i32, i32
  }
  func.func @transform_27(%arg0: i32) -> (i32, i32, i32) {
    %c0_i32 = arith.constant 0 : i32
    %c0_i32_0 = arith.constant 0 : i32
    %c0_i32_1 = arith.constant 0 : i32
    return %arg0, %c0_i32, %c0_i32_0 : i32, i32, i32
  }
}

</mosaic_0001>

<llo_original>
// kernel: hf_hr_module.1
$region0: #{hf_hr_module.1}
  #allocation0 [shape = 'u32[]', space=smem, size = 0x4, offset = 0x4, fixed_abs, tag = 'smem constant byte address 0x4 - core index']
  #allocation1 [shape = 'u32[144,128]{1,0:T(1,128)}', space=vmem, size = 0x12000, scoped, tag = 'internal scratch']
  %s0 = inlined_call_operand.vmem [shape: f32[2,16,256], index: 0, kind: input, shape index: {}]
  %s1 = inlined_call_operand.vmem [shape: f32[2,32,128], index: 1, kind: input, shape index: {}]
  %s2 = inlined_call_operand.vmem [shape: f32[256,128], index: 2, kind: input, shape index: {}]
  %s3 = inlined_call_operand.vmem [shape: f32[128,256], index: 3, kind: input, shape index: {}]
  %s4 = inlined_call_operand.vmem [shape: f32[8,48], index: 4, kind: input, shape index: {}]
  %s5 = inlined_call_operand.vmem [shape: f32[8,1], index: 5, kind: input, shape index: {}]
  %s6 = inlined_call_operand.vmem [shape: f32[48,8], index: 6, kind: input, shape index: {}]
  %s7 = inlined_call_operand.vmem [shape: f32[48,1], index: 7, kind: input, shape index: {}]
  %s8 = inlined_call_operand.vmem [shape: f32[144,1], index: 8, kind: input, shape index: {}]
  %s9 = inlined_call_operand.vmem [shape: f32[16,1], index: 9, kind: input, shape index: {}]
  %s10 = inlined_call_operand.vmem [shape: f32[16,16], index: 10, kind: input, shape index: {}]
  %s11 = inlined_call_operand.vmem [shape: f32[144,1], index: 11, kind: input, shape index: {}]
  %s12 = inlined_call_operand.vmem [shape: f32[16,1], index: 12, kind: input, shape index: {}]
  %s13 = inlined_call_operand.vmem [shape: f32[16,16], index: 13, kind: input, shape index: {}]
  %s14 = inlined_call_operand.vmem [shape: f32[256,256], index: 14, kind: input, shape index: {}]
  %s15 = inlined_call_operand.vmem [shape: f32[5,256], index: 15, kind: input, shape index: {}]
  %s16 = inlined_call_operand.vmem [shape: f32[288,1], index: 16, kind: input, shape index: {}]
  %s17 = inlined_call_operand.vmem [shape: f32[32,1], index: 17, kind: input, shape index: {}]
  %s18 = inlined_call_operand.vmem [shape: f32[32,32], index: 18, kind: input, shape index: {}]
  %s19 = inlined_call_operand.vmem [shape: f32[288,1], index: 19, kind: input, shape index: {}]
  %s20 = inlined_call_operand.vmem [shape: f32[32,1], index: 20, kind: input, shape index: {}]
  %s21 = inlined_call_operand.vmem [shape: f32[32,32], index: 21, kind: input, shape index: {}]
  %s22 = inlined_call_operand.vmem [shape: f32[128,128], index: 22, kind: input, shape index: {}]
  %s23 = inlined_call_operand.vmem [shape: f32[5,128], index: 23, kind: input, shape index: {}]
  %s24 = inlined_call_operand.vmem [shape: f32[16,32], index: 24, kind: input, shape index: {}]
  %s25 = inlined_call_operand.vmem [shape: f32[16,1], index: 25, kind: input, shape index: {}]
  %s26 = inlined_call_operand.vmem [shape: f32[2,16,256], index: 26, kind: output, shape index: {0}]
  %s27 = inlined_call_operand.hbm [shape: f32[2,32,128], index: 27, kind: output, shape index: {1}]
  %28 = xla_tuple %s26, %s27
  %s29 = sld [smem:[#allocation0]]
  $region145: #{hf_hr_module.1} parent=0
    _
  %s31 = ssub.s32 1, %s29
  %s32 = scalar_select 0, %s31, %s29
  $region1: #{hf_hr_module.1} parent=0
    #allocation2 [shape = 'u8[32768]{0}', space=vmem, size = 0x8000, scoped, tag = 'output window, operand 1']
    #allocation3 [shape = 's32[2]{0}', space=sflag, size = 0x8, scoped, tag = 'scoped memory for hf_hr_module.1']
    %33 = vsyncpa [#allocation3], 0
    %s34 = scalar_lea.sflag [#allocation3], 1
    %35 = vsyncpa %s34, 0
    loop: start=0, step=1, limit=4
    $region2: #{hf_hr_module.1} parent=1 // loop_pre_header
      _
    $region3: #{hf_hr_module.1} parent=1 // loop_header
      %s37 = sphi 0, %s41
      %p38 = scmp.ge.s32.totalorder %s37, 4
      %s47 = sphi 0, %s49
      %s50 = sphi 0, %s47
      %s51 = sphi 0, %s50
      %s67 = sphi 0, %s51
      %s73 = sphi 0, %s75
      %s76 = sphi 0, %s73
      %s77 = sphi 0, %s76
      %s93 = sphi 0, %s77
      %s97 = sphi 0, %s97
      %s99 = sphi 0, %s97
      %s100 = sphi 0, %s99
      %s114 = sphi 0, %s100
      %s118 = sphi 0, %s118
      %s120 = sphi 0, %s118
      %s121 = sphi 0, %s120
      %s135 = sphi 0, %s121
      %s139 = sphi 0, %s139
      %s141 = sphi 0, %s139
      %s142 = sphi 0, %s141
      %s156 = sphi 0, %s142
      %s160 = sphi 0, %s160
      %s162 = sphi 0, %s160
      %s163 = sphi 0, %s162
      %s177 = sphi 0, %s163
      %s181 = sphi 0, %s181
      %s183 = sphi 0, %s181
      %s184 = sphi 0, %s183
      %s198 = sphi 0, %s184
      %s202 = sphi 0, %s202
      %s204 = sphi 0, %s202
      %s205 = sphi 0, %s204
      %s219 = sphi 0, %s205
      %s223 = sphi 0, %s223
      %s225 = sphi 0, %s223
      %s226 = sphi 0, %s225
      %s240 = sphi 0, %s226
      %s244 = sphi 0, %s244
      %s246 = sphi 0, %s244
      %s247 = sphi 0, %s246
      %s261 = sphi 0, %s247
      %s265 = sphi 0, %s265
      %s267 = sphi 0, %s265
      %s268 = sphi 0, %s267
      %s282 = sphi 0, %s268
      %s286 = sphi 0, %s286
      %s288 = sphi 0, %s286
      %s289 = sphi 0, %s288
      %s303 = sphi 0, %s289
      %s307 = sphi 0, %s307
      %s309 = sphi 0, %s307
      %s310 = sphi 0, %s309
      %s324 = sphi 0, %s310
      %s328 = sphi 0, %s328
      %s330 = sphi 0, %s328
      %s331 = sphi 0, %s330
      %s345 = sphi 0, %s331
      %s349 = sphi 0, %s349
      %s351 = sphi 0, %s349
      %s352 = sphi 0, %s351
      %s366 = sphi 0, %s352
      %s370 = sphi 0, %s370
      %s372 = sphi 0, %s370
      %s373 = sphi 0, %s372
      %s387 = sphi 0, %s373
      %s391 = sphi 0, %s391
      %s393 = sphi 0, %s391
      %s394 = sphi 0, %s393
      %s408 = sphi 0, %s394
      %s412 = sphi 0, %s412
      %s414 = sphi 0, %s412
      %s415 = sphi 0, %s414
      %s429 = sphi 0, %s415
      %s433 = sphi 0, %s433
      %s435 = sphi 0, %s433
      %s436 = sphi 0, %s435
      %s450 = sphi 0, %s436
      %s454 = sphi 0, %s454
      %s456 = sphi 0, %s454
      %s457 = sphi 0, %s456
      %s471 = sphi 0, %s457
      %s475 = sphi 0, %s475
      %s477 = sphi 0, %s475
      %s478 = sphi 0, %s477
      %s492 = sphi 0, %s478
      %s496 = sphi 0, %s496
      %s498 = sphi 0, %s496
      %s499 = sphi 0, %s498
      %s513 = sphi 0, %s499
      %s517 = sphi 0, %s517
      %s519 = sphi 0, %s517
      %s520 = sphi 0, %s519
      %s534 = sphi 0, %s520
      %s538 = sphi 0, %s538
      %s540 = sphi 0, %s538
      %s541 = sphi 0, %s540
      %s555 = sphi 0, %s541
      %s559 = sphi 0, %s559
      %s561 = sphi 0, %s559
      %s562 = sphi 0, %s561
      %s576 = sphi 0, %s562
      %s580 = sphi 0, %s580
      %s582 = sphi 0, %s580
      %s583 = sphi 0, %s582
      %s597 = sphi 0, %s583
      %s603 = sphi 0, %s605
      %s606 = sphi 0, %s603
      %s607 = sphi 0, %s606
      %s623 = sphi 0, %s607
      %s629 = sphi 0, %s631
      %s632 = sphi 0, %s629
      %s633 = sphi 0, %s632
      %s649 = sphi 0, %s633
    $region4: #{hf_hr_module.1} parent=1 // loop_header_branch
      %40 = sbr.rel (%p38) target = $region8
    $region5: #{hf_hr_module.1} parent=1 // loop_body
      %s42 = ssub.s32 %s37, 1
      %s43 = ssub.s32 %s37, 2
      %s44 = sadd.s32 %s37, 1
      %s45 = ssub.s32 %s37, %s44
      %p46 = scmp.eq.s32.totalorder %s45, 0
      %s48 = sadd.s32 %s47, 1
      %s49 = scalar_select %p46, %s47, %s48
      %p52 = pneg %p46
      %p53 = scmp.eq.s32.totalorder %s37, 1
      %p54 = por %p52, %p53
      %p55 = scmp.ne.s32.totalorder %s47, %s50
      %p56 = scmp.eq.s32.totalorder %s37, 0
      %p57 = por %p55, %p56
      %p58 = scmp.ne.s32.totalorder %s47, %s50
      %p59 = scmp.eq.s32.totalorder %s42, 1
      %p60 = por %p58, %p59
      %p61 = scmp.ne.s32.totalorder %s50, %s51
      %p62 = scmp.eq.s32.totalorder %s42, 0
      %p63 = por %p61, %p62
      %p64 = scmp.ne.s32.totalorder %s50, %s51
      %p65 = scmp.eq.s32.totalorder %s43, 1
      %p66 = por %p64, %p65
      %p68 = scmp.ne.s32.totalorder %s51, %s67
      %p69 = scmp.eq.s32.totalorder %s43, 0
      %p70 = por %p68, %p69
      %s71 = ssub.s32 %s37, %s44
      %p72 = scmp.eq.s32.totalorder %s71, 0
      %s74 = sadd.s32 %s73, 1
      %s75 = scalar_select %p72, %s73, %s74
      %p78 = pneg %p72
      %p79 = scmp.eq.s32.totalorder %s37, 1
      %p80 = por %p78, %p79
      %p81 = scmp.ne.s32.totalorder %s73, %s76
      %p82 = scmp.eq.s32.totalorder %s37, 0
      %p83 = por %p81, %p82
      %p84 = scmp.ne.s32.totalorder %s73, %s76
      %p85 = scmp.eq.s32.totalorder %s42, 1
      %p86 = por %p84, %p85
      %p87 = scmp.ne.s32.totalorder %s76, %s77
      %p88 = scmp.eq.s32.totalorder %s42, 0
      %p89 = por %p87, %p88
      %p90 = scmp.ne.s32.totalorder %s76, %s77
      %p91 = scmp.eq.s32.totalorder %s43, 1
      %p92 = por %p90, %p91
      %p94 = scmp.ne.s32.totalorder %s77, %s93
      %p95 = scmp.eq.s32.totalorder %s43, 0
      %p96 = por %p94, %p95
      %s98 = sadd.s32 %s97, 1
      %p101 = scmp.eq.s32.totalorder %s37, 1
      %p102 = scmp.ne.s32.totalorder %s97, %s99
      %p103 = scmp.eq.s32.totalorder %s37, 0
      %p104 = por %p102, %p103
      %p105 = scmp.ne.s32.totalorder %s97, %s99
      %p106 = scmp.eq.s32.totalorder %s42, 1
      %p107 = por %p105, %p106
      %p108 = scmp.ne.s32.totalorder %s99, %s100
      %p109 = scmp.eq.s32.totalorder %s42, 0
      %p110 = por %p108, %p109
      %p111 = scmp.ne.s32.totalorder %s99, %s100
      %p112 = scmp.eq.s32.totalorder %s43, 1
      %p113 = por %p111, %p112
      %p115 = scmp.ne.s32.totalorder %s100, %s114
      %p116 = scmp.eq.s32.totalorder %s43, 0
      %p117 = por %p115, %p116
      %s119 = sadd.s32 %s118, 1
      %p122 = scmp.eq.s32.totalorder %s37, 1
      %p123 = scmp.ne.s32.totalorder %s118, %s120
      %p124 = scmp.eq.s32.totalorder %s37, 0
      %p125 = por %p123, %p124
      %p126 = scmp.ne.s32.totalorder %s118, %s120
      %p127 = scmp.eq.s32.totalorder %s42, 1
      %p128 = por %p126, %p127
      %p129 = scmp.ne.s32.totalorder %s120, %s121
      %p130 = scmp.eq.s32.totalorder %s42, 0
      %p131 = por %p129, %p130
      %p132 = scmp.ne.s32.totalorder %s120, %s121
      %p133 = scmp.eq.s32.totalorder %s43, 1
      %p134 = por %p132, %p133
      %p136 = scmp.ne.s32.totalorder %s121, %s135
      %p137 = scmp.eq.s32.totalorder %s43, 0
      %p138 = por %p136, %p137
      %s140 = sadd.s32 %s139, 1
      %p143 = scmp.eq.s32.totalorder %s37, 1
      %p144 = scmp.ne.s32.totalorder %s139, %s141
      %p145 = scmp.eq.s32.totalorder %s37, 0
      %p146 = por %p144, %p145
      %p147 = scmp.ne.s32.totalorder %s139, %s141
      %p148 = scmp.eq.s32.totalorder %s42, 1
      %p149 = por %p147, %p148
      %p150 = scmp.ne.s32.totalorder %s141, %s142
      %p151 = scmp.eq.s32.totalorder %s42, 0
      %p152 = por %p150, %p151
      %p153 = scmp.ne.s32.totalorder %s141, %s142
      %p154 = scmp.eq.s32.totalorder %s43, 1
      %p155 = por %p153, %p154
      %p157 = scmp.ne.s32.totalorder %s142, %s156
      %p158 = scmp.eq.s32.totalorder %s43, 0
      %p159 = por %p157, %p158
      %s161 = sadd.s32 %s160, 1
      %p164 = scmp.eq.s32.totalorder %s37, 1
      %p165 = scmp.ne.s32.totalorder %s160, %s162
      %p166 = scmp.eq.s32.totalorder %s37, 0
      %p167 = por %p165, %p166
      %p168 = scmp.ne.s32.totalorder %s160, %s162
      %p169 = scmp.eq.s32.totalorder %s42, 1
      %p170 = por %p168, %p169
      %p171 = scmp.ne.s32.totalorder %s162, %s163
      %p172 = scmp.eq.s32.totalorder %s42, 0
      %p173 = por %p171, %p172
      %p174 = scmp.ne.s32.totalorder %s162, %s163
      %p175 = scmp.eq.s32.totalorder %s43, 1
      %p176 = por %p174, %p175
      %p178 = scmp.ne.s32.totalorder %s163, %s177
      %p179 = scmp.eq.s32.totalorder %s43, 0
      %p180 = por %p178, %p179
      %s182 = sadd.s32 %s181, 1
      %p185 = scmp.eq.s32.totalorder %s37, 1
      %p186 = scmp.ne.s32.totalorder %s181, %s183
      %p187 = scmp.eq.s32.totalorder %s37, 0
      %p188 = por %p186, %p187
      %p189 = scmp.ne.s32.totalorder %s181, %s183
      %p190 = scmp.eq.s32.totalorder %s42, 1
      %p191 = por %p189, %p190
      %p192 = scmp.ne.s32.totalorder %s183, %s184
      %p193 = scmp.eq.s32.totalorder %s42, 0
      %p194 = por %p192, %p193
      %p195 = scmp.ne.s32.totalorder %s183, %s184
      %p196 = scmp.eq.s32.totalorder %s43, 1
      %p197 = por %p195, %p196
      %p199 = scmp.ne.s32.totalorder %s184, %s198
      %p200 = scmp.eq.s32.totalorder %s43, 0
      %p201 = por %p199, %p200
      %s203 = sadd.s32 %s202, 1
      %p206 = scmp.eq.s32.totalorder %s37, 1
      %p207 = scmp.ne.s32.totalorder %s202, %s204
      %p208 = scmp.eq.s32.totalorder %s37, 0
      %p209 = por %p207, %p208
      %p210 = scmp.ne.s32.totalorder %s202, %s204
      %p211 = scmp.eq.s32.totalorder %s42, 1
      %p212 = por %p210, %p211
      %p213 = scmp.ne.s32.totalorder %s204, %s205
      %p214 = scmp.eq.s32.totalorder %s42, 0
      %p215 = por %p213, %p214
      %p216 = scmp.ne.s32.totalorder %s204, %s205
      %p217 = scmp.eq.s32.totalorder %s43, 1
      %p218 = por %p216, %p217
      %p220 = scmp.ne.s32.totalorder %s205, %s219
      %p221 = scmp.eq.s32.totalorder %s43, 0
      %p222 = por %p220, %p221
      %s224 = sadd.s32 %s223, 1
      %p227 = scmp.eq.s32.totalorder %s37, 1
      %p228 = scmp.ne.s32.totalorder %s223, %s225
      %p229 = scmp.eq.s32.totalorder %s37, 0
      %p230 = por %p228, %p229
      %p231 = scmp.ne.s32.totalorder %s223, %s225
      %p232 = scmp.eq.s32.totalorder %s42, 1
      %p233 = por %p231, %p232
      %p234 = scmp.ne.s32.totalorder %s225, %s226
      %p235 = scmp.eq.s32.totalorder %s42, 0
      %p236 = por %p234, %p235
      %p237 = scmp.ne.s32.totalorder %s225, %s226
      %p238 = scmp.eq.s32.totalorder %s43, 1
      %p239 = por %p237, %p238
      %p241 = scmp.ne.s32.totalorder %s226, %s240
      %p242 = scmp.eq.s32.totalorder %s43, 0
      %p243 = por %p241, %p242
      %s245 = sadd.s32 %s244, 1
      %p248 = scmp.eq.s32.totalorder %s37, 1
      %p249 = scmp.ne.s32.totalorder %s244, %s246
      %p250 = scmp.eq.s32.totalorder %s37, 0
      %p251 = por %p249, %p250
      %p252 = scmp.ne.s32.totalorder %s244, %s246
      %p253 = scmp.eq.s32.totalorder %s42, 1
      %p254 = por %p252, %p253
      %p255 = scmp.ne.s32.totalorder %s246, %s247
      %p256 = scmp.eq.s32.totalorder %s42, 0
      %p257 = por %p255, %p256
      %p258 = scmp.ne.s32.totalorder %s246, %s247
      %p259 = scmp.eq.s32.totalorder %s43, 1
      %p260 = por %p258, %p259
      %p262 = scmp.ne.s32.totalorder %s247, %s261
      %p263 = scmp.eq.s32.totalorder %s43, 0
      %p264 = por %p262, %p263
      %s266 = sadd.s32 %s265, 1
      %p269 = scmp.eq.s32.totalorder %s37, 1
      %p270 = scmp.ne.s32.totalorder %s265, %s267
      %p271 = scmp.eq.s32.totalorder %s37, 0
      %p272 = por %p270, %p271
      %p273 = scmp.ne.s32.totalorder %s265, %s267
      %p274 = scmp.eq.s32.totalorder %s42, 1
      %p275 = por %p273, %p274
      %p276 = scmp.ne.s32.totalorder %s267, %s268
      %p277 = scmp.eq.s32.totalorder %s42, 0
      %p278 = por %p276, %p277
      %p279 = scmp.ne.s32.totalorder %s267, %s268
      %p280 = scmp.eq.s32.totalorder %s43, 1
      %p281 = por %p279, %p280
      %p283 = scmp.ne.s32.totalorder %s268, %s282
      %p284 = scmp.eq.s32.totalorder %s43, 0
      %p285 = por %p283, %p284
      %s287 = sadd.s32 %s286, 1
      %p290 = scmp.eq.s32.totalorder %s37, 1
      %p291 = scmp.ne.s32.totalorder %s286, %s288
      %p292 = scmp.eq.s32.totalorder %s37, 0
      %p293 = por %p291, %p292
      %p294 = scmp.ne.s32.totalorder %s286, %s288
      %p295 = scmp.eq.s32.totalorder %s42, 1
      %p296 = por %p294, %p295
      %p297 = scmp.ne.s32.totalorder %s288, %s289
      %p298 = scmp.eq.s32.totalorder %s42, 0
      %p299 = por %p297, %p298
      %p300 = scmp.ne.s32.totalorder %s288, %s289
      %p301 = scmp.eq.s32.totalorder %s43, 1
      %p302 = por %p300, %p301
      %p304 = scmp.ne.s32.totalorder %s289, %s303
      %p305 = scmp.eq.s32.totalorder %s43, 0
      %p306 = por %p304, %p305
      %s308 = sadd.s32 %s307, 1
      %p311 = scmp.eq.s32.totalorder %s37, 1
      %p312 = scmp.ne.s32.totalorder %s307, %s309
      %p313 = scmp.eq.s32.totalorder %s37, 0
      %p314 = por %p312, %p313
      %p315 = scmp.ne.s32.totalorder %s307, %s309
      %p316 = scmp.eq.s32.totalorder %s42, 1
      %p317 = por %p315, %p316
      %p318 = scmp.ne.s32.totalorder %s309, %s310
      %p319 = scmp.eq.s32.totalorder %s42, 0
      %p320 = por %p318, %p319
      %p321 = scmp.ne.s32.totalorder %s309, %s310
      %p322 = scmp.eq.s32.totalorder %s43, 1
      %p323 = por %p321, %p322
      %p325 = scmp.ne.s32.totalorder %s310, %s324
      %p326 = scmp.eq.s32.totalorder %s43, 0
      %p327 = por %p325, %p326
      %s329 = sadd.s32 %s328, 1
      %p332 = scmp.eq.s32.totalorder %s37, 1
      %p333 = scmp.ne.s32.totalorder %s328, %s330
      %p334 = scmp.eq.s32.totalorder %s37, 0
      %p335 = por %p333, %p334
      %p336 = scmp.ne.s32.totalorder %s328, %s330
      %p337 = scmp.eq.s32.totalorder %s42, 1
      %p338 = por %p336, %p337
      %p339 = scmp.ne.s32.totalorder %s330, %s331
      %p340 = scmp.eq.s32.totalorder %s42, 0
      %p341 = por %p339, %p340
      %p342 = scmp.ne.s32.totalorder %s330, %s331
      %p343 = scmp.eq.s32.totalorder %s43, 1
      %p344 = por %p342, %p343
      %p346 = scmp.ne.s32.totalorder %s331, %s345
      %p347 = scmp.eq.s32.totalorder %s43, 0
      %p348 = por %p346, %p347
      %s350 = sadd.s32 %s349, 1
      %p353 = scmp.eq.s32.totalorder %s37, 1
      %p354 = scmp.ne.s32.totalorder %s349, %s351
      %p355 = scmp.eq.s32.totalorder %s37, 0
      %p356 = por %p354, %p355
      %p357 = scmp.ne.s32.totalorder %s349, %s351
      %p358 = scmp.eq.s32.totalorder %s42, 1
      %p359 = por %p357, %p358
      %p360 = scmp.ne.s32.totalorder %s351, %s352
      %p361 = scmp.eq.s32.totalorder %s42, 0
      %p362 = por %p360, %p361
      %p363 = scmp.ne.s32.totalorder %s351, %s352
      %p364 = scmp.eq.s32.totalorder %s43, 1
      %p365 = por %p363, %p364
      %p367 = scmp.ne.s32.totalorder %s352, %s366
      %p368 = scmp.eq.s32.totalorder %s43, 0
      %p369 = por %p367, %p368
      %s371 = sadd.s32 %s370, 1
      %p374 = scmp.eq.s32.totalorder %s37, 1
      %p375 = scmp.ne.s32.totalorder %s370, %s372
      %p376 = scmp.eq.s32.totalorder %s37, 0
      %p377 = por %p375, %p376
      %p378 = scmp.ne.s32.totalorder %s370, %s372
      %p379 = scmp.eq.s32.totalorder %s42, 1
      %p380 = por %p378, %p379
      %p381 = scmp.ne.s32.totalorder %s372, %s373
      %p382 = scmp.eq.s32.totalorder %s42, 0
      %p383 = por %p381, %p382
      %p384 = scmp.ne.s32.totalorder %s372, %s373
      %p385 = scmp.eq.s32.totalorder %s43, 1
      %p386 = por %p384, %p385
      %p388 = scmp.ne.s32.totalorder %s373, %s387
      %p389 = scmp.eq.s32.totalorder %s43, 0
      %p390 = por %p388, %p389
      %s392 = sadd.s32 %s391, 1
      %p395 = scmp.eq.s32.totalorder %s37, 1
      %p396 = scmp.ne.s32.totalorder %s391, %s393
      %p397 = scmp.eq.s32.totalorder %s37, 0
      %p398 = por %p396, %p397
      %p399 = scmp.ne.s32.totalorder %s391, %s393
      %p400 = scmp.eq.s32.totalorder %s42, 1
      %p401 = por %p399, %p400
      %p402 = scmp.ne.s32.totalorder %s393, %s394
      %p403 = scmp.eq.s32.totalorder %s42, 0
      %p404 = por %p402, %p403
      %p405 = scmp.ne.s32.totalorder %s393, %s394
      %p406 = scmp.eq.s32.totalorder %s43, 1
      %p407 = por %p405, %p406
      %p409 = scmp.ne.s32.totalorder %s394, %s408
      %p410 = scmp.eq.s32.totalorder %s43, 0
      %p411 = por %p409, %p410
      %s413 = sadd.s32 %s412, 1
      %p416 = scmp.eq.s32.totalorder %s37, 1
      %p417 = scmp.ne.s32.totalorder %s412, %s414
      %p418 = scmp.eq.s32.totalorder %s37, 0
      %p419 = por %p417, %p418
      %p420 = scmp.ne.s32.totalorder %s412, %s414
      %p421 = scmp.eq.s32.totalorder %s42, 1
      %p422 = por %p420, %p421
      %p423 = scmp.ne.s32.totalorder %s414, %s415
      %p424 = scmp.eq.s32.totalorder %s42, 0
      %p425 = por %p423, %p424
      %p426 = scmp.ne.s32.totalorder %s414, %s415
      %p427 = scmp.eq.s32.totalorder %s43, 1
      %p428 = por %p426, %p427
      %p430 = scmp.ne.s32.totalorder %s415, %s429
      %p431 = scmp.eq.s32.totalorder %s43, 0
      %p432 = por %p430, %p431
      %s434 = sadd.s32 %s433, 1
      %p437 = scmp.eq.s32.totalorder %s37, 1
      %p438 = scmp.ne.s32.totalorder %s433, %s435
      %p439 = scmp.eq.s32.totalorder %s37, 0
      %p440 = por %p438, %p439
      %p441 = scmp.ne.s32.totalorder %s433, %s435
      %p442 = scmp.eq.s32.totalorder %s42, 1
      %p443 = por %p441, %p442
      %p444 = scmp.ne.s32.totalorder %s435, %s436
      %p445 = scmp.eq.s32.totalorder %s42, 0
      %p446 = por %p444, %p445
      %p447 = scmp.ne.s32.totalorder %s435, %s436
      %p448 = scmp.eq.s32.totalorder %s43, 1
      %p449 = por %p447, %p448
      %p451 = scmp.ne.s32.totalorder %s436, %s450
      %p452 = scmp.eq.s32.totalorder %s43, 0
      %p453 = por %p451, %p452
      %s455 = sadd.s32 %s454, 1
      %p458 = scmp.eq.s32.totalorder %s37, 1
      %p459 = scmp.ne.s32.totalorder %s454, %s456
      %p460 = scmp.eq.s32.totalorder %s37, 0
      %p461 = por %p459, %p460
      %p462 = scmp.ne.s32.totalorder %s454, %s456
      %p463 = scmp.eq.s32.totalorder %s42, 1
      %p464 = por %p462, %p463
      %p465 = scmp.ne.s32.totalorder %s456, %s457
      %p466 = scmp.eq.s32.totalorder %s42, 0
      %p467 = por %p465, %p466
      %p468 = scmp.ne.s32.totalorder %s456, %s457
      %p469 = scmp.eq.s32.totalorder %s43, 1
      %p470 = por %p468, %p469
      %p472 = scmp.ne.s32.totalorder %s457, %s471
      %p473 = scmp.eq.s32.totalorder %s43, 0
      %p474 = por %p472, %p473
      %s476 = sadd.s32 %s475, 1
      %p479 = scmp.eq.s32.totalorder %s37, 1
      %p480 = scmp.ne.s32.totalorder %s475, %s477
      %p481 = scmp.eq.s32.totalorder %s37, 0
      %p482 = por %p480, %p481
      %p483 = scmp.ne.s32.totalorder %s475, %s477
      %p484 = scmp.eq.s32.totalorder %s42, 1
      %p485 = por %p483, %p484
      %p486 = scmp.ne.s32.totalorder %s477, %s478
      %p487 = scmp.eq.s32.totalorder %s42, 0
      %p488 = por %p486, %p487
      %p489 = scmp.ne.s32.totalorder %s477, %s478
      %p490 = scmp.eq.s32.totalorder %s43, 1
      %p491 = por %p489, %p490
      %p493 = scmp.ne.s32.totalorder %s478, %s492
      %p494 = scmp.eq.s32.totalorder %s43, 0
      %p495 = por %p493, %p494
      %s497 = sadd.s32 %s496, 1
      %p500 = scmp.eq.s32.totalorder %s37, 1
      %p501 = scmp.ne.s32.totalorder %s496, %s498
      %p502 = scmp.eq.s32.totalorder %s37, 0
      %p503 = por %p501, %p502
      %p504 = scmp.ne.s32.totalorder %s496, %s498
      %p505 = scmp.eq.s32.totalorder %s42, 1
      %p506 = por %p504, %p505
      %p507 = scmp.ne.s32.totalorder %s498, %s499
      %p508 = scmp.eq.s32.totalorder %s42, 0
      %p509 = por %p507, %p508
      %p510 = scmp.ne.s32.totalorder %s498, %s499
      %p511 = scmp.eq.s32.totalorder %s43, 1
      %p512 = por %p510, %p511
      %p514 = scmp.ne.s32.totalorder %s499, %s513
      %p515 = scmp.eq.s32.totalorder %s43, 0
      %p516 = por %p514, %p515
      %s518 = sadd.s32 %s517, 1
      %p521 = scmp.eq.s32.totalorder %s37, 1
      %p522 = scmp.ne.s32.totalorder %s517, %s519
      %p523 = scmp.eq.s32.totalorder %s37, 0
      %p524 = por %p522, %p523
      %p525 = scmp.ne.s32.totalorder %s517, %s519
      %p526 = scmp.eq.s32.totalorder %s42, 1
      %p527 = por %p525, %p526
      %p528 = scmp.ne.s32.totalorder %s519, %s520
      %p529 = scmp.eq.s32.totalorder %s42, 0
      %p530 = por %p528, %p529
      %p531 = scmp.ne.s32.totalorder %s519, %s520
      %p532 = scmp.eq.s32.totalorder %s43, 1
      %p533 = por %p531, %p532
      %p535 = scmp.ne.s32.totalorder %s520, %s534
      %p536 = scmp.eq.s32.totalorder %s43, 0
      %p537 = por %p535, %p536
      %s539 = sadd.s32 %s538, 1
      %p542 = scmp.eq.s32.totalorder %s37, 1
      %p543 = scmp.ne.s32.totalorder %s538, %s540
      %p544 = scmp.eq.s32.totalorder %s37, 0
      %p545 = por %p543, %p544
      %p546 = scmp.ne.s32.totalorder %s538, %s540
      %p547 = scmp.eq.s32.totalorder %s42, 1
      %p548 = por %p546, %p547
      %p549 = scmp.ne.s32.totalorder %s540, %s541
      %p550 = scmp.eq.s32.totalorder %s42, 0
      %p551 = por %p549, %p550
      %p552 = scmp.ne.s32.totalorder %s540, %s541
      %p553 = scmp.eq.s32.totalorder %s43, 1
      %p554 = por %p552, %p553
      %p556 = scmp.ne.s32.totalorder %s541, %s555
      %p557 = scmp.eq.s32.totalorder %s43, 0
      %p558 = por %p556, %p557
      %s560 = sadd.s32 %s559, 1
      %p563 = scmp.eq.s32.totalorder %s37, 1
      %p564 = scmp.ne.s32.totalorder %s559, %s561
      %p565 = scmp.eq.s32.totalorder %s37, 0
      %p566 = por %p564, %p565
      %p567 = scmp.ne.s32.totalorder %s559, %s561
      %p568 = scmp.eq.s32.totalorder %s42, 1
      %p569 = por %p567, %p568
      %p570 = scmp.ne.s32.totalorder %s561, %s562
      %p571 = scmp.eq.s32.totalorder %s42, 0
      %p572 = por %p570, %p571
      %p573 = scmp.ne.s32.totalorder %s561, %s562
      %p574 = scmp.eq.s32.totalorder %s43, 1
      %p575 = por %p573, %p574
      %p577 = scmp.ne.s32.totalorder %s562, %s576
      %p578 = scmp.eq.s32.totalorder %s43, 0
      %p579 = por %p577, %p578
      %s581 = sadd.s32 %s580, 1
      %p584 = scmp.eq.s32.totalorder %s37, 1
      %p585 = scmp.ne.s32.totalorder %s580, %s582
      %p586 = scmp.eq.s32.totalorder %s37, 0
      %p587 = por %p585, %p586
      %p588 = scmp.ne.s32.totalorder %s580, %s582
      %p589 = scmp.eq.s32.totalorder %s42, 1
      %p590 = por %p588, %p589
      %p591 = scmp.ne.s32.totalorder %s582, %s583
      %p592 = scmp.eq.s32.totalorder %s42, 0
      %p593 = por %p591, %p592
      %p594 = scmp.ne.s32.totalorder %s582, %s583
      %p595 = scmp.eq.s32.totalorder %s43, 1
      %p596 = por %p594, %p595
      %p598 = scmp.ne.s32.totalorder %s583, %s597
      %p599 = scmp.eq.s32.totalorder %s43, 0
      %p600 = por %p598, %p599
      %s601 = ssub.s32 %s37, %s44
      %p602 = scmp.eq.s32.totalorder %s601, 0
      %s604 = sadd.s32 %s603, 1
      %s605 = scalar_select %p602, %s603, %s604
      %p608 = pneg %p602
      %p609 = scmp.eq.s32.totalorder %s37, 1
      %p610 = por %p608, %p609
      %p611 = scmp.ne.s32.totalorder %s603, %s606
      %p612 = scmp.eq.s32.totalorder %s37, 0
      %p613 = por %p611, %p612
      %p614 = scmp.ne.s32.totalorder %s603, %s606
      %p615 = scmp.eq.s32.totalorder %s42, 1
      %p616 = por %p614, %p615
      %p617 = scmp.ne.s32.totalorder %s606, %s607
      %p618 = scmp.eq.s32.totalorder %s42, 0
      %p619 = por %p617, %p618
      %p620 = scmp.ne.s32.totalorder %s606, %s607
      %p621 = scmp.eq.s32.totalorder %s43, 1
      %p622 = por %p620, %p621
      %p624 = scmp.ne.s32.totalorder %s607, %s623
      %p625 = scmp.eq.s32.totalorder %s43, 0
      %p626 = por %p624, %p625
      %s627 = ssub.s32 %s37, %s44
      %p628 = scmp.eq.s32.totalorder %s627, 0
      %s630 = sadd.s32 %s629, 1
      %s631 = scalar_select %p628, %s629, %s630
      %p634 = pneg %p628
      %p635 = scmp.eq.s32.totalorder %s37, 1
      %p636 = por %p634, %p635
      %p637 = scmp.ne.s32.totalorder %s629, %s632
      %p638 = scmp.eq.s32.totalorder %s37, 0
      %p639 = por %p637, %p638
      %p640 = scmp.ne.s32.totalorder %s629, %s632
      %p641 = scmp.eq.s32.totalorder %s42, 1
      %p642 = por %p640, %p641
      %p643 = scmp.ne.s32.totalorder %s632, %s633
      %p644 = scmp.eq.s32.totalorder %s42, 0
      %p645 = por %p643, %p644
      %p646 = scmp.ne.s32.totalorder %s632, %s633
      %p647 = scmp.eq.s32.totalorder %s43, 1
      %p648 = por %p646, %p647
      %p650 = scmp.ne.s32.totalorder %s633, %s649
      %p651 = scmp.eq.s32.totalorder %s43, 0
      %p652 = por %p650, %p651
      %p653 = scmp.le.s32.totalorder 1, %s37
      %p654 = scmp.lt.s32.totalorder %s37, 3
      %p655 = pnand %p653, %p654
      %p656 = pneg %p655
      // Predicated region
      $region9: #{hf_hr_module.1} parent=5 // pred_check
        _
      $region10: #{hf_hr_module.1} parent=5 // pred_check_branch
        %658 = sbr.rel (%p655) target = $region12
      $region11: #{hf_hr_module.1} parent=5 // pred_region
        %s659 = ssub.s32 %s37, 1
        // Predicated region
        $region13: #{hf_hr_module.1} parent=11 // pred_check
          %p660 = pneg %p110
        $region14: #{hf_hr_module.1} parent=11 // pred_check_branch
          %662 = sbr.rel (%p660) target = $region16
        $region15: #{hf_hr_module.1} parent=11 // pred_region
          _
        $region16: #{hf_hr_module.1} parent=11 // pred_fallthru
          _
        // Predicated region
        $region17: #{hf_hr_module.1} parent=11 // pred_check
          %p663 = pneg %p131
        $region18: #{hf_hr_module.1} parent=11 // pred_check_branch
          %665 = sbr.rel (%p663) target = $region20
        $region19: #{hf_hr_module.1} parent=11 // pred_region
          _
        $region20: #{hf_hr_module.1} parent=11 // pred_fallthru
          _
        // Predicated region
        $region21: #{hf_hr_module.1} parent=11 // pred_check
          %p666 = pneg %p152
        $region22: #{hf_hr_module.1} parent=11 // pred_check_branch
          %668 = sbr.rel (%p666) target = $region24
        $region23: #{hf_hr_module.1} parent=11 // pred_region
          _
        $region24: #{hf_hr_module.1} parent=11 // pred_fallthru
          _
        // Predicated region
        $region25: #{hf_hr_module.1} parent=11 // pred_check
          %p669 = pneg %p173
        $region26: #{hf_hr_module.1} parent=11 // pred_check_branch
          %671 = sbr.rel (%p669) target = $region28
        $region27: #{hf_hr_module.1} parent=11 // pred_region
          _
        $region28: #{hf_hr_module.1} parent=11 // pred_fallthru
          _
        // Predicated region
        $region29: #{hf_hr_module.1} parent=11 // pred_check
          %p672 = pneg %p194
        $region30: #{hf_hr_module.1} parent=11 // pred_check_branch
          %674 = sbr.rel (%p672) target = $region32
        $region31: #{hf_hr_module.1} parent=11 // pred_region
          _
        $region32: #{hf_hr_module.1} parent=11 // pred_fallthru
          _
        // Predicated region
        $region33: #{hf_hr_module.1} parent=11 // pred_check
          %p675 = pneg %p215
        $region34: #{hf_hr_module.1} parent=11 // pred_check_branch
          %677 = sbr.rel (%p675) target = $region36
        $region35: #{hf_hr_module.1} parent=11 // pred_region
          _
        $region36: #{hf_hr_module.1} parent=11 // pred_fallthru
          _
        // Predicated region
        $region37: #{hf_hr_module.1} parent=11 // pred_check
          %p678 = pneg %p236
        $region38: #{hf_hr_module.1} parent=11 // pred_check_branch
          %680 = sbr.rel (%p678) target = $region40
        $region39: #{hf_hr_module.1} parent=11 // pred_region
          _
        $region40: #{hf_hr_module.1} parent=11 // pred_fallthru
          _
        // Predicated region
        $region41: #{hf_hr_module.1} parent=11 // pred_check
          %p681 = pneg %p257
        $region42: #{hf_hr_module.1} parent=11 // pred_check_branch
          %683 = sbr.rel (%p681) target = $region44
        $region43: #{hf_hr_module.1} parent=11 // pred_region
          _
        $region44: #{hf_hr_module.1} parent=11 // pred_fallthru
          _
        // Predicated region
        $region45: #{hf_hr_module.1} parent=11 // pred_check
          %p684 = pneg %p278
        $region46: #{hf_hr_module.1} parent=11 // pred_check_branch
          %686 = sbr.rel (%p684) target = $region48
        $region47: #{hf_hr_module.1} parent=11 // pred_region
          _
        $region48: #{hf_hr_module.1} parent=11 // pred_fallthru
          _
        // Predicated region
        $region49: #{hf_hr_module.1} parent=11 // pred_check
          %p687 = pneg %p299
        $region50: #{hf_hr_module.1} parent=11 // pred_check_branch
          %689 = sbr.rel (%p687) target = $region52
        $region51: #{hf_hr_module.1} parent=11 // pred_region
          _
        $region52: #{hf_hr_module.1} parent=11 // pred_fallthru
          _
        // Predicated region
        $region53: #{hf_hr_module.1} parent=11 // pred_check
          %p690 = pneg %p320
        $region54: #{hf_hr_module.1} parent=11 // pred_check_branch
          %692 = sbr.rel (%p690) target = $region56
        $region55: #{hf_hr_module.1} parent=11 // pred_region
          _
        $region56: #{hf_hr_module.1} parent=11 // pred_fallthru
          _
        // Predicated region
        $region57: #{hf_hr_module.1} parent=11 // pred_check
          %p693 = pneg %p341
        $region58: #{hf_hr_module.1} parent=11 // pred_check_branch
          %695 = sbr.rel (%p693) target = $region60
        $region59: #{hf_hr_module.1} parent=11 // pred_region
          _
        $region60: #{hf_hr_module.1} parent=11 // pred_fallthru
          _
        // Predicated region
        $region61: #{hf_hr_module.1} parent=11 // pred_check
          %p696 = pneg %p362
        $region62: #{hf_hr_module.1} parent=11 // pred_check_branch
          %698 = sbr.rel (%p696) target = $region64
        $region63: #{hf_hr_module.1} parent=11 // pred_region
          _
        $region64: #{hf_hr_module.1} parent=11 // pred_fallthru
          _
        // Predicated region
        $region65: #{hf_hr_module.1} parent=11 // pred_check
          %p699 = pneg %p383
        $region66: #{hf_hr_module.1} parent=11 // pred_check_branch
          %701 = sbr.rel (%p699) target = $region68
        $region67: #{hf_hr_module.1} parent=11 // pred_region
          _
        $region68: #{hf_hr_module.1} parent=11 // pred_fallthru
          _
        // Predicated region
        $region69: #{hf_hr_module.1} parent=11 // pred_check
          %p702 = pneg %p404
        $region70: #{hf_hr_module.1} parent=11 // pred_check_branch
          %704 = sbr.rel (%p702) target = $region72
        $region71: #{hf_hr_module.1} parent=11 // pred_region
          _
        $region72: #{hf_hr_module.1} parent=11 // pred_fallthru
          _
        // Predicated region
        $region73: #{hf_hr_module.1} parent=11 // pred_check
          %p705 = pneg %p425
        $region74: #{hf_hr_module.1} parent=11 // pred_check_branch
          %707 = sbr.rel (%p705) target = $region76
        $region75: #{hf_hr_module.1} parent=11 // pred_region
          _
        $region76: #{hf_hr_module.1} parent=11 // pred_fallthru
          _
        // Predicated region
        $region77: #{hf_hr_module.1} parent=11 // pred_check
          %p708 = pneg %p446
        $region78: #{hf_hr_module.1} parent=11 // pred_check_branch
          %710 = sbr.rel (%p708) target = $region80
        $region79: #{hf_hr_module.1} parent=11 // pred_region
          _
        $region80: #{hf_hr_module.1} parent=11 // pred_fallthru
          _
        // Predicated region
        $region81: #{hf_hr_module.1} parent=11 // pred_check
          %p711 = pneg %p467
        $region82: #{hf_hr_module.1} parent=11 // pred_check_branch
          %713 = sbr.rel (%p711) target = $region84
        $region83: #{hf_hr_module.1} parent=11 // pred_region
          _
        $region84: #{hf_hr_module.1} parent=11 // pred_fallthru
          _
        // Predicated region
        $region85: #{hf_hr_module.1} parent=11 // pred_check
          %p714 = pneg %p488
        $region86: #{hf_hr_module.1} parent=11 // pred_check_branch
          %716 = sbr.rel (%p714) target = $region88
        $region87: #{hf_hr_module.1} parent=11 // pred_region
          _
        $region88: #{hf_hr_module.1} parent=11 // pred_fallthru
          _
        // Predicated region
        $region89: #{hf_hr_module.1} parent=11 // pred_check
          %p717 = pneg %p509
        $region90: #{hf_hr_module.1} parent=11 // pred_check_branch
          %719 = sbr.rel (%p717) target = $region92
        $region91: #{hf_hr_module.1} parent=11 // pred_region
          _
        $region92: #{hf_hr_module.1} parent=11 // pred_fallthru
          _
        // Predicated region
        $region93: #{hf_hr_module.1} parent=11 // pred_check
          %p720 = pneg %p530
        $region94: #{hf_hr_module.1} parent=11 // pred_check_branch
          %722 = sbr.rel (%p720) target = $region96
        $region95: #{hf_hr_module.1} parent=11 // pred_region
          _
        $region96: #{hf_hr_module.1} parent=11 // pred_fallthru
          _
        // Predicated region
        $region97: #{hf_hr_module.1} parent=11 // pred_check
          %p723 = pneg %p551
        $region98: #{hf_hr_module.1} parent=11 // pred_check_branch
          %725 = sbr.rel (%p723) target = $region100
        $region99: #{hf_hr_module.1} parent=11 // pred_region
          _
        $region100: #{hf_hr_module.1} parent=11 // pred_fallthru
          _
        // Predicated region
        $region101: #{hf_hr_module.1} parent=11 // pred_check
          %p726 = pneg %p572
        $region102: #{hf_hr_module.1} parent=11 // pred_check_branch
          %728 = sbr.rel (%p726) target = $region104
        $region103: #{hf_hr_module.1} parent=11 // pred_region
          _
        $region104: #{hf_hr_module.1} parent=11 // pred_fallthru
          _
        // Predicated region
        $region105: #{hf_hr_module.1} parent=11 // pred_check
          %p729 = pneg %p593
        $region106: #{hf_hr_module.1} parent=11 // pred_check_branch
          %731 = sbr.rel (%p729) target = $region108
        $region107: #{hf_hr_module.1} parent=11 // pred_region
          _
        $region108: #{hf_hr_module.1} parent=11 // pred_fallthru
          _
      $region12: #{hf_hr_module.1} parent=5 // pred_fallthru
        _
      %p732 = scmp.lt.s32.totalorder %s37, 2
      // Predicated region
      $region109: #{hf_hr_module.1} parent=5 // pred_check
        %p733 = pneg %p732
      $region110: #{hf_hr_module.1} parent=5 // pred_check_branch
        %735 = sbr.rel (%p733) target = $region112
      $region111: #{hf_hr_module.1} parent=5 // pred_region
        // Predicated region
        $region113: #{hf_hr_module.1} parent=111 // pred_check
          %p736 = pneg %p57
        $region114: #{hf_hr_module.1} parent=111 // pred_check_branch
          %738 = sbr.rel (%p736) target = $region116
        $region115: #{hf_hr_module.1} parent=111 // pred_region
          %p739 = scmp.lt.s32.totalorder %s37, 1
          %s740 = scalar_select %p739, %s37, 1
          %s741 = smul.addr %s740, 4
          %s742 = smul.addr %s741, 8
          %s743 = scalar_lea.vmem %s0, %s742
        $region116: #{hf_hr_module.1} parent=111 // pred_fallthru
          _
        // Predicated region
        $region117: #{hf_hr_module.1} parent=111 // pred_check
          %p744 = pneg %p83
        $region118: #{hf_hr_module.1} parent=111 // pred_check_branch
          %746 = sbr.rel (%p744) target = $region120
        $region119: #{hf_hr_module.1} parent=111 // pred_region
          %p747 = scmp.lt.s32.totalorder %s37, 1
          %s748 = scalar_select %p747, %s37, 1
          %s749 = smul.addr %s748, 4
          %s750 = smul.addr %s749, 8
          %s751 = scalar_lea.vmem %s1, %s750
        $region120: #{hf_hr_module.1} parent=111 // pred_fallthru
          _
      $region112: #{hf_hr_module.1} parent=5 // pred_fallthru
        _
      %p752 = scmp.le.s32.totalorder 1, %s37
      %p753 = scmp.lt.s32.totalorder %s37, 3
      %p754 = pnand %p752, %p753
      %p755 = pneg %p754
      // Predicated region
      $region121: #{hf_hr_module.1} parent=5 // pred_check
        _
      $region122: #{hf_hr_module.1} parent=5 // pred_check_branch
        %757 = sbr.rel (%p754) target = $region124
      $region123: #{hf_hr_module.1} parent=5 // pred_region
        %s758 = ssub.s32 %s37, 1
        %p759 = scmp.lt.s32.totalorder %s42, 1
        %s760 = scalar_select %p759, %s42, 1
        %s761 = smul.addr %s760, 4
        %s762 = smul.addr %s761, 8
        %s763 = scalar_lea.vmem %s0, %s762
        %p764 = pneg %p63
        %p765 = pneg %p60
        %p766 = scmp.lt.s32.totalorder %s42, 1
        %s767 = scalar_select %p766, %s42, 1
        %s768 = smul.addr %s767, 4
        %s769 = smul.addr %s768, 8
        %s770 = scalar_lea.vmem %s1, %s769
        %p771 = pneg %p89
        %p772 = pneg %p86
        %p773 = pneg %p110
        %p774 = pneg %p107
        %p775 = pneg %p131
        %p776 = pneg %p128
        %p777 = pneg %p152
        %p778 = pneg %p149
        %p779 = pneg %p173
        %p780 = pneg %p170
        %p781 = pneg %p194
        %p782 = pneg %p191
        %p783 = pneg %p215
        %p784 = pneg %p212
        %p785 = pneg %p236
        %p786 = pneg %p233
        %p787 = pneg %p257
        %p788 = pneg %p254
        %p789 = pneg %p278
        %p790 = pneg %p275
        %p791 = pneg %p299
        %p792 = pneg %p296
        %p793 = pneg %p320
        %p794 = pneg %p317
        %p795 = pneg %p341
        %p796 = pneg %p338
        %p797 = pneg %p362
        %p798 = pneg %p359
        %p799 = pneg %p383
        %p800 = pneg %p380
        %p801 = pneg %p404
        %p802 = pneg %p401
        %p803 = pneg %p425
        %p804 = pneg %p422
        %p805 = pneg %p446
        %p806 = pneg %p443
        %p807 = pneg %p467
        %p808 = pneg %p464
        %p809 = pneg %p488
        %p810 = pneg %p485
        %p811 = pneg %p509
        %p812 = pneg %p506
        %p813 = pneg %p530
        %p814 = pneg %p527
        %p815 = pneg %p551
        %p816 = pneg %p548
        %p817 = pneg %p572
        %p818 = pneg %p569
        %p819 = pneg %p593
        %p820 = pneg %p590
        %p821 = pneg %p619
        %p822 = pneg %p616
        %p823 = scmp.lt.s32.totalorder %s42, 1
        %s824 = scalar_select %p823, %s42, 1
        %s825 = smul.addr %s824, 4
        %s826 = smul.addr %s825, 8
        %s827 = scalar_lea.vmem %s26, %s826
        %p828 = pneg %p645
        %p829 = pneg %p642
        %s830 = sand.u32 %s632, 1
        %s831 = scalar_lea.sflag [#allocation3], %s830
        %s832 = sand.u32 %s632, 1
        %s833 = smul.addr %s832, 32
        %s834 = scalar_lea.vmem [#allocation2], %s833
        %p835 = scmp.lt.s32.totalorder %s42, 1
        %s836 = scalar_select %p835, %s42, 1
        %s837 = smul.addr %s836, 4
        %s838 = smul.addr %s837, 8
        %s839 = scalar_lea.vmem %s0, %s838
        %p840 = scmp.lt.s32.totalorder %s42, 1
        %s841 = scalar_select %p840, %s42, 1
        %s842 = smul.addr %s841, 4
        %s843 = smul.addr %s842, 8
        %s844 = scalar_lea.vmem %s1, %s843
        %p845 = scmp.lt.s32.totalorder %s42, 1
        %s846 = scalar_select %p845, %s42, 1
        %s847 = smul.addr %s846, 4
        %s848 = smul.addr %s847, 8
        %s849 = scalar_lea.vmem %s26, %s848
        %v850 = vld [vmem:[%s839] sm:$0xff]
        %v851 = vld [vmem:[%s839 + $0x8] sm:$0xff]
        %v852 = vld [vmem:[%s839 + $0x10] sm:$0xff]
        %v853 = vld [vmem:[%s839 + $0x18] sm:$0xff]
        %v854 = vld [vmem:[%s844] sm:$0xff]
        %v855 = vld [vmem:[%s844 + $0x8] sm:$0xff]
        %v856 = vld [vmem:[%s844 + $0x10] sm:$0xff]
        %v857 = vld [vmem:[%s844 + $0x18] sm:$0xff]
        %v858 = vld [vmem:[%s2] sm:$0xff]
        %v859 = vld [vmem:[%s2 + $0x8] sm:$0xff]
        %v860 = vld [vmem:[%s2 + $0x10] sm:$0xff]
        %v861 = vld [vmem:[%s2 + $0x18] sm:$0xff]
        %v862 = vld [vmem:[%s2 + $0x20] sm:$0xff]
        %v863 = vld [vmem:[%s2 + $0x28] sm:$0xff]
        %v864 = vld [vmem:[%s2 + $0x30] sm:$0xff]
        %v865 = vld [vmem:[%s2 + $0x38] sm:$0xff]
        %v866 = vld [vmem:[%s2 + $0x40] sm:$0xff]
        %v867 = vld [vmem:[%s2 + $0x48] sm:$0xff]
        %v868 = vld [vmem:[%s2 + $0x50] sm:$0xff]
        %v869 = vld [vmem:[%s2 + $0x58] sm:$0xff]
        %v870 = vld [vmem:[%s2 + $0x60] sm:$0xff]
        %v871 = vld [vmem:[%s2 + $0x68] sm:$0xff]
        %v872 = vld [vmem:[%s2 + $0x70] sm:$0xff]
        %v873 = vld [vmem:[%s2 + $0x78] sm:$0xff]
        %v874 = vld [vmem:[%s2 + $0x80] sm:$0xff]
        %v875 = vld [vmem:[%s2 + $0x88] sm:$0xff]
        %v876 = vld [vmem:[%s2 + $0x90] sm:$0xff]
        %v877 = vld [vmem:[%s2 + $0x98] sm:$0xff]
        %v878 = vld [vmem:[%s2 + $0xa0] sm:$0xff]
        %v879 = vld [vmem:[%s2 + $0xa8] sm:$0xff]
        %v880 = vld [vmem:[%s2 + $0xb0] sm:$0xff]
        %v881 = vld [vmem:[%s2 + $0xb8] sm:$0xff]
        %v882 = vld [vmem:[%s2 + $0xc0] sm:$0xff]
        %v883 = vld [vmem:[%s2 + $0xc8] sm:$0xff]
        %v884 = vld [vmem:[%s2 + $0xd0] sm:$0xff]
        %v885 = vld [vmem:[%s2 + $0xd8] sm:$0xff]
        %v886 = vld [vmem:[%s2 + $0xe0] sm:$0xff]
        %v887 = vld [vmem:[%s2 + $0xe8] sm:$0xff]
        %v888 = vld [vmem:[%s2 + $0xf0] sm:$0xff]
        %v889 = vld [vmem:[%s2 + $0xf8] sm:$0xff]
        %890 = vmatprep.subr.mxu0 0.0
        %891 = vmatpush1.msra.mxu0 %v873
        %892 = vmatprep.subr.mxu0 0.0
        %893 = vmatpush1.msra.mxu0 %v872
        %894 = vmatprep.subr.mxu0 0.0
        %895 = vmatpush1.msra.mxu0 %v871
        %896 = vmatprep.subr.mxu0 0.0
        %897 = vmatpush1.msra.mxu0 %v870
        %898 = vmatprep.subr.mxu0 0.0
        %899 = vmatpush1.msra.mxu0 %v869
        %900 = vmatprep.subr.mxu0 0.0
        %901 = vmatpush1.msra.mxu0 %v868
        %902 = vmatprep.subr.mxu0 0.0
        %903 = vmatpush1.msra.mxu0 %v867
        %904 = vmatprep.subr.mxu0 0.0
        %905 = vmatpush1.msra.mxu0 %v866
        %906 = vmatprep.subr.mxu0 0.0
        %907 = vmatpush1.msra.mxu0 %v865
        %908 = vmatprep.subr.mxu0 0.0
        %909 = vmatpush1.msra.mxu0 %v864
        %910 = vmatprep.subr.mxu0 0.0
        %911 = vmatpush1.msra.mxu0 %v863
        %912 = vmatprep.subr.mxu0 0.0
        %913 = vmatpush1.msra.mxu0 %v862
        %914 = vmatprep.subr.mxu0 0.0
        %915 = vmatpush1.msra.mxu0 %v861
        %916 = vmatprep.subr.mxu0 0.0
        %917 = vmatpush1.msra.mxu0 %v860
        %918 = vmatprep.subr.mxu0 0.0
        %919 = vmatpush1.msra.mxu0 %v859
        %920 = vmatprep.subr.mxu0 0.0
        %921 = vmatpush1.msra.mxu0 %v858
        %922 = vmatprep.subr.mxu0 0.0
        %923 = vmatpush2.msra.mxu0 %v889
        %924 = vmatprep.subr.mxu0 0.0
        %925 = vmatpush2.msra.mxu0 %v888
        %926 = vmatprep.subr.mxu0 0.0
        %927 = vmatpush2.msra.mxu0 %v887
        %928 = vmatprep.subr.mxu0 0.0
        %929 = vmatpush2.msra.mxu0 %v886
        %930 = vmatprep.subr.mxu0 0.0
        %931 = vmatpush2.msra.mxu0 %v885
        %932 = vmatprep.subr.mxu0 0.0
        %933 = vmatpush2.msra.mxu0 %v884
        %934 = vmatprep.subr.mxu0 0.0
        %935 = vmatpush2.msra.mxu0 %v883
        %936 = vmatprep.subr.mxu0 0.0
        %937 = vmatpush2.msra.mxu0 %v882
        %938 = vmatprep.subr.mxu0 0.0
        %939 = vmatpush2.msra.mxu0 %v881
        %940 = vmatprep.subr.mxu0 0.0
        %941 = vmatpush2.msra.mxu0 %v880
        %942 = vmatprep.subr.mxu0 0.0
        %943 = vmatpush2.msra.mxu0 %v879
        %944 = vmatprep.subr.mxu0 0.0
        %945 = vmatpush2.msra.mxu0 %v878
        %946 = vmatprep.subr.mxu0 0.0
        %947 = vmatpush2.msra.mxu0 %v877
        %948 = vmatprep.subr.mxu0 0.0
        %949 = vmatpush2.msra.mxu0 %v876
        %950 = vmatprep.subr.mxu0 0.0
        %951 = vmatpush2.msra.mxu0 %v875
        %952 = vmatprep.subr.mxu0 0.0
        %953 = vmatpush2.msra.mxu0 %v874
        %954 = vmatprep.mubr.f32.mxu0 %v851
        %955 = vmatmul.mubr.f32.gmra.mxu0 %v850
        %v956 = vpop.f32.mrf.mxu0
        %v957 = vadd.f32 0.0, %v956
        %v958 = vpop.f32.mrf.mxu0
        %959 = vmatprep.mubr.f32.mxu0 %v853
        %960 = vmatmul.mubr.f32.gmra.mxu0 %v852
        %v961 = vpop.f32.mrf.mxu0
        %v962 = vadd.f32 0.0, %v961
        %v963 = vpop.f32.mrf.mxu0
        %964 = vdwg.mxu0
        %v965 = vld [vmem:[%s4] sm:$0xff]
        %v966 = vld [vmem:[%s5] sm:$0xff]
        %968 = vset.pattern.permute.xlu0 0
        %969 = vperm.xlu0 %968, %v966
        %v970 = vpop.permute.xlu0 %969
        %vm972 = vcmask 392192
        %v974 = vsel %vm972, %v965, 0
        %976 = vmatprep.subr.mxu0 0.0
        %977 = vmatpush1.msra.mxu0 0.0
        %978 = vmatprep.subr.mxu0 0.0
        %979 = vmatpush1.msra.mxu0 0.0
        %980 = vmatprep.subr.mxu0 0.0
        %981 = vmatpush1.msra.mxu0 0.0
        %982 = vmatprep.subr.mxu0 0.0
        %983 = vmatpush1.msra.mxu0 0.0
        %984 = vmatprep.subr.mxu0 0.0
        %985 = vmatpush1.msra.mxu0 0.0
        %986 = vmatprep.subr.mxu0 0.0
        %987 = vmatpush1.msra.mxu0 0.0
        %988 = vmatprep.subr.mxu0 0.0
        %989 = vmatpush1.msra.mxu0 0.0
        %990 = vmatprep.subr.mxu0 0.0
        %991 = vmatpush1.msra.mxu0 0.0
        %992 = vmatprep.subr.mxu0 0.0
        %993 = vmatpush1.msra.mxu0 0.0
        %994 = vmatprep.subr.mxu0 0.0
        %995 = vmatpush1.msra.mxu0 0.0
        %996 = vmatprep.subr.mxu0 0.0
        %997 = vmatpush1.msra.mxu0 %v857
        %998 = vmatprep.subr.mxu0 0.0
        %999 = vmatpush1.msra.mxu0 %v856
        %1000 = vmatprep.subr.mxu0 0.0
        %1001 = vmatpush1.msra.mxu0 %v855
        %1002 = vmatprep.subr.mxu0 0.0
        %1003 = vmatpush1.msra.mxu0 %v854
        %1004 = vmatprep.subr.mxu0 0.0
        %1005 = vmatpush1.msra.mxu0 %v962
        %1006 = vmatprep.subr.mxu0 0.0
        %1007 = vmatpush1.msra.mxu0 %v957
        %1008 = vmatprep.subr.mxu0 0.0
        %1009 = vmatpush2.msra.mxu0 0.0
        %1010 = vmatprep.subr.mxu0 0.0
        %1011 = vmatpush2.msra.mxu0 0.0
        %1012 = vmatprep.subr.mxu0 0.0
        %1013 = vmatpush2.msra.mxu0 0.0
        %1014 = vmatprep.subr.mxu0 0.0
        %1015 = vmatpush2.msra.mxu0 0.0
        %1016 = vmatprep.subr.mxu0 0.0
        %1017 = vmatpush2.msra.mxu0 0.0
        %1018 = vmatprep.subr.mxu0 0.0
        %1019 = vmatpush2.msra.mxu0 0.0
        %1020 = vmatprep.subr.mxu0 0.0
        %1021 = vmatpush2.msra.mxu0 0.0
        %1022 = vmatprep.subr.mxu0 0.0
        %1023 = vmatpush2.msra.mxu0 0.0
        %1024 = vmatprep.subr.mxu0 0.0
        %1025 = vmatpush2.msra.mxu0 0.0
        %1026 = vmatprep.subr.mxu0 0.0
        %1027 = vmatpush2.msra.mxu0 0.0
        %1028 = vmatprep.subr.mxu0 0.0
        %1029 = vmatpush2.msra.mxu0 0.0
        %1030 = vmatprep.subr.mxu0 0.0
        %1031 = vmatpush2.msra.mxu0 0.0
        %1032 = vmatprep.subr.mxu0 0.0
        %1033 = vmatpush2.msra.mxu0 0.0
        %1034 = vmatprep.subr.mxu0 0.0
        %1035 = vmatpush2.msra.mxu0 0.0
        %1036 = vmatprep.subr.mxu0 0.0
        %1037 = vmatpush2.msra.mxu0 0.0
        %1038 = vmatprep.subr.mxu0 0.0
        %1039 = vmatpush2.msra.mxu0 0.0
        %1040 = vmatprep.mubr.f32.mxu0 0.0
        %1041 = vmatmul.mubr.f32.gmra.mxu0 %v974
        %v1042 = vpop.f32.mrf.mxu0
        %v1043 = vadd.f32 %v970, %v1042
        %v1044 = vpop.f32.mrf.mxu0
        %1045 = vdwg.mxu0
        %v1046 = vmax.f32 %v1043, 0.0
        %v1047 = vld [vmem:[%s6] sm:$0xff]
        %v1048 = vld [vmem:[%s6 + $0x8] sm:$0xff]
        %v1049 = vld [vmem:[%s6 + $0x10] sm:$0xff]
        %v1050 = vld [vmem:[%s6 + $0x18] sm:$0xff]
        %v1051 = vld [vmem:[%s6 + $0x20] sm:$0xff]
        %v1052 = vld [vmem:[%s6 + $0x28] sm:$0xff]
        %v1053 = vld [vmem:[%s7] sm:$0xff]
        %v1054 = vld [vmem:[%s7 + $0x8] sm:$0xff]
        %v1055 = vld [vmem:[%s7 + $0x10] sm:$0xff]
        %v1056 = vld [vmem:[%s7 + $0x18] sm:$0xff]
        %v1057 = vld [vmem:[%s7 + $0x20] sm:$0xff]
        %v1058 = vld [vmem:[%s7 + $0x28] sm:$0xff]
        %1060 = vset.pattern.permute.xlu0 0
        %1061 = vperm.xlu0 %1060, %v1053
        %v1062 = vpop.permute.xlu0 %1061
        %1065 = vset.pattern.permute.xlu0 0
        %1066 = vperm.xlu0 %1065, %v1054
        %v1067 = vpop.permute.xlu0 %1066
        %1070 = vset.pattern.permute.xlu0 0
        %1071 = vperm.xlu0 %1070, %v1055
        %v1072 = vpop.permute.xlu0 %1071
        %1075 = vset.pattern.permute.xlu0 0
        %1076 = vperm.xlu0 %1075, %v1056
        %v1077 = vpop.permute.xlu0 %1076
        %1080 = vset.pattern.permute.xlu0 0
        %1081 = vperm.xlu0 %1080, %v1057
        %v1082 = vpop.permute.xlu0 %1081
        %1085 = vset.pattern.permute.xlu0 0
        %1086 = vperm.xlu0 %1085, %v1058
        %v1087 = vpop.permute.xlu0 %1086
        %vm1089 = vcmask 64512
        %v1091 = vsel %vm1089, %v1047, 0
        %v1094 = vsel %vm1089, %v1048, 0
        %v1097 = vsel %vm1089, %v1049, 0
        %v1100 = vsel %vm1089, %v1050, 0
        %v1103 = vsel %vm1089, %v1051, 0
        %v1106 = vsel %vm1089, %v1052, 0
        %1108 = vmatprep.subr.mxu0 0.0
        %1109 = vmatpush1.msra.mxu0 0.0
        %1110 = vmatprep.subr.mxu0 0.0
        %1111 = vmatpush1.msra.mxu0 0.0
        %1112 = vmatprep.subr.mxu0 0.0
        %1113 = vmatpush1.msra.mxu0 0.0
        %1114 = vmatprep.subr.mxu0 0.0
        %1115 = vmatpush1.msra.mxu0 0.0
        %1116 = vmatprep.subr.mxu0 0.0
        %1117 = vmatpush1.msra.mxu0 0.0
        %1118 = vmatprep.subr.mxu0 0.0
        %1119 = vmatpush1.msra.mxu0 0.0
        %1120 = vmatprep.subr.mxu0 0.0
        %1121 = vmatpush1.msra.mxu0 0.0
        %1122 = vmatprep.subr.mxu0 0.0
        %1123 = vmatpush1.msra.mxu0 0.0
        %1124 = vmatprep.subr.mxu0 0.0
        %1125 = vmatpush1.msra.mxu0 0.0
        %1126 = vmatprep.subr.mxu0 0.0
        %1127 = vmatpush1.msra.mxu0 0.0
        %1128 = vmatprep.subr.mxu0 0.0
        %1129 = vmatpush1.msra.mxu0 0.0
        %1130 = vmatprep.subr.mxu0 0.0
        %1131 = vmatpush1.msra.mxu0 0.0
        %1132 = vmatprep.subr.mxu0 0.0
        %1133 = vmatpush1.msra.mxu0 0.0
        %1134 = vmatprep.subr.mxu0 0.0
        %1135 = vmatpush1.msra.mxu0 0.0
        %1136 = vmatprep.subr.mxu0 0.0
        %1137 = vmatpush1.msra.mxu0 0.0
        %1138 = vmatprep.subr.mxu0 0.0
        %1139 = vmatpush1.msra.mxu0 %v1046
        %1140 = vmatprep.subr.mxu0 0.0
        %1141 = vmatpush2.msra.mxu0 0.0
        %1142 = vmatprep.subr.mxu0 0.0
        %1143 = vmatpush2.msra.mxu0 0.0
        %1144 = vmatprep.subr.mxu0 0.0
        %1145 = vmatpush2.msra.mxu0 0.0
        %1146 = vmatprep.subr.mxu0 0.0
        %1147 = vmatpush2.msra.mxu0 0.0
        %1148 = vmatprep.subr.mxu0 0.0
        %1149 = vmatpush2.msra.mxu0 0.0
        %1150 = vmatprep.subr.mxu0 0.0
        %1151 = vmatpush2.msra.mxu0 0.0
        %1152 = vmatprep.subr.mxu0 0.0
        %1153 = vmatpush2.msra.mxu0 0.0
        %1154 = vmatprep.subr.mxu0 0.0
        %1155 = vmatpush2.msra.mxu0 0.0
        %1156 = vmatprep.subr.mxu0 0.0
        %1157 = vmatpush2.msra.mxu0 0.0
        %1158 = vmatprep.subr.mxu0 0.0
        %1159 = vmatpush2.msra.mxu0 0.0
        %1160 = vmatprep.subr.mxu0 0.0
        %1161 = vmatpush2.msra.mxu0 0.0
        %1162 = vmatprep.subr.mxu0 0.0
        %1163 = vmatpush2.msra.mxu0 0.0
        %1164 = vmatprep.subr.mxu0 0.0
        %1165 = vmatpush2.msra.mxu0 0.0
        %1166 = vmatprep.subr.mxu0 0.0
        %1167 = vmatpush2.msra.mxu0 0.0
        %1168 = vmatprep.subr.mxu0 0.0
        %1169 = vmatpush2.msra.mxu0 0.0
        %1170 = vmatprep.subr.mxu0 0.0
        %1171 = vmatpush2.msra.mxu0 0.0
        %1172 = vmatprep.mubr.f32.mxu0 0.0
        %1173 = vmatmul.mubr.f32.gmra.mxu0 %v1091
        %v1174 = vpop.f32.mrf.mxu0
        %v1175 = vadd.f32 %v1062, %v1174
        %v1176 = vpop.f32.mrf.mxu0
        %1177 = vmatprep.mubr.f32.mxu0 0.0
        %1178 = vmatmul.mubr.f32.gmra.mxu0 %v1094
        %v1179 = vpop.f32.mrf.mxu0
        %v1180 = vadd.f32 %v1067, %v1179
        %v1181 = vpop.f32.mrf.mxu0
        %1182 = vmatprep.mubr.f32.mxu0 0.0
        %1183 = vmatmul.mubr.f32.gmra.mxu0 %v1097
        %v1184 = vpop.f32.mrf.mxu0
        %v1185 = vadd.f32 %v1072, %v1184
        %v1186 = vpop.f32.mrf.mxu0
        %1187 = vmatprep.mubr.f32.mxu0 0.0
        %1188 = vmatmul.mubr.f32.gmra.mxu0 %v1100
        %v1189 = vpop.f32.mrf.mxu0
        %v1190 = vadd.f32 %v1077, %v1189
        %v1191 = vpop.f32.mrf.mxu0
        %1192 = vmatprep.mubr.f32.mxu0 0.0
        %1193 = vmatmul.mubr.f32.gmra.mxu0 %v1103
        %v1194 = vpop.f32.mrf.mxu0
        %v1195 = vadd.f32 %v1082, %v1194
        %v1196 = vpop.f32.mrf.mxu0
        %1197 = vmatprep.mubr.f32.mxu0 0.0
        %1198 = vmatmul.mubr.f32.gmra.mxu0 %v1106
        %v1199 = vpop.f32.mrf.mxu0
        %v1200 = vadd.f32 %v1087, %v1199
        %v1201 = vpop.f32.mrf.mxu0
        %1202 = vdwg.mxu0
        %v1203 = vxor.u32 %v1175, 2147483648
        %v1204 = vxor.u32 %v1180, 2147483648
        %v1205 = vxor.u32 %v1185, 2147483648
        %v1206 = vxor.u32 %v1190, 2147483648
        %v1207 = vxor.u32 %v1195, 2147483648
        %v1208 = vxor.u32 %v1200, 2147483648
        %v1209 = vmul.f32 %v1203, 1.442695
        %v1210 = vpow.pop %v1209
        %v1211 = vmul.f32 %v1204, 1.442695
        %v1212 = vpow.pop %v1211
        %v1213 = vmul.f32 %v1205, 1.442695
        %v1214 = vpow.pop %v1213
        %v1215 = vmul.f32 %v1206, 1.442695
        %v1216 = vpow.pop %v1215
        %v1217 = vmul.f32 %v1207, 1.442695
        %v1218 = vpow.pop %v1217
        %v1219 = vmul.f32 %v1208, 1.442695
        %v1220 = vpow.pop %v1219
        %v1221 = vadd.f32 %v1210, 1.0
        %v1222 = vadd.f32 %v1212, 1.0
        %v1223 = vadd.f32 %v1214, 1.0
        %v1224 = vadd.f32 %v1216, 1.0
        %v1225 = vadd.f32 %v1218, 1.0
        %v1226 = vadd.f32 %v1220, 1.0
        %v1227 = vrcp.pop %v1221
        %v1228 = vmul.f32 1.0, %v1227
        %v1229 = vrcp.pop %v1222
        %v1230 = vmul.f32 1.0, %v1229
        %v1231 = vrcp.pop %v1223
        %v1232 = vmul.f32 1.0, %v1231
        %v1233 = vrcp.pop %v1224
        %v1234 = vmul.f32 1.0, %v1233
        %v1235 = vrcp.pop %v1225
        %v1236 = vmul.f32 1.0, %v1235
        %v1237 = vrcp.pop %v1226
        %v1238 = vmul.f32 1.0, %v1237
        %v1239 = vld [vmem:[%s3] sm:$0xff]
        %v1240 = vld [vmem:[%s3 + $0x8] sm:$0xff]
        %v1241 = vld [vmem:[%s3 + $0x10] sm:$0xff]
        %v1242 = vld [vmem:[%s3 + $0x18] sm:$0xff]
        %v1243 = vld [vmem:[%s3 + $0x20] sm:$0xff]
        %v1244 = vld [vmem:[%s3 + $0x28] sm:$0xff]
        %v1245 = vld [vmem:[%s3 + $0x30] sm:$0xff]
        %v1246 = vld [vmem:[%s3 + $0x38] sm:$0xff]
        %v1247 = vld [vmem:[%s3 + $0x40] sm:$0xff]
        %v1248 = vld [vmem:[%s3 + $0x48] sm:$0xff]
        %v1249 = vld [vmem:[%s3 + $0x50] sm:$0xff]
        %v1250 = vld [vmem:[%s3 + $0x58] sm:$0xff]
        %v1251 = vld [vmem:[%s3 + $0x60] sm:$0xff]
        %v1252 = vld [vmem:[%s3 + $0x68] sm:$0xff]
        %v1253 = vld [vmem:[%s3 + $0x70] sm:$0xff]
        %v1254 = vld [vmem:[%s3 + $0x78] sm:$0xff]
        %v1255 = vld [vmem:[%s3 + $0x80] sm:$0xff]
        %v1256 = vld [vmem:[%s3 + $0x88] sm:$0xff]
        %v1257 = vld [vmem:[%s3 + $0x90] sm:$0xff]
        %v1258 = vld [vmem:[%s3 + $0x98] sm:$0xff]
        %v1259 = vld [vmem:[%s3 + $0xa0] sm:$0xff]
        %v1260 = vld [vmem:[%s3 + $0xa8] sm:$0xff]
        %v1261 = vld [vmem:[%s3 + $0xb0] sm:$0xff]
        %v1262 = vld [vmem:[%s3 + $0xb8] sm:$0xff]
        %v1263 = vld [vmem:[%s3 + $0xc0] sm:$0xff]
        %v1264 = vld [vmem:[%s3 + $0xc8] sm:$0xff]
        %v1265 = vld [vmem:[%s3 + $0xd0] sm:$0xff]
        %v1266 = vld [vmem:[%s3 + $0xd8] sm:$0xff]
        %v1267 = vld [vmem:[%s3 + $0xe0] sm:$0xff]
        %v1268 = vld [vmem:[%s3 + $0xe8] sm:$0xff]
        %v1269 = vld [vmem:[%s3 + $0xf0] sm:$0xff]
        %v1270 = vld [vmem:[%s3 + $0xf8] sm:$0xff]
        %1271 = vmatprep.subr.mxu0 %v1270
        %1272 = vmatpush1.msra.mxu0 %v1269
        %1273 = vmatprep.subr.mxu0 %v1268
        %1274 = vmatpush1.msra.mxu0 %v1267
        %1275 = vmatprep.subr.mxu0 %v1266
        %1276 = vmatpush1.msra.mxu0 %v1265
        %1277 = vmatprep.subr.mxu0 %v1264
        %1278 = vmatpush1.msra.mxu0 %v1263
        %1279 = vmatprep.subr.mxu0 %v1262
        %1280 = vmatpush1.msra.mxu0 %v1261
        %1281 = vmatprep.subr.mxu0 %v1260
        %1282 = vmatpush1.msra.mxu0 %v1259
        %1283 = vmatprep.subr.mxu0 %v1258
        %1284 = vmatpush1.msra.mxu0 %v1257
        %1285 = vmatprep.subr.mxu0 %v1256
        %1286 = vmatpush1.msra.mxu0 %v1255
        %1287 = vmatprep.subr.mxu0 %v1254
        %1288 = vmatpush1.msra.mxu0 %v1253
        %1289 = vmatprep.subr.mxu0 %v1252
        %1290 = vmatpush1.msra.mxu0 %v1251
        %1291 = vmatprep.subr.mxu0 %v1250
        %1292 = vmatpush1.msra.mxu0 %v1249
        %1293 = vmatprep.subr.mxu0 %v1248
        %1294 = vmatpush1.msra.mxu0 %v1247
        %1295 = vmatprep.subr.mxu0 %v1246
        %1296 = vmatpush1.msra.mxu0 %v1245
        %1297 = vmatprep.subr.mxu0 %v1244
        %1298 = vmatpush1.msra.mxu0 %v1243
        %1299 = vmatprep.subr.mxu0 %v1242
        %1300 = vmatpush1.msra.mxu0 %v1241
        %1301 = vmatprep.subr.mxu0 %v1240
        %1302 = vmatpush1.msra.mxu0 %v1239
        %1303 = vmatprep.subr.mxu0 0.0
        %1304 = vmatpush2.msra.mxu0 0.0
        %1305 = vmatprep.subr.mxu0 0.0
        %1306 = vmatpush2.msra.mxu0 0.0
        %1307 = vmatprep.subr.mxu0 0.0
        %1308 = vmatpush2.msra.mxu0 0.0
        %1309 = vmatprep.subr.mxu0 0.0
        %1310 = vmatpush2.msra.mxu0 0.0
        %1311 = vmatprep.subr.mxu0 0.0
        %1312 = vmatpush2.msra.mxu0 0.0
        %1313 = vmatprep.subr.mxu0 0.0
        %1314 = vmatpush2.msra.mxu0 0.0
        %1315 = vmatprep.subr.mxu0 0.0
        %1316 = vmatpush2.msra.mxu0 0.0
        %1317 = vmatprep.subr.mxu0 0.0
        %1318 = vmatpush2.msra.mxu0 0.0
        %1319 = vmatprep.subr.mxu0 0.0
        %1320 = vmatpush2.msra.mxu0 0.0
        %1321 = vmatprep.subr.mxu0 0.0
        %1322 = vmatpush2.msra.mxu0 0.0
        %1323 = vmatprep.subr.mxu0 0.0
        %1324 = vmatpush2.msra.mxu0 0.0
        %1325 = vmatprep.subr.mxu0 0.0
        %1326 = vmatpush2.msra.mxu0 0.0
        %1327 = vmatprep.subr.mxu0 0.0
        %1328 = vmatpush2.msra.mxu0 0.0
        %1329 = vmatprep.subr.mxu0 0.0
        %1330 = vmatpush2.msra.mxu0 0.0
        %1331 = vmatprep.subr.mxu0 0.0
        %1332 = vmatpush2.msra.mxu0 0.0
        %1333 = vmatprep.subr.mxu0 0.0
        %1334 = vmatpush2.msra.mxu0 0.0
        %1335 = vmatprep.mubr.f32.mxu0 0.0
        %1336 = vmatmul.mubr.f32.gmra.mxu0 %v1228
        %v1337 = vpop.f32.mrf.mxu0
        %v1338 = vadd.f32 0.0, %v1337
        %v1339 = vpop.f32.mrf.mxu0
        %v1340 = vadd.f32 0.0, %v1339
        %1341 = vmatprep.mubr.f32.mxu0 0.0
        %1342 = vmatmul.mubr.f32.gmra.mxu0 %v1230
        %v1343 = vpop.f32.mrf.mxu0
        %v1344 = vadd.f32 0.0, %v1343
        %v1345 = vpop.f32.mrf.mxu0
        %v1346 = vadd.f32 0.0, %v1345
        %1347 = vdwg.mxu0
        %v1348 = vmul.f32 %v850, %v1338
        %v1349 = vmul.f32 %v851, %v1340
        %v1350 = vmul.f32 %v852, %v1344
        %v1351 = vmul.f32 %v853, %v1346
        %v1352 = vmul.f32 %v854, %v1232
        %v1353 = vmul.f32 %v855, %v1234
        %v1354 = vmul.f32 %v856, %v1236
        %v1355 = vmul.f32 %v857, %v1238
        %v1356 = vld [vmem:[%s23] sm:$0x1]
        %v1357 = vld [vmem:[%s23 + $0x1] sm:$0x1]
        %v1358 = vld [vmem:[%s23 + $0x2] sm:$0x1]
        %v1359 = vld [vmem:[%s23 + $0x3] sm:$0x1]
        %1360 = vrot.lane.b32.xlu0 %v1352, 1
        %v1361 = vpop.permute.xlu0 %1360
        %1362 = vrot.lane.b32.xlu0 %v1353, 1
        %v1363 = vpop.permute.xlu0 %1362
        %1364 = vrot.lane.b32.xlu0 %v1354, 1
        %v1365 = vpop.permute.xlu0 %1364
        %1366 = vrot.lane.b32.xlu0 %v1355, 1
        %v1367 = vpop.permute.xlu0 %1366
        %v1368 = vlaneseq
        %v1369 = vshrl.u32 %v1368, 7
        %v1370 = vsub.s32 0, %v1369
        %v1371 = vrot.slane %v1356, %v1370
        %v1372 = vmul.f32 %v1361, %v1371
        %v1373 = vmul.f32 %v1363, %v1371
        %v1374 = vmul.f32 %v1365, %v1371
        %v1375 = vmul.f32 %v1367, %v1371
        %1376 = vrot.lane.b32.xlu0 %v1352, 127
        %v1377 = vpop.permute.xlu0 %1376
        %1378 = vrot.lane.b32.xlu0 %v1353, 127
        %v1379 = vpop.permute.xlu0 %1378
        %1380 = vrot.lane.b32.xlu0 %v1354, 127
        %v1381 = vpop.permute.xlu0 %1380
        %1382 = vrot.lane.b32.xlu0 %v1355, 127
        %v1383 = vpop.permute.xlu0 %1382
        %v1384 = vlaneseq
        %v1385 = vshrl.u32 %v1384, 7
        %v1386 = vsub.s32 0, %v1385
        %v1387 = vrot.slane %v1357, %v1386
        %v1388 = vmul.f32 %v1377, %v1387
        %v1389 = vmul.f32 %v1379, %v1387
        %v1390 = vmul.f32 %v1381, %v1387
        %v1391 = vmul.f32 %v1383, %v1387
        %v1392 = vld [vmem:[%s16 + $0x60] sm:$0xff]
        %v1393 = vld [vmem:[%s16 + $0x68] sm:$0xff]
        %v1394 = vld [vmem:[%s16 + $0x70] sm:$0xff]
        %v1395 = vld [vmem:[%s16 + $0x78] sm:$0xff]
        %1397 = vset.pattern.permute.xlu0 0
        %1398 = vperm.xlu0 %1397, %v1392
        %v1399 = vpop.permute.xlu0 %1398
        %1402 = vset.pattern.permute.xlu0 0
        %1403 = vperm.xlu0 %1402, %v1393
        %v1404 = vpop.permute.xlu0 %1403
        %1407 = vset.pattern.permute.xlu0 0
        %1408 = vperm.xlu0 %1407, %v1394
        %v1409 = vpop.permute.xlu0 %1408
        %1412 = vset.pattern.permute.xlu0 0
        %1413 = vperm.xlu0 %1412, %v1395
        %v1414 = vpop.permute.xlu0 %1413
        %v1416 = vmul.f32 %v1372, %v1399
        %v1417 = vmul.f32 %v1373, %v1404
        %v1418 = vmul.f32 %v1374, %v1409
        %v1419 = vmul.f32 %v1375, %v1414
        %v1420 = vld [vmem:[%s16 + $0x80] sm:$0xff]
        %v1421 = vld [vmem:[%s16 + $0x88] sm:$0xff]
        %v1422 = vld [vmem:[%s16 + $0x90] sm:$0xff]
        %v1423 = vld [vmem:[%s16 + $0x98] sm:$0xff]
        %1425 = vset.pattern.permute.xlu0 0
        %1426 = vperm.xlu0 %1425, %v1420
        %v1427 = vpop.permute.xlu0 %1426
        %1430 = vset.pattern.permute.xlu0 0
        %1431 = vperm.xlu0 %1430, %v1421
        %v1432 = vpop.permute.xlu0 %1431
        %1435 = vset.pattern.permute.xlu0 0
        %1436 = vperm.xlu0 %1435, %v1422
        %v1437 = vpop.permute.xlu0 %1436
        %1440 = vset.pattern.permute.xlu0 0
        %1441 = vperm.xlu0 %1440, %v1423
        %v1442 = vpop.permute.xlu0 %1441
        %v1444 = vmul.f32 %v1352, %v1427
        %v1445 = vmul.f32 %v1353, %v1432
        %v1446 = vmul.f32 %v1354, %v1437
        %v1447 = vmul.f32 %v1355, %v1442
        %v1448 = vadd.f32 %v1416, %v1444
        %v1449 = vadd.f32 %v1417, %v1445
        %v1450 = vadd.f32 %v1418, %v1446
        %v1451 = vadd.f32 %v1419, %v1447
        %v1452 = vld [vmem:[%s16 + $0xa0] sm:$0xff]
        %v1453 = vld [vmem:[%s16 + $0xa8] sm:$0xff]
        %v1454 = vld [vmem:[%s16 + $0xb0] sm:$0xff]
        %v1455 = vld [vmem:[%s16 + $0xb8] sm:$0xff]
        %1457 = vset.pattern.permute.xlu0 0
        %1458 = vperm.xlu0 %1457, %v1452
        %v1459 = vpop.permute.xlu0 %1458
        %1462 = vset.pattern.permute.xlu0 0
        %1463 = vperm.xlu0 %1462, %v1453
        %v1464 = vpop.permute.xlu0 %1463
        %1467 = vset.pattern.permute.xlu0 0
        %1468 = vperm.xlu0 %1467, %v1454
        %v1469 = vpop.permute.xlu0 %1468
        %1472 = vset.pattern.permute.xlu0 0
        %1473 = vperm.xlu0 %1472, %v1455
        %v1474 = vpop.permute.xlu0 %1473
        %v1476 = vmul.f32 %v1388, %v1459
        %v1477 = vmul.f32 %v1389, %v1464
        %v1478 = vmul.f32 %v1390, %v1469
        %v1479 = vmul.f32 %v1391, %v1474
        %v1480 = vadd.f32 %v1448, %v1476
        %v1481 = vadd.f32 %v1449, %v1477
        %v1482 = vadd.f32 %v1450, %v1478
        %v1483 = vadd.f32 %v1451, %v1479
        %v1484 = vld [vmem:[%s16] sm:$0xff]
        %v1485 = vld [vmem:[%s16 + $0x8] sm:$0xff]
        %v1486 = vld [vmem:[%s16 + $0x10] sm:$0xff]
        %v1487 = vld [vmem:[%s16 + $0x18] sm:$0xff]
        %1489 = vset.pattern.permute.xlu0 0
        %1490 = vperm.xlu0 %1489, %v1484
        %v1491 = vpop.permute.xlu0 %1490
        %1494 = vset.pattern.permute.xlu0 0
        %1495 = vperm.xlu0 %1494, %v1485
        %v1496 = vpop.permute.xlu0 %1495
        %1499 = vset.pattern.permute.xlu0 0
        %1500 = vperm.xlu0 %1499, %v1486
        %v1501 = vpop.permute.xlu0 %1500
        %1504 = vset.pattern.permute.xlu0 0
        %1505 = vperm.xlu0 %1504, %v1487
        %v1506 = vpop.permute.xlu0 %1505
        %v1508 = vmul.f32 %v1372, %v1491
        %v1509 = vmul.f32 %v1373, %v1496
        %v1510 = vmul.f32 %v1374, %v1501
        %v1511 = vmul.f32 %v1375, %v1506
        %v1512 = vld [vmem:[%s16 + $0x20] sm:$0xff]
        %v1513 = vld [vmem:[%s16 + $0x28] sm:$0xff]
        %v1514 = vld [vmem:[%s16 + $0x30] sm:$0xff]
        %v1515 = vld [vmem:[%s16 + $0x38] sm:$0xff]
        %1517 = vset.pattern.permute.xlu0 0
        %1518 = vperm.xlu0 %1517, %v1512
        %v1519 = vpop.permute.xlu0 %1518
        %1522 = vset.pattern.permute.xlu0 0
        %1523 = vperm.xlu0 %1522, %v1513
        %v1524 = vpop.permute.xlu0 %1523
        %1527 = vset.pattern.permute.xlu0 0
        %1528 = vperm.xlu0 %1527, %v1514
        %v1529 = vpop.permute.xlu0 %1528
        %1532 = vset.pattern.permute.xlu0 0
        %1533 = vperm.xlu0 %1532, %v1515
        %v1534 = vpop.permute.xlu0 %1533
        %v1536 = vmul.f32 %v1352, %v1519
        %v1537 = vmul.f32 %v1353, %v1524
        %v1538 = vmul.f32 %v1354, %v1529
        %v1539 = vmul.f32 %v1355, %v1534
        %v1540 = vadd.f32 %v1508, %v1536
        %v1541 = vadd.f32 %v1509, %v1537
        %v1542 = vadd.f32 %v1510, %v1538
        %v1543 = vadd.f32 %v1511, %v1539
        %v1544 = vld [vmem:[%s16 + $0x40] sm:$0xff]
        %v1545 = vld [vmem:[%s16 + $0x48] sm:$0xff]
        %v1546 = vld [vmem:[%s16 + $0x50] sm:$0xff]
        %v1547 = vld [vmem:[%s16 + $0x58] sm:$0xff]
        %1549 = vset.pattern.permute.xlu0 0
        %1550 = vperm.xlu0 %1549, %v1544
        %v1551 = vpop.permute.xlu0 %1550
        %1554 = vset.pattern.permute.xlu0 0
        %1555 = vperm.xlu0 %1554, %v1545
        %v1556 = vpop.permute.xlu0 %1555
        %1559 = vset.pattern.permute.xlu0 0
        %1560 = vperm.xlu0 %1559, %v1546
        %v1561 = vpop.permute.xlu0 %1560
        %1564 = vset.pattern.permute.xlu0 0
        %1565 = vperm.xlu0 %1564, %v1547
        %v1566 = vpop.permute.xlu0 %1565
        %v1568 = vmul.f32 %v1388, %v1551
        %v1569 = vmul.f32 %v1389, %v1556
        %v1570 = vmul.f32 %v1390, %v1561
        %v1571 = vmul.f32 %v1391, %v1566
        %v1572 = vadd.f32 %v1540, %v1568
        %v1573 = vadd.f32 %v1541, %v1569
        %v1574 = vadd.f32 %v1542, %v1570
        %v1575 = vadd.f32 %v1543, %v1571
        %1576 = vrot.lane.b32.xlu0 %v1572, 8
        %v1577 = vpop.permute.xlu0 %1576
        %1578 = vrot.lane.b32.xlu0 %v1573, 8
        %v1579 = vpop.permute.xlu0 %1578
        %1580 = vrot.lane.b32.xlu0 %v1574, 8
        %v1581 = vpop.permute.xlu0 %1580
        %1582 = vrot.lane.b32.xlu0 %v1575, 8
        %v1583 = vpop.permute.xlu0 %1582
        %v1584 = vlaneseq
        %v1585 = vshrl.u32 %v1584, 7
        %v1586 = vsub.s32 0, %v1585
        %v1587 = vrot.slane %v1358, %v1586
        %v1588 = vmul.f32 %v1577, %v1587
        %v1589 = vmul.f32 %v1579, %v1587
        %v1590 = vmul.f32 %v1581, %v1587
        %v1591 = vmul.f32 %v1583, %v1587
        %v1592 = vadd.f32 %v1480, %v1588
        %v1593 = vadd.f32 %v1481, %v1589
        %v1594 = vadd.f32 %v1482, %v1590
        %v1595 = vadd.f32 %v1483, %v1591
        %v1596 = vld [vmem:[%s16 + $0xc0] sm:$0xff]
        %v1597 = vld [vmem:[%s16 + $0xc8] sm:$0xff]
        %v1598 = vld [vmem:[%s16 + $0xd0] sm:$0xff]
        %v1599 = vld [vmem:[%s16 + $0xd8] sm:$0xff]
        %1601 = vset.pattern.permute.xlu0 0
        %1602 = vperm.xlu0 %1601, %v1596
        %v1603 = vpop.permute.xlu0 %1602
        %1606 = vset.pattern.permute.xlu0 0
        %1607 = vperm.xlu0 %1606, %v1597
        %v1608 = vpop.permute.xlu0 %1607
        %1611 = vset.pattern.permute.xlu0 0
        %1612 = vperm.xlu0 %1611, %v1598
        %v1613 = vpop.permute.xlu0 %1612
        %1616 = vset.pattern.permute.xlu0 0
        %1617 = vperm.xlu0 %1616, %v1599
        %v1618 = vpop.permute.xlu0 %1617
        %v1620 = vmul.f32 %v1372, %v1603
        %v1621 = vmul.f32 %v1373, %v1608
        %v1622 = vmul.f32 %v1374, %v1613
        %v1623 = vmul.f32 %v1375, %v1618
        %v1624 = vld [vmem:[%s16 + $0xe0] sm:$0xff]
        %v1625 = vld [vmem:[%s16 + $0xe8] sm:$0xff]
        %v1626 = vld [vmem:[%s16 + $0xf0] sm:$0xff]
        %v1627 = vld [vmem:[%s16 + $0xf8] sm:$0xff]
        %1629 = vset.pattern.permute.xlu0 0
        %1630 = vperm.xlu0 %1629, %v1624
        %v1631 = vpop.permute.xlu0 %1630
        %1634 = vset.pattern.permute.xlu0 0
        %1635 = vperm.xlu0 %1634, %v1625
        %v1636 = vpop.permute.xlu0 %1635
        %1639 = vset.pattern.permute.xlu0 0
        %1640 = vperm.xlu0 %1639, %v1626
        %v1641 = vpop.permute.xlu0 %1640
        %1644 = vset.pattern.permute.xlu0 0
        %1645 = vperm.xlu0 %1644, %v1627
        %v1646 = vpop.permute.xlu0 %1645
        %v1648 = vmul.f32 %v1352, %v1631
        %v1649 = vmul.f32 %v1353, %v1636
        %v1650 = vmul.f32 %v1354, %v1641
        %v1651 = vmul.f32 %v1355, %v1646
        %v1652 = vadd.f32 %v1620, %v1648
        %v1653 = vadd.f32 %v1621, %v1649
        %v1654 = vadd.f32 %v1622, %v1650
        %v1655 = vadd.f32 %v1623, %v1651
        %v1656 = vld [vmem:[%s16 + $0x100] sm:$0xff]
        %v1657 = vld [vmem:[%s16 + $0x108] sm:$0xff]
        %v1658 = vld [vmem:[%s16 + $0x110] sm:$0xff]
        %v1659 = vld [vmem:[%s16 + $0x118] sm:$0xff]
        %1661 = vset.pattern.permute.xlu0 0
        %1662 = vperm.xlu0 %1661, %v1656
        %v1663 = vpop.permute.xlu0 %1662
        %1666 = vset.pattern.permute.xlu0 0
        %1667 = vperm.xlu0 %1666, %v1657
        %v1668 = vpop.permute.xlu0 %1667
        %1671 = vset.pattern.permute.xlu0 0
        %1672 = vperm.xlu0 %1671, %v1658
        %v1673 = vpop.permute.xlu0 %1672
        %1676 = vset.pattern.permute.xlu0 0
        %1677 = vperm.xlu0 %1676, %v1659
        %v1678 = vpop.permute.xlu0 %1677
        %v1680 = vmul.f32 %v1388, %v1663
        %v1681 = vmul.f32 %v1389, %v1668
        %v1682 = vmul.f32 %v1390, %v1673
        %v1683 = vmul.f32 %v1391, %v1678
        %v1684 = vadd.f32 %v1652, %v1680
        %v1685 = vadd.f32 %v1653, %v1681
        %v1686 = vadd.f32 %v1654, %v1682
        %v1687 = vadd.f32 %v1655, %v1683
        %1688 = vrot.lane.b32.xlu0 %v1684, 120
        %v1689 = vpop.permute.xlu0 %1688
        %1690 = vrot.lane.b32.xlu0 %v1685, 120
        %v1691 = vpop.permute.xlu0 %1690
        %1692 = vrot.lane.b32.xlu0 %v1686, 120
        %v1693 = vpop.permute.xlu0 %1692
        %1694 = vrot.lane.b32.xlu0 %v1687, 120
        %v1695 = vpop.permute.xlu0 %1694
        %v1696 = vlaneseq
        %v1697 = vshrl.u32 %v1696, 7
        %v1698 = vsub.s32 0, %v1697
        %v1699 = vrot.slane %v1359, %v1698
        %v1700 = vmul.f32 %v1689, %v1699
        %v1701 = vmul.f32 %v1691, %v1699
        %v1702 = vmul.f32 %v1693, %v1699
        %v1703 = vmul.f32 %v1695, %v1699
        %v1704 = vadd.f32 %v1592, %v1700
        %v1705 = vadd.f32 %v1593, %v1701
        %v1706 = vadd.f32 %v1594, %v1702
        %v1707 = vadd.f32 %v1595, %v1703
        %v1708 = vld [vmem:[%s17] sm:$0xff]
        %v1709 = vld [vmem:[%s17 + $0x8] sm:$0xff]
        %v1710 = vld [vmem:[%s17 + $0x10] sm:$0xff]
        %v1711 = vld [vmem:[%s17 + $0x18] sm:$0xff]
        %1713 = vset.pattern.permute.xlu0 0
        %1714 = vperm.xlu0 %1713, %v1708
        %v1715 = vpop.permute.xlu0 %1714
        %1718 = vset.pattern.permute.xlu0 0
        %1719 = vperm.xlu0 %1718, %v1709
        %v1720 = vpop.permute.xlu0 %1719
        %1723 = vset.pattern.permute.xlu0 0
        %1724 = vperm.xlu0 %1723, %v1710
        %v1725 = vpop.permute.xlu0 %1724
        %1728 = vset.pattern.permute.xlu0 0
        %1729 = vperm.xlu0 %1728, %v1711
        %v1730 = vpop.permute.xlu0 %1729
        %v1732 = vadd.f32 %v1704, %v1715
        %v1733 = vadd.f32 %v1705, %v1720
        %v1734 = vadd.f32 %v1706, %v1725
        %v1735 = vadd.f32 %v1707, %v1730
        %v1736 = vmax.f32 %v1732, 0.0
        %v1737 = vmax.f32 %v1733, 0.0
        %v1738 = vmax.f32 %v1734, 0.0
        %v1739 = vmax.f32 %v1735, 0.0
        %v1740 = vld [vmem:[%s18] sm:$0xff]
        %v1741 = vld [vmem:[%s18 + $0x8] sm:$0xff]
        %v1742 = vld [vmem:[%s18 + $0x10] sm:$0xff]
        %v1743 = vld [vmem:[%s18 + $0x18] sm:$0xff]
        %v1744 = vld [vmem:[%s22] sm:$0xff]
        %v1745 = vld [vmem:[%s22 + $0x8] sm:$0xff]
        %v1746 = vld [vmem:[%s22 + $0x10] sm:$0xff]
        %v1747 = vld [vmem:[%s22 + $0x18] sm:$0xff]
        %v1748 = vld [vmem:[%s22 + $0x20] sm:$0xff]
        %v1749 = vld [vmem:[%s22 + $0x28] sm:$0xff]
        %v1750 = vld [vmem:[%s22 + $0x30] sm:$0xff]
        %v1751 = vld [vmem:[%s22 + $0x38] sm:$0xff]
        %v1752 = vld [vmem:[%s22 + $0x40] sm:$0xff]
        %v1753 = vld [vmem:[%s22 + $0x48] sm:$0xff]
        %v1754 = vld [vmem:[%s22 + $0x50] sm:$0xff]
        %v1755 = vld [vmem:[%s22 + $0x58] sm:$0xff]
        %v1756 = vld [vmem:[%s22 + $0x60] sm:$0xff]
        %v1757 = vld [vmem:[%s22 + $0x68] sm:$0xff]
        %v1758 = vld [vmem:[%s22 + $0x70] sm:$0xff]
        %v1759 = vld [vmem:[%s22 + $0x78] sm:$0xff]
        %1760 = vmatprep.subr.mxu0 0.0
        %1761 = vmatpush1.msra.mxu0 %v1759
        %1762 = vmatprep.subr.mxu0 0.0
        %1763 = vmatpush1.msra.mxu0 %v1758
        %1764 = vmatprep.subr.mxu0 0.0
        %1765 = vmatpush1.msra.mxu0 %v1757
        %1766 = vmatprep.subr.mxu0 0.0
        %1767 = vmatpush1.msra.mxu0 %v1756
        %1768 = vmatprep.subr.mxu0 0.0
        %1769 = vmatpush1.msra.mxu0 %v1755
        %1770 = vmatprep.subr.mxu0 0.0
        %1771 = vmatpush1.msra.mxu0 %v1754
        %1772 = vmatprep.subr.mxu0 0.0
        %1773 = vmatpush1.msra.mxu0 %v1753
        %1774 = vmatprep.subr.mxu0 0.0
        %1775 = vmatpush1.msra.mxu0 %v1752
        %1776 = vmatprep.subr.mxu0 0.0
        %1777 = vmatpush1.msra.mxu0 %v1751
        %1778 = vmatprep.subr.mxu0 0.0
        %1779 = vmatpush1.msra.mxu0 %v1750
        %1780 = vmatprep.subr.mxu0 0.0
        %1781 = vmatpush1.msra.mxu0 %v1749
        %1782 = vmatprep.subr.mxu0 0.0
        %1783 = vmatpush1.msra.mxu0 %v1748
        %1784 = vmatprep.subr.mxu0 0.0
        %1785 = vmatpush1.msra.mxu0 %v1747
        %1786 = vmatprep.subr.mxu0 0.0
        %1787 = vmatpush1.msra.mxu0 %v1746
        %1788 = vmatprep.subr.mxu0 0.0
        %1789 = vmatpush1.msra.mxu0 %v1745
        %1790 = vmatprep.subr.mxu0 0.0
        %1791 = vmatpush1.msra.mxu0 %v1744
        %1792 = vmatprep.subr.mxu0 0.0
        %1793 = vmatpush2.msra.mxu0 0.0
        %1794 = vmatprep.subr.mxu0 0.0
        %1795 = vmatpush2.msra.mxu0 0.0
        %1796 = vmatprep.subr.mxu0 0.0
        %1797 = vmatpush2.msra.mxu0 0.0
        %1798 = vmatprep.subr.mxu0 0.0
        %1799 = vmatpush2.msra.mxu0 0.0
        %1800 = vmatprep.subr.mxu0 0.0
        %1801 = vmatpush2.msra.mxu0 0.0
        %1802 = vmatprep.subr.mxu0 0.0
        %1803 = vmatpush2.msra.mxu0 0.0
        %1804 = vmatprep.subr.mxu0 0.0
        %1805 = vmatpush2.msra.mxu0 0.0
        %1806 = vmatprep.subr.mxu0 0.0
        %1807 = vmatpush2.msra.mxu0 0.0
        %1808 = vmatprep.subr.mxu0 0.0
        %1809 = vmatpush2.msra.mxu0 0.0
        %1810 = vmatprep.subr.mxu0 0.0
        %1811 = vmatpush2.msra.mxu0 0.0
        %1812 = vmatprep.subr.mxu0 0.0
        %1813 = vmatpush2.msra.mxu0 0.0
        %1814 = vmatprep.subr.mxu0 0.0
        %1815 = vmatpush2.msra.mxu0 0.0
        %1816 = vmatprep.subr.mxu0 0.0
        %1817 = vmatpush2.msra.mxu0 0.0
        %1818 = vmatprep.subr.mxu0 0.0
        %1819 = vmatpush2.msra.mxu0 0.0
        %1820 = vmatprep.subr.mxu0 0.0
        %1821 = vmatpush2.msra.mxu0 0.0
        %1822 = vmatprep.subr.mxu0 0.0
        %1823 = vmatpush2.msra.mxu0 0.0
        %1824 = vmatprep.mubr.f32.mxu0 0.0
        %1825 = vmatmul.mubr.f32.gmra.mxu0 %v1736
        %v1826 = vpop.f32.mrf.mxu0
        %v1827 = vadd.f32 0.0, %v1826
        %v1828 = vpop.f32.mrf.mxu0
        %1829 = vmatprep.mubr.f32.mxu0 0.0
        %1830 = vmatmul.mubr.f32.gmra.mxu0 %v1737
        %v1831 = vpop.f32.mrf.mxu0
        %v1832 = vadd.f32 0.0, %v1831
        %v1833 = vpop.f32.mrf.mxu0
        %1834 = vmatprep.mubr.f32.mxu0 0.0
        %1835 = vmatmul.mubr.f32.gmra.mxu0 %v1738
        %v1836 = vpop.f32.mrf.mxu0
        %v1837 = vadd.f32 0.0, %v1836
        %v1838 = vpop.f32.mrf.mxu0
        %1839 = vmatprep.mubr.f32.mxu0 0.0
        %1840 = vmatmul.mubr.f32.gmra.mxu0 %v1739
        %v1841 = vpop.f32.mrf.mxu0
        %v1842 = vadd.f32 0.0, %v1841
        %v1843 = vpop.f32.mrf.mxu0
        %1844 = vdwg.mxu0
        %vm1845 = vcmask 261120
        %v1847 = vsel %vm1845, %v1740, 0
        %v1850 = vsel %vm1845, %v1741, 0
        %v1853 = vsel %vm1845, %v1742, 0
        %v1856 = vsel %vm1845, %v1743, 0
        %1858 = vmatprep.subr.mxu0 0.0
        %1859 = vmatpush1.msra.mxu0 0.0
        %1860 = vmatprep.subr.mxu0 0.0
        %1861 = vmatpush1.msra.mxu0 0.0
        %1862 = vmatprep.subr.mxu0 0.0
        %1863 = vmatpush1.msra.mxu0 0.0
        %1864 = vmatprep.subr.mxu0 0.0
        %1865 = vmatpush1.msra.mxu0 0.0
        %1866 = vmatprep.subr.mxu0 0.0
        %1867 = vmatpush1.msra.mxu0 0.0
        %1868 = vmatprep.subr.mxu0 0.0
        %1869 = vmatpush1.msra.mxu0 0.0
        %1870 = vmatprep.subr.mxu0 0.0
        %1871 = vmatpush1.msra.mxu0 0.0
        %1872 = vmatprep.subr.mxu0 0.0
        %1873 = vmatpush1.msra.mxu0 0.0
        %1874 = vmatprep.subr.mxu0 0.0
        %1875 = vmatpush1.msra.mxu0 0.0
        %1876 = vmatprep.subr.mxu0 0.0
        %1877 = vmatpush1.msra.mxu0 0.0
        %1878 = vmatprep.subr.mxu0 0.0
        %1879 = vmatpush1.msra.mxu0 0.0
        %1880 = vmatprep.subr.mxu0 0.0
        %1881 = vmatpush1.msra.mxu0 0.0
        %1882 = vmatprep.subr.mxu0 0.0
        %1883 = vmatpush1.msra.mxu0 %v1842
        %1884 = vmatprep.subr.mxu0 0.0
        %1885 = vmatpush1.msra.mxu0 %v1837
        %1886 = vmatprep.subr.mxu0 0.0
        %1887 = vmatpush1.msra.mxu0 %v1832
        %1888 = vmatprep.subr.mxu0 0.0
        %1889 = vmatpush1.msra.mxu0 %v1827
        %1890 = vmatprep.subr.mxu0 0.0
        %1891 = vmatpush2.msra.mxu0 0.0
        %1892 = vmatprep.subr.mxu0 0.0
        %1893 = vmatpush2.msra.mxu0 0.0
        %1894 = vmatprep.subr.mxu0 0.0
        %1895 = vmatpush2.msra.mxu0 0.0
        %1896 = vmatprep.subr.mxu0 0.0
        %1897 = vmatpush2.msra.mxu0 0.0
        %1898 = vmatprep.subr.mxu0 0.0
        %1899 = vmatpush2.msra.mxu0 0.0
        %1900 = vmatprep.subr.mxu0 0.0
        %1901 = vmatpush2.msra.mxu0 0.0
        %1902 = vmatprep.subr.mxu0 0.0
        %1903 = vmatpush2.msra.mxu0 0.0
        %1904 = vmatprep.subr.mxu0 0.0
        %1905 = vmatpush2.msra.mxu0 0.0
        %1906 = vmatprep.subr.mxu0 0.0
        %1907 = vmatpush2.msra.mxu0 0.0
        %1908 = vmatprep.subr.mxu0 0.0
        %1909 = vmatpush2.msra.mxu0 0.0
        %1910 = vmatprep.subr.mxu0 0.0
        %1911 = vmatpush2.msra.mxu0 0.0
        %1912 = vmatprep.subr.mxu0 0.0
        %1913 = vmatpush2.msra.mxu0 0.0
        %1914 = vmatprep.subr.mxu0 0.0
        %1915 = vmatpush2.msra.mxu0 0.0
        %1916 = vmatprep.subr.mxu0 0.0
        %1917 = vmatpush2.msra.mxu0 0.0
        %1918 = vmatprep.subr.mxu0 0.0
        %1919 = vmatpush2.msra.mxu0 0.0
        %1920 = vmatprep.subr.mxu0 0.0
        %1921 = vmatpush2.msra.mxu0 0.0
        %1922 = vmatprep.mubr.f32.mxu0 0.0
        %1923 = vmatmul.mubr.f32.gmra.mxu0 %v1847
        %v1924 = vpop.f32.mrf.mxu0
        %v1925 = vadd.f32 %v1736, %v1924
        %v1926 = vpop.f32.mrf.mxu0
        %1927 = vmatprep.mubr.f32.mxu0 0.0
        %1928 = vmatmul.mubr.f32.gmra.mxu0 %v1850
        %v1929 = vpop.f32.mrf.mxu0
        %v1930 = vadd.f32 %v1737, %v1929
        %v1931 = vpop.f32.mrf.mxu0
        %1932 = vmatprep.mubr.f32.mxu0 0.0
        %1933 = vmatmul.mubr.f32.gmra.mxu0 %v1853
        %v1934 = vpop.f32.mrf.mxu0
        %v1935 = vadd.f32 %v1738, %v1934
        %v1936 = vpop.f32.mrf.mxu0
        %1937 = vmatprep.mubr.f32.mxu0 0.0
        %1938 = vmatmul.mubr.f32.gmra.mxu0 %v1856
        %v1939 = vpop.f32.mrf.mxu0
        %v1940 = vadd.f32 %v1739, %v1939
        %v1941 = vpop.f32.mrf.mxu0
        %1942 = vdwg.mxu0
        %1943 = vrot.lane.b32.xlu0 %v1925, 1
        %v1944 = vpop.permute.xlu0 %1943
        %1945 = vrot.lane.b32.xlu0 %v1930, 1
        %v1946 = vpop.permute.xlu0 %1945
        %1947 = vrot.lane.b32.xlu0 %v1935, 1
        %v1948 = vpop.permute.xlu0 %1947
        %1949 = vrot.lane.b32.xlu0 %v1940, 1
        %v1950 = vpop.permute.xlu0 %1949
        %v1951 = vmul.f32 %v1944, %v1371
        %v1952 = vmul.f32 %v1946, %v1371
        %v1953 = vmul.f32 %v1948, %v1371
        %v1954 = vmul.f32 %v1950, %v1371
        %1955 = vrot.lane.b32.xlu0 %v1925, 127
        %v1956 = vpop.permute.xlu0 %1955
        %1957 = vrot.lane.b32.xlu0 %v1930, 127
        %v1958 = vpop.permute.xlu0 %1957
        %1959 = vrot.lane.b32.xlu0 %v1935, 127
        %v1960 = vpop.permute.xlu0 %1959
        %1961 = vrot.lane.b32.xlu0 %v1940, 127
        %v1962 = vpop.permute.xlu0 %1961
        %v1963 = vmul.f32 %v1956, %v1387
        %v1964 = vmul.f32 %v1958, %v1387
        %v1965 = vmul.f32 %v1960, %v1387
        %v1966 = vmul.f32 %v1962, %v1387
        %v1967 = vld [vmem:[%s19 + $0x60] sm:$0xff]
        %v1968 = vld [vmem:[%s19 + $0x68] sm:$0xff]
        %v1969 = vld [vmem:[%s19 + $0x70] sm:$0xff]
        %v1970 = vld [vmem:[%s19 + $0x78] sm:$0xff]
        %1972 = vset.pattern.permute.xlu0 0
        %1973 = vperm.xlu0 %1972, %v1967
        %v1974 = vpop.permute.xlu0 %1973
        %1977 = vset.pattern.permute.xlu0 0
        %1978 = vperm.xlu0 %1977, %v1968
        %v1979 = vpop.permute.xlu0 %1978
        %1982 = vset.pattern.permute.xlu0 0
        %1983 = vperm.xlu0 %1982, %v1969
        %v1984 = vpop.permute.xlu0 %1983
        %1987 = vset.pattern.permute.xlu0 0
        %1988 = vperm.xlu0 %1987, %v1970
        %v1989 = vpop.permute.xlu0 %1988
        %v1991 = vmul.f32 %v1951, %v1974
        %v1992 = vmul.f32 %v1952, %v1979
        %v1993 = vmul.f32 %v1953, %v1984
        %v1994 = vmul.f32 %v1954, %v1989
        %v1995 = vld [vmem:[%s19 + $0x80] sm:$0xff]
        %v1996 = vld [vmem:[%s19 + $0x88] sm:$0xff]
        %v1997 = vld [vmem:[%s19 + $0x90] sm:$0xff]
        %v1998 = vld [vmem:[%s19 + $0x98] sm:$0xff]
        %2000 = vset.pattern.permute.xlu0 0
        %2001 = vperm.xlu0 %2000, %v1995
        %v2002 = vpop.permute.xlu0 %2001
        %2005 = vset.pattern.permute.xlu0 0
        %2006 = vperm.xlu0 %2005, %v1996
        %v2007 = vpop.permute.xlu0 %2006
        %2010 = vset.pattern.permute.xlu0 0
        %2011 = vperm.xlu0 %2010, %v1997
        %v2012 = vpop.permute.xlu0 %2011
        %2015 = vset.pattern.permute.xlu0 0
        %2016 = vperm.xlu0 %2015, %v1998
        %v2017 = vpop.permute.xlu0 %2016
        %v2019 = vmul.f32 %v1925, %v2002
        %v2020 = vmul.f32 %v1930, %v2007
        %v2021 = vmul.f32 %v1935, %v2012
        %v2022 = vmul.f32 %v1940, %v2017
        %v2023 = vadd.f32 %v1991, %v2019
        %v2024 = vadd.f32 %v1992, %v2020
        %v2025 = vadd.f32 %v1993, %v2021
        %v2026 = vadd.f32 %v1994, %v2022
        %v2027 = vld [vmem:[%s19 + $0xa0] sm:$0xff]
        %v2028 = vld [vmem:[%s19 + $0xa8] sm:$0xff]
        %v2029 = vld [vmem:[%s19 + $0xb0] sm:$0xff]
        %v2030 = vld [vmem:[%s19 + $0xb8] sm:$0xff]
        %2032 = vset.pattern.permute.xlu0 0
        %2033 = vperm.xlu0 %2032, %v2027
        %v2034 = vpop.permute.xlu0 %2033
        %2037 = vset.pattern.permute.xlu0 0
        %2038 = vperm.xlu0 %2037, %v2028
        %v2039 = vpop.permute.xlu0 %2038
        %2042 = vset.pattern.permute.xlu0 0
        %2043 = vperm.xlu0 %2042, %v2029
        %v2044 = vpop.permute.xlu0 %2043
        %2047 = vset.pattern.permute.xlu0 0
        %2048 = vperm.xlu0 %2047, %v2030
        %v2049 = vpop.permute.xlu0 %2048
        %v2051 = vmul.f32 %v1963, %v2034
        %v2052 = vmul.f32 %v1964, %v2039
        %v2053 = vmul.f32 %v1965, %v2044
        %v2054 = vmul.f32 %v1966, %v2049
        %v2055 = vadd.f32 %v2023, %v2051
        %v2056 = vadd.f32 %v2024, %v2052
        %v2057 = vadd.f32 %v2025, %v2053
        %v2058 = vadd.f32 %v2026, %v2054
        %v2059 = vld [vmem:[%s19] sm:$0xff]
        %v2060 = vld [vmem:[%s19 + $0x8] sm:$0xff]
        %v2061 = vld [vmem:[%s19 + $0x10] sm:$0xff]
        %v2062 = vld [vmem:[%s19 + $0x18] sm:$0xff]
        %2064 = vset.pattern.permute.xlu0 0
        %2065 = vperm.xlu0 %2064, %v2059
        %v2066 = vpop.permute.xlu0 %2065
        %2069 = vset.pattern.permute.xlu0 0
        %2070 = vperm.xlu0 %2069, %v2060
        %v2071 = vpop.permute.xlu0 %2070
        %2074 = vset.pattern.permute.xlu0 0
        %2075 = vperm.xlu0 %2074, %v2061
        %v2076 = vpop.permute.xlu0 %2075
        %2079 = vset.pattern.permute.xlu0 0
        %2080 = vperm.xlu0 %2079, %v2062
        %v2081 = vpop.permute.xlu0 %2080
        %v2083 = vmul.f32 %v1951, %v2066
        %v2084 = vmul.f32 %v1952, %v2071
        %v2085 = vmul.f32 %v1953, %v2076
        %v2086 = vmul.f32 %v1954, %v2081
        %v2087 = vld [vmem:[%s19 + $0x20] sm:$0xff]
        %v2088 = vld [vmem:[%s19 + $0x28] sm:$0xff]
        %v2089 = vld [vmem:[%s19 + $0x30] sm:$0xff]
        %v2090 = vld [vmem:[%s19 + $0x38] sm:$0xff]
        %2092 = vset.pattern.permute.xlu0 0
        %2093 = vperm.xlu0 %2092, %v2087
        %v2094 = vpop.permute.xlu0 %2093
        %2097 = vset.pattern.permute.xlu0 0
        %2098 = vperm.xlu0 %2097, %v2088
        %v2099 = vpop.permute.xlu0 %2098
        %2102 = vset.pattern.permute.xlu0 0
        %2103 = vperm.xlu0 %2102, %v2089
        %v2104 = vpop.permute.xlu0 %2103
        %2107 = vset.pattern.permute.xlu0 0
        %2108 = vperm.xlu0 %2107, %v2090
        %v2109 = vpop.permute.xlu0 %2108
        %v2111 = vmul.f32 %v1925, %v2094
        %v2112 = vmul.f32 %v1930, %v2099
        %v2113 = vmul.f32 %v1935, %v2104
        %v2114 = vmul.f32 %v1940, %v2109
        %v2115 = vadd.f32 %v2083, %v2111
        %v2116 = vadd.f32 %v2084, %v2112
        %v2117 = vadd.f32 %v2085, %v2113
        %v2118 = vadd.f32 %v2086, %v2114
        %v2119 = vld [vmem:[%s19 + $0x40] sm:$0xff]
        %v2120 = vld [vmem:[%s19 + $0x48] sm:$0xff]
        %v2121 = vld [vmem:[%s19 + $0x50] sm:$0xff]
        %v2122 = vld [vmem:[%s19 + $0x58] sm:$0xff]
        %2124 = vset.pattern.permute.xlu0 0
        %2125 = vperm.xlu0 %2124, %v2119
        %v2126 = vpop.permute.xlu0 %2125
        %2129 = vset.pattern.permute.xlu0 0
        %2130 = vperm.xlu0 %2129, %v2120
        %v2131 = vpop.permute.xlu0 %2130
        %2134 = vset.pattern.permute.xlu0 0
        %2135 = vperm.xlu0 %2134, %v2121
        %v2136 = vpop.permute.xlu0 %2135
        %2139 = vset.pattern.permute.xlu0 0
        %2140 = vperm.xlu0 %2139, %v2122
        %v2141 = vpop.permute.xlu0 %2140
        %v2143 = vmul.f32 %v1963, %v2126
        %v2144 = vmul.f32 %v1964, %v2131
        %v2145 = vmul.f32 %v1965, %v2136
        %v2146 = vmul.f32 %v1966, %v2141
        %v2147 = vadd.f32 %v2115, %v2143
        %v2148 = vadd.f32 %v2116, %v2144
        %v2149 = vadd.f32 %v2117, %v2145
        %v2150 = vadd.f32 %v2118, %v2146
        %2151 = vrot.lane.b32.xlu0 %v2147, 8
        %v2152 = vpop.permute.xlu0 %2151
        %2153 = vrot.lane.b32.xlu0 %v2148, 8
        %v2154 = vpop.permute.xlu0 %2153
        %2155 = vrot.lane.b32.xlu0 %v2149, 8
        %v2156 = vpop.permute.xlu0 %2155
        %2157 = vrot.lane.b32.xlu0 %v2150, 8
        %v2158 = vpop.permute.xlu0 %2157
        %v2159 = vmul.f32 %v2152, %v1587
        %v2160 = vmul.f32 %v2154, %v1587
        %v2161 = vmul.f32 %v2156, %v1587
        %v2162 = vmul.f32 %v2158, %v1587
        %v2163 = vadd.f32 %v2055, %v2159
        %v2164 = vadd.f32 %v2056, %v2160
        %v2165 = vadd.f32 %v2057, %v2161
        %v2166 = vadd.f32 %v2058, %v2162
        %v2167 = vld [vmem:[%s19 + $0xc0] sm:$0xff]
        %v2168 = vld [vmem:[%s19 + $0xc8] sm:$0xff]
        %v2169 = vld [vmem:[%s19 + $0xd0] sm:$0xff]
        %v2170 = vld [vmem:[%s19 + $0xd8] sm:$0xff]
        %2172 = vset.pattern.permute.xlu0 0
        %2173 = vperm.xlu0 %2172, %v2167
        %v2174 = vpop.permute.xlu0 %2173
        %2177 = vset.pattern.permute.xlu0 0
        %2178 = vperm.xlu0 %2177, %v2168
        %v2179 = vpop.permute.xlu0 %2178
        %2182 = vset.pattern.permute.xlu0 0
        %2183 = vperm.xlu0 %2182, %v2169
        %v2184 = vpop.permute.xlu0 %2183
        %2187 = vset.pattern.permute.xlu0 0
        %2188 = vperm.xlu0 %2187, %v2170
        %v2189 = vpop.permute.xlu0 %2188
        %v2191 = vmul.f32 %v1951, %v2174
        %v2192 = vmul.f32 %v1952, %v2179
        %v2193 = vmul.f32 %v1953, %v2184
        %v2194 = vmul.f32 %v1954, %v2189
        %v2195 = vld [vmem:[%s19 + $0xe0] sm:$0xff]
        %v2196 = vld [vmem:[%s19 + $0xe8] sm:$0xff]
        %v2197 = vld [vmem:[%s19 + $0xf0] sm:$0xff]
        %v2198 = vld [vmem:[%s19 + $0xf8] sm:$0xff]
        %2200 = vset.pattern.permute.xlu0 0
        %2201 = vperm.xlu0 %2200, %v2195
        %v2202 = vpop.permute.xlu0 %2201
        %2205 = vset.pattern.permute.xlu0 0
        %2206 = vperm.xlu0 %2205, %v2196
        %v2207 = vpop.permute.xlu0 %2206
        %2210 = vset.pattern.permute.xlu0 0
        %2211 = vperm.xlu0 %2210, %v2197
        %v2212 = vpop.permute.xlu0 %2211
        %2215 = vset.pattern.permute.xlu0 0
        %2216 = vperm.xlu0 %2215, %v2198
        %v2217 = vpop.permute.xlu0 %2216
        %v2219 = vmul.f32 %v1925, %v2202
        %v2220 = vmul.f32 %v1930, %v2207
        %v2221 = vmul.f32 %v1935, %v2212
        %v2222 = vmul.f32 %v1940, %v2217
        %v2223 = vadd.f32 %v2191, %v2219
        %v2224 = vadd.f32 %v2192, %v2220
        %v2225 = vadd.f32 %v2193, %v2221
        %v2226 = vadd.f32 %v2194, %v2222
        %v2227 = vld [vmem:[%s19 + $0x100] sm:$0xff]
        %v2228 = vld [vmem:[%s19 + $0x108] sm:$0xff]
        %v2229 = vld [vmem:[%s19 + $0x110] sm:$0xff]
        %v2230 = vld [vmem:[%s19 + $0x118] sm:$0xff]
        %2232 = vset.pattern.permute.xlu0 0
        %2233 = vperm.xlu0 %2232, %v2227
        %v2234 = vpop.permute.xlu0 %2233
        %2237 = vset.pattern.permute.xlu0 0
        %2238 = vperm.xlu0 %2237, %v2228
        %v2239 = vpop.permute.xlu0 %2238
        %2242 = vset.pattern.permute.xlu0 0
        %2243 = vperm.xlu0 %2242, %v2229
        %v2244 = vpop.permute.xlu0 %2243
        %2247 = vset.pattern.permute.xlu0 0
        %2248 = vperm.xlu0 %2247, %v2230
        %v2249 = vpop.permute.xlu0 %2248
        %v2251 = vmul.f32 %v1963, %v2234
        %v2252 = vmul.f32 %v1964, %v2239
        %v2253 = vmul.f32 %v1965, %v2244
        %v2254 = vmul.f32 %v1966, %v2249
        %v2255 = vadd.f32 %v2223, %v2251
        %v2256 = vadd.f32 %v2224, %v2252
        %v2257 = vadd.f32 %v2225, %v2253
        %v2258 = vadd.f32 %v2226, %v2254
        %2259 = vrot.lane.b32.xlu0 %v2255, 120
        %v2260 = vpop.permute.xlu0 %2259
        %2261 = vrot.lane.b32.xlu0 %v2256, 120
        %v2262 = vpop.permute.xlu0 %2261
        %2263 = vrot.lane.b32.xlu0 %v2257, 120
        %v2264 = vpop.permute.xlu0 %2263
        %2265 = vrot.lane.b32.xlu0 %v2258, 120
        %v2266 = vpop.permute.xlu0 %2265
        %v2267 = vmul.f32 %v2260, %v1699
        %v2268 = vmul.f32 %v2262, %v1699
        %v2269 = vmul.f32 %v2264, %v1699
        %v2270 = vmul.f32 %v2266, %v1699
        %v2271 = vadd.f32 %v2163, %v2267
        %v2272 = vadd.f32 %v2164, %v2268
        %v2273 = vadd.f32 %v2165, %v2269
        %v2274 = vadd.f32 %v2166, %v2270
        %v2275 = vld [vmem:[%s20] sm:$0xff]
        %v2276 = vld [vmem:[%s20 + $0x8] sm:$0xff]
        %v2277 = vld [vmem:[%s20 + $0x10] sm:$0xff]
        %v2278 = vld [vmem:[%s20 + $0x18] sm:$0xff]
        %2280 = vset.pattern.permute.xlu0 0
        %2281 = vperm.xlu0 %2280, %v2275
        %v2282 = vpop.permute.xlu0 %2281
        %2285 = vset.pattern.permute.xlu0 0
        %2286 = vperm.xlu0 %2285, %v2276
        %v2287 = vpop.permute.xlu0 %2286
        %2290 = vset.pattern.permute.xlu0 0
        %2291 = vperm.xlu0 %2290, %v2277
        %v2292 = vpop.permute.xlu0 %2291
        %2295 = vset.pattern.permute.xlu0 0
        %2296 = vperm.xlu0 %2295, %v2278
        %v2297 = vpop.permute.xlu0 %2296
        %v2299 = vadd.f32 %v2271, %v2282
        %v2300 = vadd.f32 %v2272, %v2287
        %v2301 = vadd.f32 %v2273, %v2292
        %v2302 = vadd.f32 %v2274, %v2297
        %v2303 = vld [vmem:[%s21] sm:$0xff]
        %v2304 = vld [vmem:[%s21 + $0x8] sm:$0xff]
        %v2305 = vld [vmem:[%s21 + $0x10] sm:$0xff]
        %v2306 = vld [vmem:[%s21 + $0x18] sm:$0xff]
        %2307 = vmatprep.subr.mxu0 0.0
        %2308 = vmatpush1.msra.mxu0 %v1759
        %2309 = vmatprep.subr.mxu0 0.0
        %2310 = vmatpush1.msra.mxu0 %v1758
        %2311 = vmatprep.subr.mxu0 0.0
        %2312 = vmatpush1.msra.mxu0 %v1757
        %2313 = vmatprep.subr.mxu0 0.0
        %2314 = vmatpush1.msra.mxu0 %v1756
        %2315 = vmatprep.subr.mxu0 0.0
        %2316 = vmatpush1.msra.mxu0 %v1755
        %2317 = vmatprep.subr.mxu0 0.0
        %2318 = vmatpush1.msra.mxu0 %v1754
        %2319 = vmatprep.subr.mxu0 0.0
        %2320 = vmatpush1.msra.mxu0 %v1753
        %2321 = vmatprep.subr.mxu0 0.0
        %2322 = vmatpush1.msra.mxu0 %v1752
        %2323 = vmatprep.subr.mxu0 0.0
        %2324 = vmatpush1.msra.mxu0 %v1751
        %2325 = vmatprep.subr.mxu0 0.0
        %2326 = vmatpush1.msra.mxu0 %v1750
        %2327 = vmatprep.subr.mxu0 0.0
        %2328 = vmatpush1.msra.mxu0 %v1749
        %2329 = vmatprep.subr.mxu0 0.0
        %2330 = vmatpush1.msra.mxu0 %v1748
        %2331 = vmatprep.subr.mxu0 0.0
        %2332 = vmatpush1.msra.mxu0 %v1747
        %2333 = vmatprep.subr.mxu0 0.0
        %2334 = vmatpush1.msra.mxu0 %v1746
        %2335 = vmatprep.subr.mxu0 0.0
        %2336 = vmatpush1.msra.mxu0 %v1745
        %2337 = vmatprep.subr.mxu0 0.0
        %2338 = vmatpush1.msra.mxu0 %v1744
        %2339 = vmatprep.subr.mxu0 0.0
        %2340 = vmatpush2.msra.mxu0 0.0
        %2341 = vmatprep.subr.mxu0 0.0
        %2342 = vmatpush2.msra.mxu0 0.0
        %2343 = vmatprep.subr.mxu0 0.0
        %2344 = vmatpush2.msra.mxu0 0.0
        %2345 = vmatprep.subr.mxu0 0.0
        %2346 = vmatpush2.msra.mxu0 0.0
        %2347 = vmatprep.subr.mxu0 0.0
        %2348 = vmatpush2.msra.mxu0 0.0
        %2349 = vmatprep.subr.mxu0 0.0
        %2350 = vmatpush2.msra.mxu0 0.0
        %2351 = vmatprep.subr.mxu0 0.0
        %2352 = vmatpush2.msra.mxu0 0.0
        %2353 = vmatprep.subr.mxu0 0.0
        %2354 = vmatpush2.msra.mxu0 0.0
        %2355 = vmatprep.subr.mxu0 0.0
        %2356 = vmatpush2.msra.mxu0 0.0
        %2357 = vmatprep.subr.mxu0 0.0
        %2358 = vmatpush2.msra.mxu0 0.0
        %2359 = vmatprep.subr.mxu0 0.0
        %2360 = vmatpush2.msra.mxu0 0.0
        %2361 = vmatprep.subr.mxu0 0.0
        %2362 = vmatpush2.msra.mxu0 0.0
        %2363 = vmatprep.subr.mxu0 0.0
        %2364 = vmatpush2.msra.mxu0 0.0
        %2365 = vmatprep.subr.mxu0 0.0
        %2366 = vmatpush2.msra.mxu0 0.0
        %2367 = vmatprep.subr.mxu0 0.0
        %2368 = vmatpush2.msra.mxu0 0.0
        %2369 = vmatprep.subr.mxu0 0.0
        %2370 = vmatpush2.msra.mxu0 0.0
        %2371 = vmatprep.mubr.f32.mxu0 0.0
        %2372 = vmatmul.mubr.f32.gmra.mxu0 %v2299
        %v2373 = vpop.f32.mrf.mxu0
        %v2374 = vadd.f32 0.0, %v2373
        %v2375 = vpop.f32.mrf.mxu0
        %2376 = vmatprep.mubr.f32.mxu0 0.0
        %2377 = vmatmul.mubr.f32.gmra.mxu0 %v2300
        %v2378 = vpop.f32.mrf.mxu0
        %v2379 = vadd.f32 0.0, %v2378
        %v2380 = vpop.f32.mrf.mxu0
        %2381 = vmatprep.mubr.f32.mxu0 0.0
        %2382 = vmatmul.mubr.f32.gmra.mxu0 %v2301
        %v2383 = vpop.f32.mrf.mxu0
        %v2384 = vadd.f32 0.0, %v2383
        %v2385 = vpop.f32.mrf.mxu0
        %2386 = vmatprep.mubr.f32.mxu0 0.0
        %2387 = vmatmul.mubr.f32.gmra.mxu0 %v2302
        %v2388 = vpop.f32.mrf.mxu0
        %v2389 = vadd.f32 0.0, %v2388
        %v2390 = vpop.f32.mrf.mxu0
        %2391 = vdwg.mxu0
        %v2393 = vsel %vm1845, %v2303, 0
        %v2396 = vsel %vm1845, %v2304, 0
        %v2399 = vsel %vm1845, %v2305, 0
        %v2402 = vsel %vm1845, %v2306, 0
        %2404 = vmatprep.subr.mxu0 0.0
        %2405 = vmatpush1.msra.mxu0 0.0
        %2406 = vmatprep.subr.mxu0 0.0
        %2407 = vmatpush1.msra.mxu0 0.0
        %2408 = vmatprep.subr.mxu0 0.0
        %2409 = vmatpush1.msra.mxu0 0.0
        %2410 = vmatprep.subr.mxu0 0.0
        %2411 = vmatpush1.msra.mxu0 0.0
        %2412 = vmatprep.subr.mxu0 0.0
        %2413 = vmatpush1.msra.mxu0 0.0
        %2414 = vmatprep.subr.mxu0 0.0
        %2415 = vmatpush1.msra.mxu0 0.0
        %2416 = vmatprep.subr.mxu0 0.0
        %2417 = vmatpush1.msra.mxu0 0.0
        %2418 = vmatprep.subr.mxu0 0.0
        %2419 = vmatpush1.msra.mxu0 0.0
        %2420 = vmatprep.subr.mxu0 0.0
        %2421 = vmatpush1.msra.mxu0 0.0
        %2422 = vmatprep.subr.mxu0 0.0
        %2423 = vmatpush1.msra.mxu0 0.0
        %2424 = vmatprep.subr.mxu0 0.0
        %2425 = vmatpush1.msra.mxu0 0.0
        %2426 = vmatprep.subr.mxu0 0.0
        %2427 = vmatpush1.msra.mxu0 0.0
        %2428 = vmatprep.subr.mxu0 0.0
        %2429 = vmatpush1.msra.mxu0 %v2389
        %2430 = vmatprep.subr.mxu0 0.0
        %2431 = vmatpush1.msra.mxu0 %v2384
        %2432 = vmatprep.subr.mxu0 0.0
        %2433 = vmatpush1.msra.mxu0 %v2379
        %2434 = vmatprep.subr.mxu0 0.0
        %2435 = vmatpush1.msra.mxu0 %v2374
        %2436 = vmatprep.subr.mxu0 0.0
        %2437 = vmatpush2.msra.mxu0 0.0
        %2438 = vmatprep.subr.mxu0 0.0
        %2439 = vmatpush2.msra.mxu0 0.0
        %2440 = vmatprep.subr.mxu0 0.0
        %2441 = vmatpush2.msra.mxu0 0.0
        %2442 = vmatprep.subr.mxu0 0.0
        %2443 = vmatpush2.msra.mxu0 0.0
        %2444 = vmatprep.subr.mxu0 0.0
        %2445 = vmatpush2.msra.mxu0 0.0
        %2446 = vmatprep.subr.mxu0 0.0
        %2447 = vmatpush2.msra.mxu0 0.0
        %2448 = vmatprep.subr.mxu0 0.0
        %2449 = vmatpush2.msra.mxu0 0.0
        %2450 = vmatprep.subr.mxu0 0.0
        %2451 = vmatpush2.msra.mxu0 0.0
        %2452 = vmatprep.subr.mxu0 0.0
        %2453 = vmatpush2.msra.mxu0 0.0
        %2454 = vmatprep.subr.mxu0 0.0
        %2455 = vmatpush2.msra.mxu0 0.0
        %2456 = vmatprep.subr.mxu0 0.0
        %2457 = vmatpush2.msra.mxu0 0.0
        %2458 = vmatprep.subr.mxu0 0.0
        %2459 = vmatpush2.msra.mxu0 0.0
        %2460 = vmatprep.subr.mxu0 0.0
        %2461 = vmatpush2.msra.mxu0 0.0
        %2462 = vmatprep.subr.mxu0 0.0
        %2463 = vmatpush2.msra.mxu0 0.0
        %2464 = vmatprep.subr.mxu0 0.0
        %2465 = vmatpush2.msra.mxu0 0.0
        %2466 = vmatprep.subr.mxu0 0.0
        %2467 = vmatpush2.msra.mxu0 0.0
        %2468 = vmatprep.mubr.f32.mxu0 0.0
        %2469 = vmatmul.mubr.f32.gmra.mxu0 %v2393
        %v2470 = vpop.f32.mrf.mxu0
        %v2471 = vadd.f32 %v2299, %v2470
        %v2472 = vpop.f32.mrf.mxu0
        %2473 = vmatprep.mubr.f32.mxu0 0.0
        %2474 = vmatmul.mubr.f32.gmra.mxu0 %v2396
        %v2475 = vpop.f32.mrf.mxu0
        %v2476 = vadd.f32 %v2300, %v2475
        %v2477 = vpop.f32.mrf.mxu0
        %2478 = vmatprep.mubr.f32.mxu0 0.0
        %2479 = vmatmul.mubr.f32.gmra.mxu0 %v2399
        %v2480 = vpop.f32.mrf.mxu0
        %v2481 = vadd.f32 %v2301, %v2480
        %v2482 = vpop.f32.mrf.mxu0
        %2483 = vmatprep.mubr.f32.mxu0 0.0
        %2484 = vmatmul.mubr.f32.gmra.mxu0 %v2402
        %v2485 = vpop.f32.mrf.mxu0
        %v2486 = vadd.f32 %v2302, %v2485
        %v2487 = vpop.f32.mrf.mxu0
        %2488 = vdwg.mxu0
        %v2489 = vadd.f32 %v2471, %v854
        %v2490 = vadd.f32 %v2476, %v855
        %v2491 = vadd.f32 %v2481, %v856
        %v2492 = vadd.f32 %v2486, %v857
        %v2493 = vld [vmem:[%s23 + $0x4] sm:$0x1]
        %v2494 = vlaneseq
        %v2495 = vshrl.u32 %v2494, 7
        %v2496 = vsub.s32 0, %v2495
        %v2497 = vrot.slane %v2493, %v2496
        %v2498 = vmul.f32 %v2489, %v2497
        %v2499 = vmul.f32 %v2490, %v2497
        %v2500 = vmul.f32 %v2491, %v2497
        %v2501 = vmul.f32 %v2492, %v2497
        %2502 = vst [vmem:[%s834] sm:$0xff] %v2498
        %2503 = vst [vmem:[%s834 + $0x8] sm:$0xff] %v2499
        %2504 = vst [vmem:[%s834 + $0x10] sm:$0xff] %v2500
        %2505 = vst [vmem:[%s834 + $0x18] sm:$0xff] %v2501
        %v2506 = vld [vmem:[%s15] ss:$8 sm:$0x3]
        %s2507 = scalar_lea.vmem %s15, 1
        %v2508 = vld [vmem:[%s2507] ss:$8 sm:$0x3]
        %s2509 = scalar_lea.vmem %s15, 2
        %v2510 = vld [vmem:[%s2509] ss:$8 sm:$0x3]
        %s2511 = scalar_lea.vmem %s15, 3
        %v2512 = vld [vmem:[%s2511] ss:$8 sm:$0x3]
        %2513 = vrot.lane.b32.xlu0 %v1348, 1
        %v2514 = vpop.permute.xlu0 %2513
        %2515 = vrot.lane.b32.xlu0 %v1350, 1
        %v2516 = vpop.permute.xlu0 %2515
        %2517 = vrot.lane.b32.xlu0 %v1349, 1
        %v2518 = vpop.permute.xlu0 %2517
        %2519 = vrot.lane.b32.xlu0 %v1351, 1
        %v2520 = vpop.permute.xlu0 %2519
        %v2521 = vlaneseq
        %v2522 = vand.u32 %v2521, 127
        %vm2523 = vcmp.lt.s32.totalorder %v2522, 1
        %v2524 = vsel %vm2523, %v2514, %v2518
        %v2525 = vsel %vm2523, %v2516, %v2520
        %v2526 = vsel %vm2523, %v2518, %v2514
        %v2527 = vsel %vm2523, %v2520, %v2516
        %v2529 = vlaneseq
        %v2530 = vshrl.u32 %v2529, 7
        %v2531 = vsub.s32 0, %v2530
        %v2532 = vrot.slane %v2506, %v2531
        %v2533 = vlaneseq
        %v2534 = vshrl.u32 %v2533, 7
        %v2535 = vsub.s32 1, %v2534
        %v2536 = vrot.slane %v2506, %v2535
        %v2539 = vmul.f32 %v2526, %v2532
        %v2540 = vmul.f32 %v2524, %v2536
        %v2541 = vmul.f32 %v2527, %v2532
        %v2542 = vmul.f32 %v2525, %v2536
        %2543 = vrot.lane.b32.xlu0 %v1348, 127
        %v2544 = vpop.permute.xlu0 %2543
        %2545 = vrot.lane.b32.xlu0 %v1350, 127
        %v2546 = vpop.permute.xlu0 %2545
        %2547 = vrot.lane.b32.xlu0 %v1349, 127
        %v2548 = vpop.permute.xlu0 %2547
        %2549 = vrot.lane.b32.xlu0 %v1351, 127
        %v2550 = vpop.permute.xlu0 %2549
        %vm2551 = vcmp.lt.s32.totalorder %v2522, 127
        %v2552 = vsel %vm2551, %v2544, %v2548
        %v2553 = vsel %vm2551, %v2546, %v2550
        %v2554 = vsel %vm2551, %v2548, %v2544
        %v2555 = vsel %vm2551, %v2550, %v2546
        %v2557 = vlaneseq
        %v2558 = vshrl.u32 %v2557, 7
        %v2559 = vsub.s32 0, %v2558
        %v2560 = vrot.slane %v2508, %v2559
        %v2561 = vlaneseq
        %v2562 = vshrl.u32 %v2561, 7
        %v2563 = vsub.s32 1, %v2562
        %v2564 = vrot.slane %v2508, %v2563
        %v2567 = vmul.f32 %v2552, %v2560
        %v2568 = vmul.f32 %v2554, %v2564
        %v2569 = vmul.f32 %v2553, %v2560
        %v2570 = vmul.f32 %v2555, %v2564
        %v2571 = vld [vmem:[%s8 + $0x30] sm:$0xff]
        %v2572 = vld [vmem:[%s8 + $0x38] sm:$0xff]
        %2574 = vset.pattern.permute.xlu0 0
        %2575 = vperm.xlu0 %2574, %v2571
        %v2576 = vpop.permute.xlu0 %2575
        %2579 = vset.pattern.permute.xlu0 0
        %2580 = vperm.xlu0 %2579, %v2572
        %v2581 = vpop.permute.xlu0 %2580
        %v2583 = vmul.f32 %v2539, %v2576
        %v2584 = vmul.f32 %v2540, %v2576
        %v2585 = vmul.f32 %v2541, %v2581
        %v2586 = vmul.f32 %v2542, %v2581
        %v2587 = vld [vmem:[%s8 + $0x40] sm:$0xff]
        %v2588 = vld [vmem:[%s8 + $0x48] sm:$0xff]
        %2590 = vset.pattern.permute.xlu0 0
        %2591 = vperm.xlu0 %2590, %v2587
        %v2592 = vpop.permute.xlu0 %2591
        %2595 = vset.pattern.permute.xlu0 0
        %2596 = vperm.xlu0 %2595, %v2588
        %v2597 = vpop.permute.xlu0 %2596
        %v2599 = vmul.f32 %v1348, %v2592
        %v2600 = vmul.f32 %v1349, %v2592
        %v2601 = vmul.f32 %v1350, %v2597
        %v2602 = vmul.f32 %v1351, %v2597
        %v2603 = vadd.f32 %v2583, %v2599
        %v2604 = vadd.f32 %v2584, %v2600
        %v2605 = vadd.f32 %v2585, %v2601
        %v2606 = vadd.f32 %v2586, %v2602
        %v2607 = vld [vmem:[%s8 + $0x50] sm:$0xff]
        %v2608 = vld [vmem:[%s8 + $0x58] sm:$0xff]
        %2610 = vset.pattern.permute.xlu0 0
        %2611 = vperm.xlu0 %2610, %v2607
        %v2612 = vpop.permute.xlu0 %2611
        %2615 = vset.pattern.permute.xlu0 0
        %2616 = vperm.xlu0 %2615, %v2608
        %v2617 = vpop.permute.xlu0 %2616
        %v2619 = vmul.f32 %v2567, %v2612
        %v2620 = vmul.f32 %v2568, %v2612
        %v2621 = vmul.f32 %v2569, %v2617
        %v2622 = vmul.f32 %v2570, %v2617
        %v2623 = vadd.f32 %v2603, %v2619
        %v2624 = vadd.f32 %v2604, %v2620
        %v2625 = vadd.f32 %v2605, %v2621
        %v2626 = vadd.f32 %v2606, %v2622
        %v2627 = vld [vmem:[%s8] sm:$0xff]
        %v2628 = vld [vmem:[%s8 + $0x8] sm:$0xff]
        %2630 = vset.pattern.permute.xlu0 0
        %2631 = vperm.xlu0 %2630, %v2627
        %v2632 = vpop.permute.xlu0 %2631
        %2635 = vset.pattern.permute.xlu0 0
        %2636 = vperm.xlu0 %2635, %v2628
        %v2637 = vpop.permute.xlu0 %2636
        %v2639 = vmul.f32 %v2539, %v2632
        %v2640 = vmul.f32 %v2540, %v2632
        %v2641 = vmul.f32 %v2541, %v2637
        %v2642 = vmul.f32 %v2542, %v2637
        %v2643 = vld [vmem:[%s8 + $0x10] sm:$0xff]
        %v2644 = vld [vmem:[%s8 + $0x18] sm:$0xff]
        %2646 = vset.pattern.permute.xlu0 0
        %2647 = vperm.xlu0 %2646, %v2643
        %v2648 = vpop.permute.xlu0 %2647
        %2651 = vset.pattern.permute.xlu0 0
        %2652 = vperm.xlu0 %2651, %v2644
        %v2653 = vpop.permute.xlu0 %2652
        %v2655 = vmul.f32 %v1348, %v2648
        %v2656 = vmul.f32 %v1349, %v2648
        %v2657 = vmul.f32 %v1350, %v2653
        %v2658 = vmul.f32 %v1351, %v2653
        %v2659 = vadd.f32 %v2639, %v2655
        %v2660 = vadd.f32 %v2640, %v2656
        %v2661 = vadd.f32 %v2641, %v2657
        %v2662 = vadd.f32 %v2642, %v2658
        %v2663 = vld [vmem:[%s8 + $0x20] sm:$0xff]
        %v2664 = vld [vmem:[%s8 + $0x28] sm:$0xff]
        %2666 = vset.pattern.permute.xlu0 0
        %2667 = vperm.xlu0 %2666, %v2663
        %v2668 = vpop.permute.xlu0 %2667
        %2671 = vset.pattern.permute.xlu0 0
        %2672 = vperm.xlu0 %2671, %v2664
        %v2673 = vpop.permute.xlu0 %2672
        %v2675 = vmul.f32 %v2567, %v2668
        %v2676 = vmul.f32 %v2568, %v2668
        %v2677 = vmul.f32 %v2569, %v2673
        %v2678 = vmul.f32 %v2570, %v2673
        %v2679 = vadd.f32 %v2659, %v2675
        %v2680 = vadd.f32 %v2660, %v2676
        %v2681 = vadd.f32 %v2661, %v2677
        %v2682 = vadd.f32 %v2662, %v2678
        %2683 = vrot.lane.b32.xlu0 %v2679, 16
        %v2684 = vpop.permute.xlu0 %2683
        %2685 = vrot.lane.b32.xlu0 %v2681, 16
        %v2686 = vpop.permute.xlu0 %2685
        %2687 = vrot.lane.b32.xlu0 %v2680, 16
        %v2688 = vpop.permute.xlu0 %2687
        %2689 = vrot.lane.b32.xlu0 %v2682, 16
        %v2690 = vpop.permute.xlu0 %2689
        %vm2691 = vcmp.lt.s32.totalorder %v2522, 16
        %v2692 = vsel %vm2691, %v2684, %v2688
        %v2693 = vsel %vm2691, %v2686, %v2690
        %v2694 = vsel %vm2691, %v2688, %v2684
        %v2695 = vsel %vm2691, %v2690, %v2686
        %v2697 = vlaneseq
        %v2698 = vshrl.u32 %v2697, 7
        %v2699 = vsub.s32 0, %v2698
        %v2700 = vrot.slane %v2510, %v2699
        %v2701 = vlaneseq
        %v2702 = vshrl.u32 %v2701, 7
        %v2703 = vsub.s32 1, %v2702
        %v2704 = vrot.slane %v2510, %v2703
        %v2707 = vmul.f32 %v2694, %v2700
        %v2708 = vmul.f32 %v2692, %v2704
        %v2709 = vmul.f32 %v2695, %v2700
        %v2710 = vmul.f32 %v2693, %v2704
        %v2711 = vadd.f32 %v2623, %v2707
        %v2712 = vadd.f32 %v2624, %v2708
        %v2713 = vadd.f32 %v2625, %v2709
        %v2714 = vadd.f32 %v2626, %v2710
        %v2715 = vld [vmem:[%s8 + $0x60] sm:$0xff]
        %v2716 = vld [vmem:[%s8 + $0x68] sm:$0xff]
        %2718 = vset.pattern.permute.xlu0 0
        %2719 = vperm.xlu0 %2718, %v2715
        %v2720 = vpop.permute.xlu0 %2719
        %2723 = vset.pattern.permute.xlu0 0
        %2724 = vperm.xlu0 %2723, %v2716
        %v2725 = vpop.permute.xlu0 %2724
        %v2727 = vmul.f32 %v2539, %v2720
        %v2728 = vmul.f32 %v2540, %v2720
        %v2729 = vmul.f32 %v2541, %v2725
        %v2730 = vmul.f32 %v2542, %v2725
        %v2731 = vld [vmem:[%s8 + $0x70] sm:$0xff]
        %v2732 = vld [vmem:[%s8 + $0x78] sm:$0xff]
        %2734 = vset.pattern.permute.xlu0 0
        %2735 = vperm.xlu0 %2734, %v2731
        %v2736 = vpop.permute.xlu0 %2735
        %2739 = vset.pattern.permute.xlu0 0
        %2740 = vperm.xlu0 %2739, %v2732
        %v2741 = vpop.permute.xlu0 %2740
        %v2743 = vmul.f32 %v1348, %v2736
        %v2744 = vmul.f32 %v1349, %v2736
        %v2745 = vmul.f32 %v1350, %v2741
        %v2746 = vmul.f32 %v1351, %v2741
        %v2747 = vadd.f32 %v2727, %v2743
        %v2748 = vadd.f32 %v2728, %v2744
        %v2749 = vadd.f32 %v2729, %v2745
        %v2750 = vadd.f32 %v2730, %v2746
        %v2751 = vld [vmem:[%s8 + $0x80] sm:$0xff]
        %v2752 = vld [vmem:[%s8 + $0x88] sm:$0xff]
        %2754 = vset.pattern.permute.xlu0 0
        %2755 = vperm.xlu0 %2754, %v2751
        %v2756 = vpop.permute.xlu0 %2755
        %2759 = vset.pattern.permute.xlu0 0
        %2760 = vperm.xlu0 %2759, %v2752
        %v2761 = vpop.permute.xlu0 %2760
        %v2763 = vmul.f32 %v2567, %v2756
        %v2764 = vmul.f32 %v2568, %v2756
        %v2765 = vmul.f32 %v2569, %v2761
        %v2766 = vmul.f32 %v2570, %v2761
        %v2767 = vadd.f32 %v2747, %v2763
        %v2768 = vadd.f32 %v2748, %v2764
        %v2769 = vadd.f32 %v2749, %v2765
        %v2770 = vadd.f32 %v2750, %v2766
        %2771 = vrot.lane.b32.xlu0 %v2767, 112
        %v2772 = vpop.permute.xlu0 %2771
        %2773 = vrot.lane.b32.xlu0 %v2769, 112
        %v2774 = vpop.permute.xlu0 %2773
        %2775 = vrot.lane.b32.xlu0 %v2768, 112
        %v2776 = vpop.permute.xlu0 %2775
        %2777 = vrot.lane.b32.xlu0 %v2770, 112
        %v2778 = vpop.permute.xlu0 %2777
        %vm2779 = vcmp.lt.s32.totalorder %v2522, 112
        %v2780 = vsel %vm2779, %v2772, %v2776
        %v2781 = vsel %vm2779, %v2774, %v2778
        %v2782 = vsel %vm2779, %v2776, %v2772
        %v2783 = vsel %vm2779, %v2778, %v2774
        %v2785 = vlaneseq
        %v2786 = vshrl.u32 %v2785, 7
        %v2787 = vsub.s32 0, %v2786
        %v2788 = vrot.slane %v2512, %v2787
        %v2789 = vlaneseq
        %v2790 = vshrl.u32 %v2789, 7
        %v2791 = vsub.s32 1, %v2790
        %v2792 = vrot.slane %v2512, %v2791
        %v2795 = vmul.f32 %v2780, %v2788
        %v2796 = vmul.f32 %v2782, %v2792
        %v2797 = vmul.f32 %v2781, %v2788
        %v2798 = vmul.f32 %v2783, %v2792
        %v2799 = vadd.f32 %v2711, %v2795
        %v2800 = vadd.f32 %v2712, %v2796
        %v2801 = vadd.f32 %v2713, %v2797
        %v2802 = vadd.f32 %v2714, %v2798
        %v2803 = vld [vmem:[%s9] sm:$0xff]
        %v2804 = vld [vmem:[%s9 + $0x8] sm:$0xff]
        %2806 = vset.pattern.permute.xlu0 0
        %2807 = vperm.xlu0 %2806, %v2803
        %v2808 = vpop.permute.xlu0 %2807
        %2811 = vset.pattern.permute.xlu0 0
        %2812 = vperm.xlu0 %2811, %v2804
        %v2813 = vpop.permute.xlu0 %2812
        %v2815 = vadd.f32 %v2799, %v2808
        %v2816 = vadd.f32 %v2800, %v2808
        %v2817 = vadd.f32 %v2801, %v2813
        %v2818 = vadd.f32 %v2802, %v2813
        %v2819 = vmax.f32 %v2815, 0.0
        %v2820 = vmax.f32 %v2816, 0.0
        %v2821 = vmax.f32 %v2817, 0.0
        %v2822 = vmax.f32 %v2818, 0.0
        %v2823 = vld [vmem:[%s10] sm:$0xff]
        %v2824 = vld [vmem:[%s10 + $0x8] sm:$0xff]
        %v2825 = vld [vmem:[%s14] sm:$0xff]
        %v2826 = vld [vmem:[%s14 + $0x8] sm:$0xff]
        %v2827 = vld [vmem:[%s14 + $0x10] sm:$0xff]
        %v2828 = vld [vmem:[%s14 + $0x18] sm:$0xff]
        %v2829 = vld [vmem:[%s14 + $0x20] sm:$0xff]
        %v2830 = vld [vmem:[%s14 + $0x28] sm:$0xff]
        %v2831 = vld [vmem:[%s14 + $0x30] sm:$0xff]
        %v2832 = vld [vmem:[%s14 + $0x38] sm:$0xff]
        %v2833 = vld [vmem:[%s14 + $0x40] sm:$0xff]
        %v2834 = vld [vmem:[%s14 + $0x48] sm:$0xff]
        %v2835 = vld [vmem:[%s14 + $0x50] sm:$0xff]
        %v2836 = vld [vmem:[%s14 + $0x58] sm:$0xff]
        %v2837 = vld [vmem:[%s14 + $0x60] sm:$0xff]
        %v2838 = vld [vmem:[%s14 + $0x68] sm:$0xff]
        %v2839 = vld [vmem:[%s14 + $0x70] sm:$0xff]
        %v2840 = vld [vmem:[%s14 + $0x78] sm:$0xff]
        %v2841 = vld [vmem:[%s14 + $0x80] sm:$0xff]
        %v2842 = vld [vmem:[%s14 + $0x88] sm:$0xff]
        %v2843 = vld [vmem:[%s14 + $0x90] sm:$0xff]
        %v2844 = vld [vmem:[%s14 + $0x98] sm:$0xff]
        %v2845 = vld [vmem:[%s14 + $0xa0] sm:$0xff]
        %v2846 = vld [vmem:[%s14 + $0xa8] sm:$0xff]
        %v2847 = vld [vmem:[%s14 + $0xb0] sm:$0xff]
        %v2848 = vld [vmem:[%s14 + $0xb8] sm:$0xff]
        %v2849 = vld [vmem:[%s14 + $0xc0] sm:$0xff]
        %v2850 = vld [vmem:[%s14 + $0xc8] sm:$0xff]
        %v2851 = vld [vmem:[%s14 + $0xd0] sm:$0xff]
        %v2852 = vld [vmem:[%s14 + $0xd8] sm:$0xff]
        %v2853 = vld [vmem:[%s14 + $0xe0] sm:$0xff]
        %v2854 = vld [vmem:[%s14 + $0xe8] sm:$0xff]
        %v2855 = vld [vmem:[%s14 + $0xf0] sm:$0xff]
        %v2856 = vld [vmem:[%s14 + $0xf8] sm:$0xff]
        %v2857 = vld [vmem:[%s14 + $0x100] sm:$0xff]
        %v2858 = vld [vmem:[%s14 + $0x108] sm:$0xff]
        %v2859 = vld [vmem:[%s14 + $0x110] sm:$0xff]
        %v2860 = vld [vmem:[%s14 + $0x118] sm:$0xff]
        %v2861 = vld [vmem:[%s14 + $0x120] sm:$0xff]
        %v2862 = vld [vmem:[%s14 + $0x128] sm:$0xff]
        %v2863 = vld [vmem:[%s14 + $0x130] sm:$0xff]
        %v2864 = vld [vmem:[%s14 + $0x138] sm:$0xff]
        %v2865 = vld [vmem:[%s14 + $0x140] sm:$0xff]
        %v2866 = vld [vmem:[%s14 + $0x148] sm:$0xff]
        %v2867 = vld [vmem:[%s14 + $0x150] sm:$0xff]
        %v2868 = vld [vmem:[%s14 + $0x158] sm:$0xff]
        %v2869 = vld [vmem:[%s14 + $0x160] sm:$0xff]
        %v2870 = vld [vmem:[%s14 + $0x168] sm:$0xff]
        %v2871 = vld [vmem:[%s14 + $0x170] sm:$0xff]
        %v2872 = vld [vmem:[%s14 + $0x178] sm:$0xff]
        %v2873 = vld [vmem:[%s14 + $0x180] sm:$0xff]
        %v2874 = vld [vmem:[%s14 + $0x188] sm:$0xff]
        %v2875 = vld [vmem:[%s14 + $0x190] sm:$0xff]
        %v2876 = vld [vmem:[%s14 + $0x198] sm:$0xff]
        %v2877 = vld [vmem:[%s14 + $0x1a0] sm:$0xff]
        %v2878 = vld [vmem:[%s14 + $0x1a8] sm:$0xff]
        %v2879 = vld [vmem:[%s14 + $0x1b0] sm:$0xff]
        %v2880 = vld [vmem:[%s14 + $0x1b8] sm:$0xff]
        %v2881 = vld [vmem:[%s14 + $0x1c0] sm:$0xff]
        %v2882 = vld [vmem:[%s14 + $0x1c8] sm:$0xff]
        %v2883 = vld [vmem:[%s14 + $0x1d0] sm:$0xff]
        %v2884 = vld [vmem:[%s14 + $0x1d8] sm:$0xff]
        %v2885 = vld [vmem:[%s14 + $0x1e0] sm:$0xff]
        %v2886 = vld [vmem:[%s14 + $0x1e8] sm:$0xff]
        %v2887 = vld [vmem:[%s14 + $0x1f0] sm:$0xff]
        %v2888 = vld [vmem:[%s14 + $0x1f8] sm:$0xff]
        %2889 = vmatprep.subr.mxu0 %v2856
        %2890 = vmatpush1.msra.mxu0 %v2855
        %2891 = vmatprep.subr.mxu0 %v2854
        %2892 = vmatpush1.msra.mxu0 %v2853
        %2893 = vmatprep.subr.mxu0 %v2852
        %2894 = vmatpush1.msra.mxu0 %v2851
        %2895 = vmatprep.subr.mxu0 %v2850
        %2896 = vmatpush1.msra.mxu0 %v2849
        %2897 = vmatprep.subr.mxu0 %v2848
        %2898 = vmatpush1.msra.mxu0 %v2847
        %2899 = vmatprep.subr.mxu0 %v2846
        %2900 = vmatpush1.msra.mxu0 %v2845
        %2901 = vmatprep.subr.mxu0 %v2844
        %2902 = vmatpush1.msra.mxu0 %v2843
        %2903 = vmatprep.subr.mxu0 %v2842
        %2904 = vmatpush1.msra.mxu0 %v2841
        %2905 = vmatprep.subr.mxu0 %v2840
        %2906 = vmatpush1.msra.mxu0 %v2839
        %2907 = vmatprep.subr.mxu0 %v2838
        %2908 = vmatpush1.msra.mxu0 %v2837
        %2909 = vmatprep.subr.mxu0 %v2836
        %2910 = vmatpush1.msra.mxu0 %v2835
        %2911 = vmatprep.subr.mxu0 %v2834
        %2912 = vmatpush1.msra.mxu0 %v2833
        %2913 = vmatprep.subr.mxu0 %v2832
        %2914 = vmatpush1.msra.mxu0 %v2831
        %2915 = vmatprep.subr.mxu0 %v2830
        %2916 = vmatpush1.msra.mxu0 %v2829
        %2917 = vmatprep.subr.mxu0 %v2828
        %2918 = vmatpush1.msra.mxu0 %v2827
        %2919 = vmatprep.subr.mxu0 %v2826
        %2920 = vmatpush1.msra.mxu0 %v2825
        %2921 = vmatprep.subr.mxu0 %v2888
        %2922 = vmatpush2.msra.mxu0 %v2887
        %2923 = vmatprep.subr.mxu0 %v2886
        %2924 = vmatpush2.msra.mxu0 %v2885
        %2925 = vmatprep.subr.mxu0 %v2884
        %2926 = vmatpush2.msra.mxu0 %v2883
        %2927 = vmatprep.subr.mxu0 %v2882
        %2928 = vmatpush2.msra.mxu0 %v2881
        %2929 = vmatprep.subr.mxu0 %v2880
        %2930 = vmatpush2.msra.mxu0 %v2879
        %2931 = vmatprep.subr.mxu0 %v2878
        %2932 = vmatpush2.msra.mxu0 %v2877
        %2933 = vmatprep.subr.mxu0 %v2876
        %2934 = vmatpush2.msra.mxu0 %v2875
        %2935 = vmatprep.subr.mxu0 %v2874
        %2936 = vmatpush2.msra.mxu0 %v2873
        %2937 = vmatprep.subr.mxu0 %v2872
        %2938 = vmatpush2.msra.mxu0 %v2871
        %2939 = vmatprep.subr.mxu0 %v2870
        %2940 = vmatpush2.msra.mxu0 %v2869
        %2941 = vmatprep.subr.mxu0 %v2868
        %2942 = vmatpush2.msra.mxu0 %v2867
        %2943 = vmatprep.subr.mxu0 %v2866
        %2944 = vmatpush2.msra.mxu0 %v2865
        %2945 = vmatprep.subr.mxu0 %v2864
        %2946 = vmatpush2.msra.mxu0 %v2863
        %2947 = vmatprep.subr.mxu0 %v2862
        %2948 = vmatpush2.msra.mxu0 %v2861
        %2949 = vmatprep.subr.mxu0 %v2860
        %2950 = vmatpush2.msra.mxu0 %v2859
        %2951 = vmatprep.subr.mxu0 %v2858
        %2952 = vmatpush2.msra.mxu0 %v2857
        %2953 = vmatprep.mubr.f32.mxu0 %v2820
        %2954 = vmatmul.mubr.f32.gmra.mxu0 %v2819
        %v2955 = vpop.f32.mrf.mxu0
        %v2956 = vadd.f32 0.0, %v2955
        %v2957 = vpop.f32.mrf.mxu0
        %v2958 = vadd.f32 0.0, %v2957
        %2959 = vmatprep.mubr.f32.mxu0 %v2822
        %2960 = vmatmul.mubr.f32.gmra.mxu0 %v2821
        %v2961 = vpop.f32.mrf.mxu0
        %v2962 = vadd.f32 0.0, %v2961
        %v2963 = vpop.f32.mrf.mxu0
        %v2964 = vadd.f32 0.0, %v2963
        %2965 = vdwg.mxu0
        %vm2966 = vcmask 130048
        %v2968 = vsel %vm2966, %v2823, 0
        %v2971 = vsel %vm2966, %v2824, 0
        %2973 = vmatprep.subr.mxu0 0.0
        %2974 = vmatpush1.msra.mxu0 0.0
        %2975 = vmatprep.subr.mxu0 0.0
        %2976 = vmatpush1.msra.mxu0 0.0
        %2977 = vmatprep.subr.mxu0 0.0
        %2978 = vmatpush1.msra.mxu0 0.0
        %2979 = vmatprep.subr.mxu0 0.0
        %2980 = vmatpush1.msra.mxu0 0.0
        %2981 = vmatprep.subr.mxu0 0.0
        %2982 = vmatpush1.msra.mxu0 0.0
        %2983 = vmatprep.subr.mxu0 0.0
        %2984 = vmatpush1.msra.mxu0 0.0
        %2985 = vmatprep.subr.mxu0 0.0
        %2986 = vmatpush1.msra.mxu0 0.0
        %2987 = vmatprep.subr.mxu0 0.0
        %2988 = vmatpush1.msra.mxu0 0.0
        %2989 = vmatprep.subr.mxu0 0.0
        %2990 = vmatpush1.msra.mxu0 0.0
        %2991 = vmatprep.subr.mxu0 0.0
        %2992 = vmatpush1.msra.mxu0 0.0
        %2993 = vmatprep.subr.mxu0 0.0
        %2994 = vmatpush1.msra.mxu0 0.0
        %2995 = vmatprep.subr.mxu0 0.0
        %2996 = vmatpush1.msra.mxu0 0.0
        %2997 = vmatprep.subr.mxu0 0.0
        %2998 = vmatpush1.msra.mxu0 0.0
        %2999 = vmatprep.subr.mxu0 0.0
        %3000 = vmatpush1.msra.mxu0 0.0
        %3001 = vmatprep.subr.mxu0 %v2964
        %3002 = vmatpush1.msra.mxu0 %v2962
        %3003 = vmatprep.subr.mxu0 %v2958
        %3004 = vmatpush1.msra.mxu0 %v2956
        %3005 = vmatprep.subr.mxu0 0.0
        %3006 = vmatpush2.msra.mxu0 0.0
        %3007 = vmatprep.subr.mxu0 0.0
        %3008 = vmatpush2.msra.mxu0 0.0
        %3009 = vmatprep.subr.mxu0 0.0
        %3010 = vmatpush2.msra.mxu0 0.0
        %3011 = vmatprep.subr.mxu0 0.0
        %3012 = vmatpush2.msra.mxu0 0.0
        %3013 = vmatprep.subr.mxu0 0.0
        %3014 = vmatpush2.msra.mxu0 0.0
        %3015 = vmatprep.subr.mxu0 0.0
        %3016 = vmatpush2.msra.mxu0 0.0
        %3017 = vmatprep.subr.mxu0 0.0
        %3018 = vmatpush2.msra.mxu0 0.0
        %3019 = vmatprep.subr.mxu0 0.0
        %3020 = vmatpush2.msra.mxu0 0.0
        %3021 = vmatprep.subr.mxu0 0.0
        %3022 = vmatpush2.msra.mxu0 0.0
        %3023 = vmatprep.subr.mxu0 0.0
        %3024 = vmatpush2.msra.mxu0 0.0
        %3025 = vmatprep.subr.mxu0 0.0
        %3026 = vmatpush2.msra.mxu0 0.0
        %3027 = vmatprep.subr.mxu0 0.0
        %3028 = vmatpush2.msra.mxu0 0.0
        %3029 = vmatprep.subr.mxu0 0.0
        %3030 = vmatpush2.msra.mxu0 0.0
        %3031 = vmatprep.subr.mxu0 0.0
        %3032 = vmatpush2.msra.mxu0 0.0
        %3033 = vmatprep.subr.mxu0 0.0
        %3034 = vmatpush2.msra.mxu0 0.0
        %3035 = vmatprep.subr.mxu0 0.0
        %3036 = vmatpush2.msra.mxu0 0.0
        %3037 = vmatprep.mubr.f32.mxu0 0.0
        %3038 = vmatmul.mubr.f32.gmra.mxu0 %v2968
        %v3039 = vpop.f32.mrf.mxu0
        %v3040 = vadd.f32 %v2819, %v3039
        %v3041 = vpop.f32.mrf.mxu0
        %v3042 = vadd.f32 %v2820, %v3041
        %3043 = vmatprep.mubr.f32.mxu0 0.0
        %3044 = vmatmul.mubr.f32.gmra.mxu0 %v2971
        %v3045 = vpop.f32.mrf.mxu0
        %v3046 = vadd.f32 %v2821, %v3045
        %v3047 = vpop.f32.mrf.mxu0
        %v3048 = vadd.f32 %v2822, %v3047
        %3049 = vdwg.mxu0
        %3050 = vrot.lane.b32.xlu0 %v3040, 1
        %v3051 = vpop.permute.xlu0 %3050
        %3052 = vrot.lane.b32.xlu0 %v3046, 1
        %v3053 = vpop.permute.xlu0 %3052
        %3054 = vrot.lane.b32.xlu0 %v3042, 1
        %v3055 = vpop.permute.xlu0 %3054
        %3056 = vrot.lane.b32.xlu0 %v3048, 1
        %v3057 = vpop.permute.xlu0 %3056
        %v3058 = vsel %vm2523, %v3051, %v3055
        %v3059 = vsel %vm2523, %v3053, %v3057
        %v3060 = vsel %vm2523, %v3055, %v3051
        %v3061 = vsel %vm2523, %v3057, %v3053
        %v3062 = vmul.f32 %v3060, %v2532
        %v3063 = vmul.f32 %v3058, %v2536
        %v3064 = vmul.f32 %v3061, %v2532
        %v3065 = vmul.f32 %v3059, %v2536
        %3066 = vrot.lane.b32.xlu0 %v3040, 127
        %v3067 = vpop.permute.xlu0 %3066
        %3068 = vrot.lane.b32.xlu0 %v3046, 127
        %v3069 = vpop.permute.xlu0 %3068
        %3070 = vrot.lane.b32.xlu0 %v3042, 127
        %v3071 = vpop.permute.xlu0 %3070
        %3072 = vrot.lane.b32.xlu0 %v3048, 127
        %v3073 = vpop.permute.xlu0 %3072
        %v3074 = vsel %vm2551, %v3067, %v3071
        %v3075 = vsel %vm2551, %v3069, %v3073
        %v3076 = vsel %vm2551, %v3071, %v3067
        %v3077 = vsel %vm2551, %v3073, %v3069
        %v3078 = vmul.f32 %v3074, %v2560
        %v3079 = vmul.f32 %v3076, %v2564
        %v3080 = vmul.f32 %v3075, %v2560
        %v3081 = vmul.f32 %v3077, %v2564
        %v3082 = vld [vmem:[%s11 + $0x30] sm:$0xff]
        %v3083 = vld [vmem:[%s11 + $0x38] sm:$0xff]
        %3085 = vset.pattern.permute.xlu0 0
        %3086 = vperm.xlu0 %3085, %v3082
        %v3087 = vpop.permute.xlu0 %3086
        %3090 = vset.pattern.permute.xlu0 0
        %3091 = vperm.xlu0 %3090, %v3083
        %v3092 = vpop.permute.xlu0 %3091
        %v3094 = vmul.f32 %v3062, %v3087
        %v3095 = vmul.f32 %v3063, %v3087
        %v3096 = vmul.f32 %v3064, %v3092
        %v3097 = vmul.f32 %v3065, %v3092
        %v3098 = vld [vmem:[%s11 + $0x40] sm:$0xff]
        %v3099 = vld [vmem:[%s11 + $0x48] sm:$0xff]
        %3101 = vset.pattern.permute.xlu0 0
        %3102 = vperm.xlu0 %3101, %v3098
        %v3103 = vpop.permute.xlu0 %3102
        %3106 = vset.pattern.permute.xlu0 0
        %3107 = vperm.xlu0 %3106, %v3099
        %v3108 = vpop.permute.xlu0 %3107
        %v3110 = vmul.f32 %v3040, %v3103
        %v3111 = vmul.f32 %v3042, %v3103
        %v3112 = vmul.f32 %v3046, %v3108
        %v3113 = vmul.f32 %v3048, %v3108
        %v3114 = vadd.f32 %v3094, %v3110
        %v3115 = vadd.f32 %v3095, %v3111
        %v3116 = vadd.f32 %v3096, %v3112
        %v3117 = vadd.f32 %v3097, %v3113
        %v3118 = vld [vmem:[%s11 + $0x50] sm:$0xff]
        %v3119 = vld [vmem:[%s11 + $0x58] sm:$0xff]
        %3121 = vset.pattern.permute.xlu0 0
        %3122 = vperm.xlu0 %3121, %v3118
        %v3123 = vpop.permute.xlu0 %3122
        %3126 = vset.pattern.permute.xlu0 0
        %3127 = vperm.xlu0 %3126, %v3119
        %v3128 = vpop.permute.xlu0 %3127
        %v3130 = vmul.f32 %v3078, %v3123
        %v3131 = vmul.f32 %v3079, %v3123
        %v3132 = vmul.f32 %v3080, %v3128
        %v3133 = vmul.f32 %v3081, %v3128
        %v3134 = vadd.f32 %v3114, %v3130
        %v3135 = vadd.f32 %v3115, %v3131
        %v3136 = vadd.f32 %v3116, %v3132
        %v3137 = vadd.f32 %v3117, %v3133
        %v3138 = vld [vmem:[%s11] sm:$0xff]
        %v3139 = vld [vmem:[%s11 + $0x8] sm:$0xff]
        %3141 = vset.pattern.permute.xlu0 0
        %3142 = vperm.xlu0 %3141, %v3138
        %v3143 = vpop.permute.xlu0 %3142
        %3146 = vset.pattern.permute.xlu0 0
        %3147 = vperm.xlu0 %3146, %v3139
        %v3148 = vpop.permute.xlu0 %3147
        %v3150 = vmul.f32 %v3062, %v3143
        %v3151 = vmul.f32 %v3063, %v3143
        %v3152 = vmul.f32 %v3064, %v3148
        %v3153 = vmul.f32 %v3065, %v3148
        %v3154 = vld [vmem:[%s11 + $0x10] sm:$0xff]
        %v3155 = vld [vmem:[%s11 + $0x18] sm:$0xff]
        %3157 = vset.pattern.permute.xlu0 0
        %3158 = vperm.xlu0 %3157, %v3154
        %v3159 = vpop.permute.xlu0 %3158
        %3162 = vset.pattern.permute.xlu0 0
        %3163 = vperm.xlu0 %3162, %v3155
        %v3164 = vpop.permute.xlu0 %3163
        %v3166 = vmul.f32 %v3040, %v3159
        %v3167 = vmul.f32 %v3042, %v3159
        %v3168 = vmul.f32 %v3046, %v3164
        %v3169 = vmul.f32 %v3048, %v3164
        %v3170 = vadd.f32 %v3150, %v3166
        %v3171 = vadd.f32 %v3151, %v3167
        %v3172 = vadd.f32 %v3152, %v3168
        %v3173 = vadd.f32 %v3153, %v3169
        %v3174 = vld [vmem:[%s11 + $0x20] sm:$0xff]
        %v3175 = vld [vmem:[%s11 + $0x28] sm:$0xff]
        %3177 = vset.pattern.permute.xlu0 0
        %3178 = vperm.xlu0 %3177, %v3174
        %v3179 = vpop.permute.xlu0 %3178
        %3182 = vset.pattern.permute.xlu0 0
        %3183 = vperm.xlu0 %3182, %v3175
        %v3184 = vpop.permute.xlu0 %3183
        %v3186 = vmul.f32 %v3078, %v3179
        %v3187 = vmul.f32 %v3079, %v3179
        %v3188 = vmul.f32 %v3080, %v3184
        %v3189 = vmul.f32 %v3081, %v3184
        %v3190 = vadd.f32 %v3170, %v3186
        %v3191 = vadd.f32 %v3171, %v3187
        %v3192 = vadd.f32 %v3172, %v3188
        %v3193 = vadd.f32 %v3173, %v3189
        %3194 = vrot.lane.b32.xlu0 %v3190, 16
        %v3195 = vpop.permute.xlu0 %3194
        %3196 = vrot.lane.b32.xlu0 %v3192, 16
        %v3197 = vpop.permute.xlu0 %3196
        %3198 = vrot.lane.b32.xlu0 %v3191, 16
        %v3199 = vpop.permute.xlu0 %3198
        %3200 = vrot.lane.b32.xlu0 %v3193, 16
        %v3201 = vpop.permute.xlu0 %3200
        %v3202 = vsel %vm2691, %v3195, %v3199
        %v3203 = vsel %vm2691, %v3197, %v3201
        %v3204 = vsel %vm2691, %v3199, %v3195
        %v3205 = vsel %vm2691, %v3201, %v3197
        %v3206 = vmul.f32 %v3204, %v2700
        %v3207 = vmul.f32 %v3202, %v2704
        %v3208 = vmul.f32 %v3205, %v2700
        %v3209 = vmul.f32 %v3203, %v2704
        %v3210 = vadd.f32 %v3134, %v3206
        %v3211 = vadd.f32 %v3135, %v3207
        %v3212 = vadd.f32 %v3136, %v3208
        %v3213 = vadd.f32 %v3137, %v3209
        %v3214 = vld [vmem:[%s11 + $0x60] sm:$0xff]
        %v3215 = vld [vmem:[%s11 + $0x68] sm:$0xff]
        %3217 = vset.pattern.permute.xlu0 0
        %3218 = vperm.xlu0 %3217, %v3214
        %v3219 = vpop.permute.xlu0 %3218
        %3222 = vset.pattern.permute.xlu0 0
        %3223 = vperm.xlu0 %3222, %v3215
        %v3224 = vpop.permute.xlu0 %3223
        %v3226 = vmul.f32 %v3062, %v3219
        %v3227 = vmul.f32 %v3063, %v3219
        %v3228 = vmul.f32 %v3064, %v3224
        %v3229 = vmul.f32 %v3065, %v3224
        %v3230 = vld [vmem:[%s11 + $0x70] sm:$0xff]
        %v3231 = vld [vmem:[%s11 + $0x78] sm:$0xff]
        %3233 = vset.pattern.permute.xlu0 0
        %3234 = vperm.xlu0 %3233, %v3230
        %v3235 = vpop.permute.xlu0 %3234
        %3238 = vset.pattern.permute.xlu0 0
        %3239 = vperm.xlu0 %3238, %v3231
        %v3240 = vpop.permute.xlu0 %3239
        %v3242 = vmul.f32 %v3040, %v3235
        %v3243 = vmul.f32 %v3042, %v3235
        %v3244 = vmul.f32 %v3046, %v3240
        %v3245 = vmul.f32 %v3048, %v3240
        %v3246 = vadd.f32 %v3226, %v3242
        %v3247 = vadd.f32 %v3227, %v3243
        %v3248 = vadd.f32 %v3228, %v3244
        %v3249 = vadd.f32 %v3229, %v3245
        %v3250 = vld [vmem:[%s11 + $0x80] sm:$0xff]
        %v3251 = vld [vmem:[%s11 + $0x88] sm:$0xff]
        %3253 = vset.pattern.permute.xlu0 0
        %3254 = vperm.xlu0 %3253, %v3250
        %v3255 = vpop.permute.xlu0 %3254
        %3258 = vset.pattern.permute.xlu0 0
        %3259 = vperm.xlu0 %3258, %v3251
        %v3260 = vpop.permute.xlu0 %3259
        %v3262 = vmul.f32 %v3078, %v3255
        %v3263 = vmul.f32 %v3079, %v3255
        %v3264 = vmul.f32 %v3080, %v3260
        %v3265 = vmul.f32 %v3081, %v3260
        %v3266 = vadd.f32 %v3246, %v3262
        %v3267 = vadd.f32 %v3247, %v3263
        %v3268 = vadd.f32 %v3248, %v3264
        %v3269 = vadd.f32 %v3249, %v3265
        %3270 = vrot.lane.b32.xlu0 %v3266, 112
        %v3271 = vpop.permute.xlu0 %3270
        %3272 = vrot.lane.b32.xlu0 %v3268, 112
        %v3273 = vpop.permute.xlu0 %3272
        %3274 = vrot.lane.b32.xlu0 %v3267, 112
        %v3275 = vpop.permute.xlu0 %3274
        %3276 = vrot.lane.b32.xlu0 %v3269, 112
        %v3277 = vpop.permute.xlu0 %3276
        %v3278 = vsel %vm2779, %v3271, %v3275
        %v3279 = vsel %vm2779, %v3273, %v3277
        %v3280 = vsel %vm2779, %v3275, %v3271
        %v3281 = vsel %vm2779, %v3277, %v3273
        %v3282 = vmul.f32 %v3278, %v2788
        %v3283 = vmul.f32 %v3280, %v2792
        %v3284 = vmul.f32 %v3279, %v2788
        %v3285 = vmul.f32 %v3281, %v2792
        %v3286 = vadd.f32 %v3210, %v3282
        %v3287 = vadd.f32 %v3211, %v3283
        %v3288 = vadd.f32 %v3212, %v3284
        %v3289 = vadd.f32 %v3213, %v3285
        %v3290 = vld [vmem:[%s12] sm:$0xff]
        %v3291 = vld [vmem:[%s12 + $0x8] sm:$0xff]
        %3293 = vset.pattern.permute.xlu0 0
        %3294 = vperm.xlu0 %3293, %v3290
        %v3295 = vpop.permute.xlu0 %3294
        %3298 = vset.pattern.permute.xlu0 0
        %3299 = vperm.xlu0 %3298, %v3291
        %v3300 = vpop.permute.xlu0 %3299
        %v3302 = vadd.f32 %v3286, %v3295
        %v3303 = vadd.f32 %v3287, %v3295
        %v3304 = vadd.f32 %v3288, %v3300
        %v3305 = vadd.f32 %v3289, %v3300
        %v3306 = vld [vmem:[%s13] sm:$0xff]
        %v3307 = vld [vmem:[%s13 + $0x8] sm:$0xff]
        %3308 = vmatprep.subr.mxu0 %v2856
        %3309 = vmatpush1.msra.mxu0 %v2855
        %3310 = vmatprep.subr.mxu0 %v2854
        %3311 = vmatpush1.msra.mxu0 %v2853
        %3312 = vmatprep.subr.mxu0 %v2852
        %3313 = vmatpush1.msra.mxu0 %v2851
        %3314 = vmatprep.subr.mxu0 %v2850
        %3315 = vmatpush1.msra.mxu0 %v2849
        %3316 = vmatprep.subr.mxu0 %v2848
        %3317 = vmatpush1.msra.mxu0 %v2847
        %3318 = vmatprep.subr.mxu0 %v2846
        %3319 = vmatpush1.msra.mxu0 %v2845
        %3320 = vmatprep.subr.mxu0 %v2844
        %3321 = vmatpush1.msra.mxu0 %v2843
        %3322 = vmatprep.subr.mxu0 %v2842
        %3323 = vmatpush1.msra.mxu0 %v2841
        %3324 = vmatprep.subr.mxu0 %v2840
        %3325 = vmatpush1.msra.mxu0 %v2839
        %3326 = vmatprep.subr.mxu0 %v2838
        %3327 = vmatpush1.msra.mxu0 %v2837
        %3328 = vmatprep.subr.mxu0 %v2836
        %3329 = vmatpush1.msra.mxu0 %v2835
        %3330 = vmatprep.subr.mxu0 %v2834
        %3331 = vmatpush1.msra.mxu0 %v2833
        %3332 = vmatprep.subr.mxu0 %v2832
        %3333 = vmatpush1.msra.mxu0 %v2831
        %3334 = vmatprep.subr.mxu0 %v2830
        %3335 = vmatpush1.msra.mxu0 %v2829
        %3336 = vmatprep.subr.mxu0 %v2828
        %3337 = vmatpush1.msra.mxu0 %v2827
        %3338 = vmatprep.subr.mxu0 %v2826
        %3339 = vmatpush1.msra.mxu0 %v2825
        %3340 = vmatprep.subr.mxu0 %v2888
        %3341 = vmatpush2.msra.mxu0 %v2887
        %3342 = vmatprep.subr.mxu0 %v2886
        %3343 = vmatpush2.msra.mxu0 %v2885
        %3344 = vmatprep.subr.mxu0 %v2884
        %3345 = vmatpush2.msra.mxu0 %v2883
        %3346 = vmatprep.subr.mxu0 %v2882
        %3347 = vmatpush2.msra.mxu0 %v2881
        %3348 = vmatprep.subr.mxu0 %v2880
        %3349 = vmatpush2.msra.mxu0 %v2879
        %3350 = vmatprep.subr.mxu0 %v2878
        %3351 = vmatpush2.msra.mxu0 %v2877
        %3352 = vmatprep.subr.mxu0 %v2876
        %3353 = vmatpush2.msra.mxu0 %v2875
        %3354 = vmatprep.subr.mxu0 %v2874
        %3355 = vmatpush2.msra.mxu0 %v2873
        %3356 = vmatprep.subr.mxu0 %v2872
        %3357 = vmatpush2.msra.mxu0 %v2871
        %3358 = vmatprep.subr.mxu0 %v2870
        %3359 = vmatpush2.msra.mxu0 %v2869
        %3360 = vmatprep.subr.mxu0 %v2868
        %3361 = vmatpush2.msra.mxu0 %v2867
        %3362 = vmatprep.subr.mxu0 %v2866
        %3363 = vmatpush2.msra.mxu0 %v2865
        %3364 = vmatprep.subr.mxu0 %v2864
        %3365 = vmatpush2.msra.mxu0 %v2863
        %3366 = vmatprep.subr.mxu0 %v2862
        %3367 = vmatpush2.msra.mxu0 %v2861
        %3368 = vmatprep.subr.mxu0 %v2860
        %3369 = vmatpush2.msra.mxu0 %v2859
        %3370 = vmatprep.subr.mxu0 %v2858
        %3371 = vmatpush2.msra.mxu0 %v2857
        %3372 = vmatprep.mubr.f32.mxu0 %v3303
        %3373 = vmatmul.mubr.f32.gmra.mxu0 %v3302
        %v3374 = vpop.f32.mrf.mxu0
        %v3375 = vadd.f32 0.0, %v3374
        %v3376 = vpop.f32.mrf.mxu0
        %v3377 = vadd.f32 0.0, %v3376
        %3378 = vmatprep.mubr.f32.mxu0 %v3305
        %3379 = vmatmul.mubr.f32.gmra.mxu0 %v3304
        %v3380 = vpop.f32.mrf.mxu0
        %v3381 = vadd.f32 0.0, %v3380
        %v3382 = vpop.f32.mrf.mxu0
        %v3383 = vadd.f32 0.0, %v3382
        %3384 = vdwg.mxu0
        %v3386 = vsel %vm2966, %v3306, 0
        %v3389 = vsel %vm2966, %v3307, 0
        %3391 = vmatprep.subr.mxu0 0.0
        %3392 = vmatpush1.msra.mxu0 0.0
        %3393 = vmatprep.subr.mxu0 0.0
        %3394 = vmatpush1.msra.mxu0 0.0
        %3395 = vmatprep.subr.mxu0 0.0
        %3396 = vmatpush1.msra.mxu0 0.0
        %3397 = vmatprep.subr.mxu0 0.0
        %3398 = vmatpush1.msra.mxu0 0.0
        %3399 = vmatprep.subr.mxu0 0.0
        %3400 = vmatpush1.msra.mxu0 0.0
        %3401 = vmatprep.subr.mxu0 0.0
        %3402 = vmatpush1.msra.mxu0 0.0
        %3403 = vmatprep.subr.mxu0 0.0
        %3404 = vmatpush1.msra.mxu0 0.0
        %3405 = vmatprep.subr.mxu0 0.0
        %3406 = vmatpush1.msra.mxu0 0.0
        %3407 = vmatprep.subr.mxu0 0.0
        %3408 = vmatpush1.msra.mxu0 0.0
        %3409 = vmatprep.subr.mxu0 0.0
        %3410 = vmatpush1.msra.mxu0 0.0
        %3411 = vmatprep.subr.mxu0 0.0
        %3412 = vmatpush1.msra.mxu0 0.0
        %3413 = vmatprep.subr.mxu0 0.0
        %3414 = vmatpush1.msra.mxu0 0.0
        %3415 = vmatprep.subr.mxu0 0.0
        %3416 = vmatpush1.msra.mxu0 0.0
        %3417 = vmatprep.subr.mxu0 0.0
        %3418 = vmatpush1.msra.mxu0 0.0
        %3419 = vmatprep.subr.mxu0 %v3383
        %3420 = vmatpush1.msra.mxu0 %v3381
        %3421 = vmatprep.subr.mxu0 %v3377
        %3422 = vmatpush1.msra.mxu0 %v3375
        %3423 = vmatprep.subr.mxu0 0.0
        %3424 = vmatpush2.msra.mxu0 0.0
        %3425 = vmatprep.subr.mxu0 0.0
        %3426 = vmatpush2.msra.mxu0 0.0
        %3427 = vmatprep.subr.mxu0 0.0
        %3428 = vmatpush2.msra.mxu0 0.0
        %3429 = vmatprep.subr.mxu0 0.0
        %3430 = vmatpush2.msra.mxu0 0.0
        %3431 = vmatprep.subr.mxu0 0.0
        %3432 = vmatpush2.msra.mxu0 0.0
        %3433 = vmatprep.subr.mxu0 0.0
        %3434 = vmatpush2.msra.mxu0 0.0
        %3435 = vmatprep.subr.mxu0 0.0
        %3436 = vmatpush2.msra.mxu0 0.0
        %3437 = vmatprep.subr.mxu0 0.0
        %3438 = vmatpush2.msra.mxu0 0.0
        %3439 = vmatprep.subr.mxu0 0.0
        %3440 = vmatpush2.msra.mxu0 0.0
        %3441 = vmatprep.subr.mxu0 0.0
        %3442 = vmatpush2.msra.mxu0 0.0
        %3443 = vmatprep.subr.mxu0 0.0
        %3444 = vmatpush2.msra.mxu0 0.0
        %3445 = vmatprep.subr.mxu0 0.0
        %3446 = vmatpush2.msra.mxu0 0.0
        %3447 = vmatprep.subr.mxu0 0.0
        %3448 = vmatpush2.msra.mxu0 0.0
        %3449 = vmatprep.subr.mxu0 0.0
        %3450 = vmatpush2.msra.mxu0 0.0
        %3451 = vmatprep.subr.mxu0 0.0
        %3452 = vmatpush2.msra.mxu0 0.0
        %3453 = vmatprep.subr.mxu0 0.0
        %3454 = vmatpush2.msra.mxu0 0.0
        %3455 = vmatprep.mubr.f32.mxu0 0.0
        %3456 = vmatmul.mubr.f32.gmra.mxu0 %v3386
        %v3457 = vpop.f32.mrf.mxu0
        %v3458 = vadd.f32 %v3302, %v3457
        %v3459 = vpop.f32.mrf.mxu0
        %v3460 = vadd.f32 %v3303, %v3459
        %3461 = vmatprep.mubr.f32.mxu0 0.0
        %3462 = vmatmul.mubr.f32.gmra.mxu0 %v3389
        %v3463 = vpop.f32.mrf.mxu0
        %v3464 = vadd.f32 %v3304, %v3463
        %v3465 = vpop.f32.mrf.mxu0
        %v3466 = vadd.f32 %v3305, %v3465
        %3467 = vdwg.mxu0
        %v3468 = vadd.f32 %v3458, %v850
        %v3469 = vadd.f32 %v3460, %v851
        %v3470 = vadd.f32 %v3464, %v852
        %v3471 = vadd.f32 %v3466, %v853
        %v3472 = vld [vmem:[%s24] sm:$0xff]
        %v3473 = vld [vmem:[%s24 + $0x8] sm:$0xff]
        %v3475 = vsel %vm1845, %v3472, 0
        %v3478 = vsel %vm1845, %v3473, 0
        %3480 = vmatprep.subr.mxu0 0.0
        %3481 = vmatpush1.msra.mxu0 0.0
        %3482 = vmatprep.subr.mxu0 0.0
        %3483 = vmatpush1.msra.mxu0 0.0
        %3484 = vmatprep.subr.mxu0 0.0
        %3485 = vmatpush1.msra.mxu0 0.0
        %3486 = vmatprep.subr.mxu0 0.0
        %3487 = vmatpush1.msra.mxu0 0.0
        %3488 = vmatprep.subr.mxu0 0.0
        %3489 = vmatpush1.msra.mxu0 0.0
        %3490 = vmatprep.subr.mxu0 0.0
        %3491 = vmatpush1.msra.mxu0 0.0
        %3492 = vmatprep.subr.mxu0 0.0
        %3493 = vmatpush1.msra.mxu0 0.0
        %3494 = vmatprep.subr.mxu0 0.0
        %3495 = vmatpush1.msra.mxu0 0.0
        %3496 = vmatprep.subr.mxu0 0.0
        %3497 = vmatpush1.msra.mxu0 0.0
        %3498 = vmatprep.subr.mxu0 0.0
        %3499 = vmatpush1.msra.mxu0 0.0
        %3500 = vmatprep.subr.mxu0 0.0
        %3501 = vmatpush1.msra.mxu0 0.0
        %3502 = vmatprep.subr.mxu0 0.0
        %3503 = vmatpush1.msra.mxu0 0.0
        %3504 = vmatprep.subr.mxu0 0.0
        %3505 = vmatpush1.msra.mxu0 %v2501
        %3506 = vmatprep.subr.mxu0 0.0
        %3507 = vmatpush1.msra.mxu0 %v2500
        %3508 = vmatprep.subr.mxu0 0.0
        %3509 = vmatpush1.msra.mxu0 %v2499
        %3510 = vmatprep.subr.mxu0 0.0
        %3511 = vmatpush1.msra.mxu0 %v2498
        %3512 = vmatprep.subr.mxu0 0.0
        %3513 = vmatpush2.msra.mxu0 0.0
        %3514 = vmatprep.subr.mxu0 0.0
        %3515 = vmatpush2.msra.mxu0 0.0
        %3516 = vmatprep.subr.mxu0 0.0
        %3517 = vmatpush2.msra.mxu0 0.0
        %3518 = vmatprep.subr.mxu0 0.0
        %3519 = vmatpush2.msra.mxu0 0.0
        %3520 = vmatprep.subr.mxu0 0.0
        %3521 = vmatpush2.msra.mxu0 0.0
        %3522 = vmatprep.subr.mxu0 0.0
        %3523 = vmatpush2.msra.mxu0 0.0
        %3524 = vmatprep.subr.mxu0 0.0
        %3525 = vmatpush2.msra.mxu0 0.0
        %3526 = vmatprep.subr.mxu0 0.0
        %3527 = vmatpush2.msra.mxu0 0.0
        %3528 = vmatprep.subr.mxu0 0.0
        %3529 = vmatpush2.msra.mxu0 0.0
        %3530 = vmatprep.subr.mxu0 0.0
        %3531 = vmatpush2.msra.mxu0 0.0
        %3532 = vmatprep.subr.mxu0 0.0
        %3533 = vmatpush2.msra.mxu0 0.0
        %3534 = vmatprep.subr.mxu0 0.0
        %3535 = vmatpush2.msra.mxu0 0.0
        %3536 = vmatprep.subr.mxu0 0.0
        %3537 = vmatpush2.msra.mxu0 0.0
        %3538 = vmatprep.subr.mxu0 0.0
        %3539 = vmatpush2.msra.mxu0 0.0
        %3540 = vmatprep.subr.mxu0 0.0
        %3541 = vmatpush2.msra.mxu0 0.0
        %3542 = vmatprep.subr.mxu0 0.0
        %3543 = vmatpush2.msra.mxu0 0.0
        %3544 = vmatprep.mubr.f32.mxu0 0.0
        %3545 = vmatmul.mubr.f32.gmra.mxu0 %v3475
        %v3546 = vpop.f32.mrf.mxu0
        %v3547 = vadd.f32 0.0, %v3546
        %v3548 = vpop.f32.mrf.mxu0
        %3549 = vmatprep.mubr.f32.mxu0 0.0
        %3550 = vmatmul.mubr.f32.gmra.mxu0 %v3478
        %v3551 = vpop.f32.mrf.mxu0
        %v3552 = vadd.f32 0.0, %v3551
        %v3553 = vpop.f32.mrf.mxu0
        %3554 = vdwg.mxu0
        %v3555 = vld [vmem:[%s3] sm:$0xff]
        %v3556 = vld [vmem:[%s3 + $0x8] sm:$0xff]
        %v3557 = vld [vmem:[%s3 + $0x10] sm:$0xff]
        %v3558 = vld [vmem:[%s3 + $0x18] sm:$0xff]
        %v3559 = vld [vmem:[%s3 + $0x20] sm:$0xff]
        %v3560 = vld [vmem:[%s3 + $0x28] sm:$0xff]
        %v3561 = vld [vmem:[%s3 + $0x30] sm:$0xff]
        %v3562 = vld [vmem:[%s3 + $0x38] sm:$0xff]
        %v3563 = vld [vmem:[%s3 + $0x40] sm:$0xff]
        %v3564 = vld [vmem:[%s3 + $0x48] sm:$0xff]
        %v3565 = vld [vmem:[%s3 + $0x50] sm:$0xff]
        %v3566 = vld [vmem:[%s3 + $0x58] sm:$0xff]
        %v3567 = vld [vmem:[%s3 + $0x60] sm:$0xff]
        %v3568 = vld [vmem:[%s3 + $0x68] sm:$0xff]
        %v3569 = vld [vmem:[%s3 + $0x70] sm:$0xff]
        %v3570 = vld [vmem:[%s3 + $0x78] sm:$0xff]
        %v3571 = vld [vmem:[%s3 + $0x80] sm:$0xff]
        %v3572 = vld [vmem:[%s3 + $0x88] sm:$0xff]
        %v3573 = vld [vmem:[%s3 + $0x90] sm:$0xff]
        %v3574 = vld [vmem:[%s3 + $0x98] sm:$0xff]
        %v3575 = vld [vmem:[%s3 + $0xa0] sm:$0xff]
        %v3576 = vld [vmem:[%s3 + $0xa8] sm:$0xff]
        %v3577 = vld [vmem:[%s3 + $0xb0] sm:$0xff]
        %v3578 = vld [vmem:[%s3 + $0xb8] sm:$0xff]
        %v3579 = vld [vmem:[%s3 + $0xc0] sm:$0xff]
        %v3580 = vld [vmem:[%s3 + $0xc8] sm:$0xff]
        %v3581 = vld [vmem:[%s3 + $0xd0] sm:$0xff]
        %v3582 = vld [vmem:[%s3 + $0xd8] sm:$0xff]
        %v3583 = vld [vmem:[%s3 + $0xe0] sm:$0xff]
        %v3584 = vld [vmem:[%s3 + $0xe8] sm:$0xff]
        %v3585 = vld [vmem:[%s3 + $0xf0] sm:$0xff]
        %v3586 = vld [vmem:[%s3 + $0xf8] sm:$0xff]
        %3587 = vmatprep.subr.mxu0 %v3586
        %3588 = vmatpush1.msra.mxu0 %v3585
        %3589 = vmatprep.subr.mxu0 %v3584
        %3590 = vmatpush1.msra.mxu0 %v3583
        %3591 = vmatprep.subr.mxu0 %v3582
        %3592 = vmatpush1.msra.mxu0 %v3581
        %3593 = vmatprep.subr.mxu0 %v3580
        %3594 = vmatpush1.msra.mxu0 %v3579
        %3595 = vmatprep.subr.mxu0 %v3578
        %3596 = vmatpush1.msra.mxu0 %v3577
        %3597 = vmatprep.subr.mxu0 %v3576
        %3598 = vmatpush1.msra.mxu0 %v3575
        %3599 = vmatprep.subr.mxu0 %v3574
        %3600 = vmatpush1.msra.mxu0 %v3573
        %3601 = vmatprep.subr.mxu0 %v3572
        %3602 = vmatpush1.msra.mxu0 %v3571
        %3603 = vmatprep.subr.mxu0 %v3570
        %3604 = vmatpush1.msra.mxu0 %v3569
        %3605 = vmatprep.subr.mxu0 %v3568
        %3606 = vmatpush1.msra.mxu0 %v3567
        %3607 = vmatprep.subr.mxu0 %v3566
        %3608 = vmatpush1.msra.mxu0 %v3565
        %3609 = vmatprep.subr.mxu0 %v3564
        %3610 = vmatpush1.msra.mxu0 %v3563
        %3611 = vmatprep.subr.mxu0 %v3562
        %3612 = vmatpush1.msra.mxu0 %v3561
        %3613 = vmatprep.subr.mxu0 %v3560
        %3614 = vmatpush1.msra.mxu0 %v3559
        %3615 = vmatprep.subr.mxu0 %v3558
        %3616 = vmatpush1.msra.mxu0 %v3557
        %3617 = vmatprep.subr.mxu0 %v3556
        %3618 = vmatpush1.msra.mxu0 %v3555
        %3619 = vmatprep.subr.mxu0 0.0
        %3620 = vmatpush2.msra.mxu0 0.0
        %3621 = vmatprep.subr.mxu0 0.0
        %3622 = vmatpush2.msra.mxu0 0.0
        %3623 = vmatprep.subr.mxu0 0.0
        %3624 = vmatpush2.msra.mxu0 0.0
        %3625 = vmatprep.subr.mxu0 0.0
        %3626 = vmatpush2.msra.mxu0 0.0
        %3627 = vmatprep.subr.mxu0 0.0
        %3628 = vmatpush2.msra.mxu0 0.0
        %3629 = vmatprep.subr.mxu0 0.0
        %3630 = vmatpush2.msra.mxu0 0.0
        %3631 = vmatprep.subr.mxu0 0.0
        %3632 = vmatpush2.msra.mxu0 0.0
        %3633 = vmatprep.subr.mxu0 0.0
        %3634 = vmatpush2.msra.mxu0 0.0
        %3635 = vmatprep.subr.mxu0 0.0
        %3636 = vmatpush2.msra.mxu0 0.0
        %3637 = vmatprep.subr.mxu0 0.0
        %3638 = vmatpush2.msra.mxu0 0.0
        %3639 = vmatprep.subr.mxu0 0.0
        %3640 = vmatpush2.msra.mxu0 0.0
        %3641 = vmatprep.subr.mxu0 0.0
        %3642 = vmatpush2.msra.mxu0 0.0
        %3643 = vmatprep.subr.mxu0 0.0
        %3644 = vmatpush2.msra.mxu0 0.0
        %3645 = vmatprep.subr.mxu0 0.0
        %3646 = vmatpush2.msra.mxu0 0.0
        %3647 = vmatprep.subr.mxu0 0.0
        %3648 = vmatpush2.msra.mxu0 0.0
        %3649 = vmatprep.subr.mxu0 0.0
        %3650 = vmatpush2.msra.mxu0 0.0
        %3651 = vmatprep.mubr.f32.mxu0 0.0
        %3652 = vmatmul.mubr.f32.gmra.mxu0 %v3547
        %v3653 = vpop.f32.mrf.mxu0
        %v3654 = vadd.f32 0.0, %v3653
        %v3655 = vpop.f32.mrf.mxu0
        %v3656 = vadd.f32 0.0, %v3655
        %3657 = vmatprep.mubr.f32.mxu0 0.0
        %3658 = vmatmul.mubr.f32.gmra.mxu0 %v3552
        %v3659 = vpop.f32.mrf.mxu0
        %v3660 = vadd.f32 0.0, %v3659
        %v3661 = vpop.f32.mrf.mxu0
        %v3662 = vadd.f32 0.0, %v3661
        %3663 = vdwg.mxu0
        %v3664 = vmul.f32 %v3468, 2.0
        %v3665 = vmul.f32 %v3469, 2.0
        %v3666 = vmul.f32 %v3470, 2.0
        %v3667 = vmul.f32 %v3471, 2.0
        %v3668 = vadd.f32 %v3664, %v3654
        %v3669 = vadd.f32 %v3665, %v3656
        %v3670 = vadd.f32 %v3666, %v3660
        %v3671 = vadd.f32 %v3667, %v3662
        %v3672 = vld [vmem:[%s25] sm:$0xff]
        %v3673 = vld [vmem:[%s25 + $0x8] sm:$0xff]
        %3675 = vset.pattern.permute.xlu0 0
        %3676 = vperm.xlu0 %3675, %v3672
        %v3677 = vpop.permute.xlu0 %3676
        %3680 = vset.pattern.permute.xlu0 0
        %3681 = vperm.xlu0 %3680, %v3673
        %v3682 = vpop.permute.xlu0 %3681
        %v3684 = vadd.f32 %v3668, %v3677
        %v3685 = vadd.f32 %v3669, %v3677
        %v3686 = vadd.f32 %v3670, %v3682
        %v3687 = vadd.f32 %v3671, %v3682
        %v3688 = vmax.f32 %v3684, 0.0
        %v3689 = vmax.f32 %v3685, 0.0
        %v3690 = vmax.f32 %v3686, 0.0
        %v3691 = vmax.f32 %v3687, 0.0
        %s3692 = scalar_lea.vmem %s15, 4
        %v3693 = vld [vmem:[%s3692] ss:$8 sm:$0x3]
        %v3695 = vlaneseq
        %v3696 = vshrl.u32 %v3695, 7
        %v3697 = vsub.s32 0, %v3696
        %v3698 = vrot.slane %v3693, %v3697
        %v3699 = vlaneseq
        %v3700 = vshrl.u32 %v3699, 7
        %v3701 = vsub.s32 1, %v3700
        %v3702 = vrot.slane %v3693, %v3701
        %v3705 = vmul.f32 %v3688, %v3698
        %v3706 = vmul.f32 %v3689, %v3702
        %v3707 = vmul.f32 %v3690, %v3698
        %v3708 = vmul.f32 %v3691, %v3702
        %3709 = vst [vmem:[%s849] sm:$0xff] %v3705
        %3710 = vst [vmem:[%s849 + $0x8] sm:$0xff] %v3706
        %3711 = vst [vmem:[%s849 + $0x10] sm:$0xff] %v3707
        %3712 = vst [vmem:[%s849 + $0x18] sm:$0xff] %v3708
        %p3713 = scmp.lt.s32.totalorder %s42, 1
        %s3714 = scalar_select %p3713, %s42, 1
        %s3715 = smul.addr %s3714, 4
        %s3716 = smul.addr %s3715, 8
        %s3717 = scalar_lea.vmem %s26, %s3716
        %s3718 = sand.u32 %s632, 1
        %s3719 = scalar_lea.sflag [#allocation3], %s3718
        %s3720 = sand.u32 %s632, 1
        %s3721 = smul.addr %s3720, 32
        %s3722 = scalar_lea.vmem [#allocation2], %s3721
        // Predicated region
        $region125: #{hf_hr_module.1} parent=123 // pred_check
          %p3723 = pneg %p616
        $region126: #{hf_hr_module.1} parent=123 // pred_check_branch
          %3725 = sbr.rel (%p3723) target = $region128
        $region127: #{hf_hr_module.1} parent=123 // pred_region
          _
        $region128: #{hf_hr_module.1} parent=123 // pred_fallthru
          _
        // Predicated region
        $region129: #{hf_hr_module.1} parent=123 // pred_check
          %p3726 = pneg %p642
        $region130: #{hf_hr_module.1} parent=123 // pred_check_branch
          %3728 = sbr.rel (%p3726) target = $region132
        $region131: #{hf_hr_module.1} parent=123 // pred_region
          %s3730 = ssub.s32 512, 512
          %3731 = vsyncadd %s3719, %s3730
          %s3732 = smul.addr %s42, 4
          %s3733 = smul.addr %s3732, 128
          %s3734 = scalar_lea.hbm %s27, %s3733
          %s3735 = sshll.u32 %s3722, 4
          %s3736 = int_to_ptr.vmem [resolvable:$true] %s3735
          %3741 = dma.vmem_to_hbm [thread:$0]  %s3736, 512, %s3734, %s3719, 128, 128, 8
        $region132: #{hf_hr_module.1} parent=123 // pred_fallthru
          _
      $region124: #{hf_hr_module.1} parent=5 // pred_fallthru
        _
      %p3742 = scmp.le.s32.totalorder 2, %s37
      // Predicated region
      $region133: #{hf_hr_module.1} parent=5 // pred_check
        %p3743 = pneg %p3742
      $region134: #{hf_hr_module.1} parent=5 // pred_check_branch
        %3745 = sbr.rel (%p3743) target = $region136
      $region135: #{hf_hr_module.1} parent=5 // pred_region
        %s3746 = ssub.s32 %s37, 2
        // Predicated region
        $region137: #{hf_hr_module.1} parent=135 // pred_check
          %p3747 = pneg %p622
        $region138: #{hf_hr_module.1} parent=135 // pred_check_branch
          %3749 = sbr.rel (%p3747) target = $region140
        $region139: #{hf_hr_module.1} parent=135 // pred_region
          %p3750 = scmp.lt.s32.totalorder %s43, 1
          %s3751 = scalar_select %p3750, %s43, 1
          %s3752 = smul.addr %s3751, 4
          %s3753 = smul.addr %s3752, 8
          %s3754 = scalar_lea.vmem %s26, %s3753
        $region140: #{hf_hr_module.1} parent=135 // pred_fallthru
          _
        // Predicated region
        $region141: #{hf_hr_module.1} parent=135 // pred_check
          %p3755 = pneg %p648
        $region142: #{hf_hr_module.1} parent=135 // pred_check_branch
          %3757 = sbr.rel (%p3755) target = $region144
        $region143: #{hf_hr_module.1} parent=135 // pred_region
          %s3758 = sand.u32 %s633, 1
          %s3759 = scalar_lea.sflag [#allocation3], %s3758
          %s3760 = sand.u32 %s633, 1
          %s3761 = smul.addr %s3760, 32
          %s3762 = scalar_lea.vmem [#allocation2], %s3761
          %3763 = dma.done %s3759, 512
        $region144: #{hf_hr_module.1} parent=135 // pred_fallthru
          _
      $region136: #{hf_hr_module.1} parent=5 // pred_fallthru
        _
    $region6: #{hf_hr_module.1} parent=1 // loop_footer
      %s41 = sadd.s32 1, %s37
    $region7: #{hf_hr_module.1} parent=1 // loop_footer_branch
      %36 = sbr.rel target = $region3
    $region8: #{hf_hr_module.1} parent=1 // loop_exit
      _
    %3764 = vsyncpa [#allocation3], 1
    %s3765 = scalar_lea.sflag [#allocation3], 1
    %3766 = vsyncpa %s3765, 1

</llo_original>
